<compile_context>
chip_gen: v7x
topology: tpu7x:2x2x1
jax: 0.10.0
libtpu: 0.0.40
codegen_flags: <defaults>
</compile_context>

<pallas_src>
import functools

import jax
import jax.numpy as jnp
import numpy as np
from jax.experimental import pallas as pl
from jax.experimental.pallas import tpu as pltpu


def _round_up(x, m):
    return (x + m - 1) // m * m


def _sine_layer_kernel(x_ref, w_ref, b_ref, o_ref, *, use_mxu):
    """o = sin(x @ w + b); omega_0 is already folded into w and b."""
    if use_mxu:
        z = jnp.dot(x_ref[...], w_ref[...], preferred_element_type=jnp.float32)
    else:
        # Degenerate contraction (first SIREN layer, K=2/3): a K-term VPU FMA
        # beats a nearly empty MXU pass and avoids K padding.
        x = x_ref[...].astype(jnp.float32)
        w = w_ref[...].astype(jnp.float32)
        z = jnp.zeros((x.shape[0], w.shape[1]), jnp.float32)
        for k in range(x.shape[1]):           # static, tiny unroll
            z = z + x[:, k:k + 1] * w[k:k + 1, :]
    z = z + b_ref[...]                        # (1, tile_n) f32 bias, broadcasts
    o_ref[...] = jnp.sin(z).astype(o_ref.dtype)


def _build_sine_call(*, n_p, in_f, out_f_p, tile_m, tile_n, out_dtype,
                     use_mxu, single_buffer_wb, vmem_limit_bytes):
    grid_m = n_p // tile_m
    grid_n = out_f_p // tile_n
    kernel = functools.partial(_sine_layer_kernel, use_mxu=use_mxu)

    # Weight/bias block index is constant over the whole grid when grid_n == 1:
    # a single buffer suffices (no double-buffer VMEM cost, no re-DMA anyway).
    wb_kwargs = dict(pipeline_mode=pl.Buffered(1)) if single_buffer_wb else {}

    return pl.pallas_call(
        kernel,
        out_shape=jax.ShapeDtypeStruct((n_p, out_f_p), out_dtype),
        grid_spec=pltpu.PrefetchScalarGridSpec(
            num_scalar_prefetch=0,
            grid=(grid_m, grid_n),
            in_specs=[
                pl.BlockSpec((tile_m, in_f), lambda i, j: (i, 0)),               # x rows
                pl.BlockSpec((in_f, tile_n), lambda i, j: (0, j), **wb_kwargs),  # W tile
                pl.BlockSpec((1, tile_n), lambda i, j: (0, j), **wb_kwargs),     # bias
            ],
            out_specs=pl.BlockSpec((tile_m, tile_n), lambda i, j: (i, j)),
        ),
        compiler_params=pltpu.CompilerParams(
            dimension_semantics=("parallel", "parallel"),
            vmem_limit_bytes=vmem_limit_bytes,
        ),
    )


# Keep the steady-state working set comfortably under v7x's 64 MiB physical
# VMEM (v5e/v6e have 128 MiB, so v7x is the binding constraint).
_VMEM_BUDGET_BYTES = 40 * 1024 * 1024


def sine_layer_forward(x, w, b, omega_0=30.0, *, tile_m=2048, tile_n_max=1024,
                       compute_dtype=jnp.bfloat16):
    """SIREN SineLayer forward.

    x: [..., in_f] f32, w: [in_f, out_f] f32 (transpose of nn.Linear.weight),
    b: [out_f] f32.  Returns sin(omega_0 * (x @ w + b)) in x's dtype.
    """
    lead_shape = x.shape[:-1]
    in_f = x.shape[-1]
    x2d = x.reshape(-1, in_f)
    n = x2d.shape[0]
    in_f2, out_f = w.shape
    assert in_f == in_f2
    out_dtype = x.dtype

    # Fold omega_0 into the affine params once (outside the hot loop).
    w_s = w.astype(jnp.float32) * jnp.float32(omega_0)
    b_s = b.astype(jnp.float32) * jnp.float32(omega_0)

    # MXU only pays off for a non-degenerate contraction dim.
    use_mxu = in_f >= 8
    if use_mxu and compute_dtype is not None:
        x_op = x2d.astype(compute_dtype)      # bf16 operands, f32 accumulate
        w_op = w_s.astype(compute_dtype)
    else:
        x_op = x2d.astype(jnp.float32)
        w_op = w_s

    # Lane-dense output: pad out_f to a multiple of 128 (no masked vst.msk).
    out_f_p = _round_up(out_f, 128)
    if out_f_p <= tile_n_max:
        tile_n = out_f_p
    else:
        tile_n = _round_up(tile_n_max, 128)
        out_f_p = _round_up(out_f, tile_n)
    grid_n = out_f_p // tile_n
    single_buffer_wb = grid_n == 1

    # Row tile: as large as possible (128-aligned, capped by the requested
    # tile_m and by the padded batch size), halved until it fits the VMEM
    # budget -- fewer, bigger grid steps amortize per-step overhead.
    tile_m = min(_round_up(tile_m, 128), _round_up(n, 128))
    xb = jnp.dtype(x_op.dtype).itemsize
    wb_b = jnp.dtype(w_op.dtype).itemsize
    ob = jnp.dtype(out_dtype).itemsize
    n_w_buf = 1 if single_buffer_wb else 2

    def vmem_needed(tm):
        return (2 * tm * in_f * xb                 # double-buffered x tiles
                + n_w_buf * in_f * tile_n * wb_b   # weight tile(s)
                + 2 * tile_n * 4                   # bias
                + 2 * tm * tile_n * ob)            # double-buffered out tiles

    while vmem_needed(tile_m) > _VMEM_BUDGET_BYTES and tile_m > 128:
        tile_m = max(128, _round_up(tile_m // 2, 128))
    vmem_limit = int(min(max(1.5 * vmem_needed(tile_m), 32 * 1024 * 1024),
                         56 * 1024 * 1024))

    # Pad rows to the row tile and out_f to the lane tile (sliced off below).
    n_p = _round_up(n, tile_m)
    if n_p != n:
        x_op = jnp.pad(x_op, ((0, n_p - n), (0, 0)))
    if out_f_p != out_f:
        w_op = jnp.pad(w_op, ((0, 0), (0, out_f_p - out_f)))
        b_s = jnp.pad(b_s, ((0, out_f_p - out_f),))
    b2d = b_s.reshape(1, out_f_p)

    common = dict(n_p=n_p, in_f=in_f, out_f_p=out_f_p, tile_m=tile_m,
                  tile_n=tile_n, out_dtype=out_dtype, use_mxu=use_mxu,
                  vmem_limit_bytes=vmem_limit)
    try:
        call = _build_sine_call(single_buffer_wb=single_buffer_wb, **common)
        out_p = call(x_op, w_op, b2d)
    except Exception:
        if not single_buffer_wb:
            raise
        # pl.Buffered(1) unsupported on this jax version -> default buffering.
        call = _build_sine_call(single_buffer_wb=False, **common)
        out_p = call(x_op, w_op, b2d)

    return out_p[:n, :out_f].reshape(*lead_shape, out_f)


def init_sine_layer_params(key, in_features, out_features, *, is_first,
                           omega_0=30.0, init_c=6.0, first_layer_init_c=1.0):
    """Deterministic init matching SineLayer.init_weights (uniform ranges)."""
    kw, kb = jax.random.split(key)
    if is_first:
        bound = first_layer_init_c / in_features
    else:
        bound = np.sqrt(init_c / in_features) / omega_0
    # Stored as [in_features, out_features] (transpose of nn.Linear.weight).
    w = jax.random.uniform(kw, (in_features, out_features), jnp.float32,
                           minval=-bound, maxval=bound)
    # nn.Linear default bias init: U(-1/sqrt(in_f), 1/sqrt(in_f)).
    b_bound = 1.0 / np.sqrt(in_features)
    b = jax.random.uniform(kb, (out_features,), jnp.float32,
                           minval=-b_bound, maxval=b_bound)
    return w, b


def _ref_forward(x, w, b, omega_0):
    # float64 numpy reference, independent of XLA matmul precision defaults.
    x64 = np.asarray(x, dtype=np.float64)
    w64 = np.asarray(w, dtype=np.float64)
    b64 = np.asarray(b, dtype=np.float64)
    return np.sin(omega_0 * (x64 @ w64 + b64))


if __name__ == "__main__":
    key = jax.random.PRNGKey(0)
    k1, k2, k3, k4 = jax.random.split(key, 4)
    omega_0 = 30.0

    # --- Case 1: first SIREN layer (K=2 -> VPU path, f32, single grid tile) ---
    n, in_f, out_f = 16, 2, 32
    x = jax.random.uniform(k1, (n, in_f), jnp.float32, minval=-1.0, maxval=1.0)
    w, b = init_sine_layer_params(k2, in_f, out_f, is_first=True, omega_0=omega_0)
    out = jax.block_until_ready(sine_layer_forward(x, w, b, omega_0=omega_0))
    np.testing.assert_allclose(np.asarray(out), _ref_forward(x, w, b, omega_0),
                               rtol=1e-3, atol=1e-3)

    # --- Case 2: hidden-layer-like, bf16 operands / f32 accumulate,
    #             2-D grid (row + out-col tiles), row/col padding exercised. ---
    n, in_f, out_f = 200, 32, 256
    x = jax.random.uniform(k3, (n, in_f), jnp.float32, minval=-1.0, maxval=1.0)
    w, b = init_sine_layer_params(k4, in_f, out_f, is_first=False, omega_0=omega_0)
    ref = _ref_forward(x, w, b, omega_0)
    out = jax.block_until_ready(
        sine_layer_forward(x, w, b, omega_0=omega_0,
                           tile_m=128, tile_n_max=128,
                           compute_dtype=jnp.bfloat16))
    np.testing.assert_allclose(np.asarray(out), ref, rtol=5e-2, atol=5e-2)

    # --- Case 3: same tensors, pure-f32 MXU path, default (single-j) tiling.
    #     Tolerance stays loose because TPU f32 matmuls may use bf16 passes. ---
    out = jax.block_until_ready(
        sine_layer_forward(x, w, b, omega_0=omega_0, compute_dtype=None))
    np.testing.assert_allclose(np.asarray(out), ref, rtol=5e-2, atol=5e-2)

    print("KERNEL_OK")
</pallas_src>

<mosaic_0001>
module attributes {stable_mosaic.version = 11 : i64} {
  func.func @_sine_layer_kernel(%arg0: i32, %arg1: i32, %arg2: memref<128x2xf32, #tpu.memory_space<vmem>>, %arg3: memref<2x128xf32, #tpu.memory_space<vmem>>, %arg4: memref<1x128xf32, #tpu.memory_space<vmem>>, %arg5: memref<128x128xf32, #tpu.memory_space<vmem>>) attributes {dimension_semantics = [#tpu.dimension_semantics<parallel>, #tpu.dimension_semantics<parallel>], iteration_bounds = array<i64: 1, 1>, scalar_prefetch = 0 : i64, scratch_operands = 0 : i64, tpu.core_type = #tpu.core_type<tc>, window_params = [{transform_indices = @transform_0, window_bounds = array<i64: 128, 2>}, {pipeline_mode = #tpu.pipeline_mode<synchronous>, transform_indices = @transform_1, window_bounds = array<i64: 2, 128>}, {pipeline_mode = #tpu.pipeline_mode<synchronous>, transform_indices = @transform_2, window_bounds = array<i64: 1, 128>}, {transform_indices = @transform_3, window_bounds = array<i64: 128, 128>}]} {
    %c0 = arith.constant 0 : index
    %c0_0 = arith.constant 0 : index
    %0 = vector.load %arg2[%c0, %c0_0] : memref<128x2xf32, #tpu.memory_space<vmem>>, vector<128x2xf32>
    %c0_1 = arith.constant 0 : index
    %c0_2 = arith.constant 0 : index
    %1 = vector.load %arg3[%c0_1, %c0_2] : memref<2x128xf32, #tpu.memory_space<vmem>>, vector<2x128xf32>
    %cst = arith.constant 0.000000e+00 : f32
    %2 = vector.broadcast %cst : f32 to vector<128x128xf32>
    %3 = vector.extract_strided_slice %0 {offsets = [0, 0], sizes = [128, 1], strides = [1, 1]} : vector<128x2xf32> to vector<128x1xf32>
    %4 = vector.extract_strided_slice %1 {offsets = [0, 0], sizes = [1, 128], strides = [1, 1]} : vector<2x128xf32> to vector<1x128xf32>
    %5 = vector.broadcast %3 : vector<128x1xf32> to vector<128x128xf32>
    %6 = vector.broadcast %4 : vector<1x128xf32> to vector<128x128xf32>
    %7 = arith.mulf %5, %6 : vector<128x128xf32>
    %8 = arith.addf %2, %7 : vector<128x128xf32>
    %9 = vector.extract_strided_slice %0 {offsets = [0, 1], sizes = [128, 1], strides = [1, 1]} : vector<128x2xf32> to vector<128x1xf32>
    %10 = vector.extract_strided_slice %1 {offsets = [1, 0], sizes = [1, 128], strides = [1, 1]} : vector<2x128xf32> to vector<1x128xf32>
    %11 = vector.broadcast %9 : vector<128x1xf32> to vector<128x128xf32>
    %12 = vector.broadcast %10 : vector<1x128xf32> to vector<128x128xf32>
    %13 = arith.mulf %11, %12 : vector<128x128xf32>
    %14 = arith.addf %8, %13 : vector<128x128xf32>
    %c0_3 = arith.constant 0 : index
    %c0_4 = arith.constant 0 : index
    %15 = vector.load %arg4[%c0_3, %c0_4] : memref<1x128xf32, #tpu.memory_space<vmem>>, vector<1x128xf32>
    %16 = vector.broadcast %15 : vector<1x128xf32> to vector<128x128xf32>
    %17 = arith.addf %14, %16 : vector<128x128xf32>
    %18 = math.sin %17 : vector<128x128xf32>
    %c0_5 = arith.constant 0 : index
    %c0_6 = arith.constant 0 : index
    %19 = vector.load %arg5[%c0_5, %c0_6] : memref<128x128xf32, #tpu.memory_space<vmem>>, vector<128x128xf32>
    tpu.vector_store %arg5[%c0_5, %c0_6], %18 {strides = array<i32>} : memref<128x128xf32, #tpu.memory_space<vmem>>, vector<128x128xf32>,
    return
  }
  func.func @transform_0(%arg0: i32, %arg1: i32) -> (i32, i32) {
    %c0_i32 = arith.constant 0 : i32
    %c0_i32_0 = arith.constant 0 : i32
    return %arg0, %c0_i32 : i32, i32
  }
  func.func @transform_1(%arg0: i32, %arg1: i32) -> (i32, i32) {
    %c0_i32 = arith.constant 0 : i32
    %c0_i32_0 = arith.constant 0 : i32
    return %c0_i32, %arg1 : i32, i32
  }
  func.func @transform_2(%arg0: i32, %arg1: i32) -> (i32, i32) {
    %c0_i32 = arith.constant 0 : i32
    %c0_i32_0 = arith.constant 0 : i32
    return %c0_i32, %arg1 : i32, i32
  }
  func.func @transform_3(%arg0: i32, %arg1: i32) -> (i32, i32) {
    %c0_i32 = arith.constant 0 : i32
    return %arg0, %arg1 : i32, i32
  }
}

module attributes {stable_mosaic.version = 11 : i64} {
  func.func @_sine_layer_kernel(%arg0: i32, %arg1: i32, %arg2: memref<128x2xf32, #tpu.memory_space<vmem>>, %arg3: memref<2x128xf32, #tpu.memory_space<vmem>>, %arg4: memref<1x128xf32, #tpu.memory_space<vmem>>, %arg5: memref<128x128xf32, #tpu.memory_space<vmem>>) attributes {dimension_semantics = [#tpu.dimension_semantics<parallel>, #tpu.dimension_semantics<parallel>], iteration_bounds = array<i64: 1, 1>, scalar_prefetch = 0 : i64, scratch_operands = 0 : i64, tpu.core_type = #tpu.core_type<tc>, window_params = [{transform_indices = @transform_0, window_bounds = array<i64: 128, 2>}, {transform_indices = @transform_1, window_bounds = array<i64: 2, 128>}, {transform_indices = @transform_2, window_bounds = array<i64: 1, 128>}, {transform_indices = @transform_3, window_bounds = array<i64: 128, 128>}]} {
    %c0 = arith.constant 0 : index
    %c0_0 = arith.constant 0 : index
    %0 = vector.load %arg2[%c0, %c0_0] : memref<128x2xf32, #tpu.memory_space<vmem>>, vector<128x2xf32>
    %c0_1 = arith.constant 0 : index
    %c0_2 = arith.constant 0 : index
    %1 = vector.load %arg3[%c0_1, %c0_2] : memref<2x128xf32, #tpu.memory_space<vmem>>, vector<2x128xf32>
    %cst = arith.constant 0.000000e+00 : f32
    %2 = vector.broadcast %cst : f32 to vector<128x128xf32>
    %3 = vector.extract_strided_slice %0 {offsets = [0, 0], sizes = [128, 1], strides = [1, 1]} : vector<128x2xf32> to vector<128x1xf32>
    %4 = vector.extract_strided_slice %1 {offsets = [0, 0], sizes = [1, 128], strides = [1, 1]} : vector<2x128xf32> to vector<1x128xf32>
    %5 = vector.broadcast %3 : vector<128x1xf32> to vector<128x128xf32>
    %6 = vector.broadcast %4 : vector<1x128xf32> to vector<128x128xf32>
    %7 = arith.mulf %5, %6 : vector<128x128xf32>
    %8 = arith.addf %2, %7 : vector<128x128xf32>
    %9 = vector.extract_strided_slice %0 {offsets = [0, 1], sizes = [128, 1], strides = [1, 1]} : vector<128x2xf32> to vector<128x1xf32>
    %10 = vector.extract_strided_slice %1 {offsets = [1, 0], sizes = [1, 128], strides = [1, 1]} : vector<2x128xf32> to vector<1x128xf32>
    %11 = vector.broadcast %9 : vector<128x1xf32> to vector<128x128xf32>
    %12 = vector.broadcast %10 : vector<1x128xf32> to vector<128x128xf32>
    %13 = arith.mulf %11, %12 : vector<128x128xf32>
    %14 = arith.addf %8, %13 : vector<128x128xf32>
    %c0_3 = arith.constant 0 : index
    %c0_4 = arith.constant 0 : index
    %15 = vector.load %arg4[%c0_3, %c0_4] : memref<1x128xf32, #tpu.memory_space<vmem>>, vector<1x128xf32>
    %16 = vector.broadcast %15 : vector<1x128xf32> to vector<128x128xf32>
    %17 = arith.addf %14, %16 : vector<128x128xf32>
    %18 = math.sin %17 : vector<128x128xf32>
    %c0_5 = arith.constant 0 : index
    %c0_6 = arith.constant 0 : index
    %19 = vector.load %arg5[%c0_5, %c0_6] : memref<128x128xf32, #tpu.memory_space<vmem>>, vector<128x128xf32>
    tpu.vector_store %arg5[%c0_5, %c0_6], %18 {strides = array<i32>} : memref<128x128xf32, #tpu.memory_space<vmem>>, vector<128x128xf32>,
    return
  }
  func.func @transform_0(%arg0: i32, %arg1: i32) -> (i32, i32) {
    %c0_i32 = arith.constant 0 : i32
    %c0_i32_0 = arith.constant 0 : i32
    return %arg0, %c0_i32 : i32, i32
  }
  func.func @transform_1(%arg0: i32, %arg1: i32) -> (i32, i32) {
    %c0_i32 = arith.constant 0 : i32
    %c0_i32_0 = arith.constant 0 : i32
    return %c0_i32, %arg1 : i32, i32
  }
  func.func @transform_2(%arg0: i32, %arg1: i32) -> (i32, i32) {
    %c0_i32 = arith.constant 0 : i32
    %c0_i32_0 = arith.constant 0 : i32
    return %c0_i32, %arg1 : i32, i32
  }
  func.func @transform_3(%arg0: i32, %arg1: i32) -> (i32, i32) {
    %c0_i32 = arith.constant 0 : i32
    return %arg0, %arg1 : i32, i32
  }
}

</mosaic_0001>

<llo_original>
// kernel: tpu_custom_call.1
$region0: #{tpu_custom_call.1}
  #allocation0 [shape = 'u32[]', space=smem, size = 0x4, offset = 0x4, fixed_abs, tag = 'smem constant byte address 0x4 - core index']
  #allocation1 [shape = 'u32[144,128]{1,0:T(1,128)}', space=vmem, size = 0x12000, scoped, tag = 'internal scratch']
  %s0 = inlined_call_operand.vmem [shape: f32[128,2], index: 0, kind: input, shape index: {}]
  %s1 = inlined_call_operand.vmem [shape: f32[2,128], index: 1, kind: input, shape index: {}]
  %s2 = inlined_call_operand.vmem [shape: f32[1,128], index: 2, kind: input, shape index: {}]
  %s3 = inlined_call_operand.hbm [shape: f32[128,128], index: 3, kind: output, shape index: {}]
  %s4 = sld [smem:[#allocation0]]
  $region22: #{tpu_custom_call.1} parent=0
    _
  %s6 = ssub.s32 1, %s4
  %s7 = scalar_select 0, %s6, %s4
  $region1: #{tpu_custom_call.1} parent=0
    #allocation2 [shape = 'u8[65536]{0}', space=vmem, size = 0x10000, scoped, tag = 'output window, operand 0, single buffered']
    #allocation3 [shape = 's32[1]{0}', space=sflag, size = 0x4, scoped, tag = 'scoped memory for tpu_custom_call.1']
    %8 = vsyncpa [#allocation3], 0
    // Predicated region
    $region2: #{tpu_custom_call.1} parent=1 // pred_check
      _
    $region3: #{tpu_custom_call.1} parent=1 // pred_check_branch
      %10 = sbr.rel (0) target = $region5
    $region4: #{tpu_custom_call.1} parent=1 // pred_region
      _
    $region5: #{tpu_custom_call.1} parent=1 // pred_fallthru
      _
    // Predicated region
    $region6: #{tpu_custom_call.1} parent=1 // pred_check
      _
    $region7: #{tpu_custom_call.1} parent=1 // pred_check_branch
      %12 = sbr.rel (0) target = $region9
    $region8: #{tpu_custom_call.1} parent=1 // pred_region
      _
    $region9: #{tpu_custom_call.1} parent=1 // pred_fallthru
      _
    // Predicated region
    $region10: #{tpu_custom_call.1} parent=1 // pred_check
      _
    $region11: #{tpu_custom_call.1} parent=1 // pred_check_branch
      %14 = sbr.rel (0) target = $region13
    $region12: #{tpu_custom_call.1} parent=1 // pred_region
      _
    $region13: #{tpu_custom_call.1} parent=1 // pred_fallthru
      _
    %v15 = vld [vmem:[%s0] sm:$0xff]
    %v16 = vld [vmem:[%s0 + $0x8] sm:$0xff]
    %v17 = vld [vmem:[%s0 + $0x10] sm:$0xff]
    %v18 = vld [vmem:[%s0 + $0x18] sm:$0xff]
    %v19 = vld [vmem:[%s0 + $0x20] sm:$0xff]
    %v20 = vld [vmem:[%s0 + $0x28] sm:$0xff]
    %v21 = vld [vmem:[%s0 + $0x30] sm:$0xff]
    %v22 = vld [vmem:[%s0 + $0x38] sm:$0xff]
    %v23 = vld [vmem:[%s0 + $0x40] sm:$0xff]
    %v24 = vld [vmem:[%s0 + $0x48] sm:$0xff]
    %v25 = vld [vmem:[%s0 + $0x50] sm:$0xff]
    %v26 = vld [vmem:[%s0 + $0x58] sm:$0xff]
    %v27 = vld [vmem:[%s0 + $0x60] sm:$0xff]
    %v28 = vld [vmem:[%s0 + $0x68] sm:$0xff]
    %v29 = vld [vmem:[%s0 + $0x70] sm:$0xff]
    %v30 = vld [vmem:[%s0 + $0x78] sm:$0xff]
    %v31 = vld [vmem:[%s1] sm:$0x3]
    %33 = vset.pattern.permute.xlu0 0
    %34 = vperm.xlu0 %33, %v15
    %v35 = vpop.permute.xlu0 %34
    %38 = vset.pattern.permute.xlu0 0
    %39 = vperm.xlu0 %38, %v16
    %v40 = vpop.permute.xlu0 %39
    %43 = vset.pattern.permute.xlu0 0
    %44 = vperm.xlu0 %43, %v17
    %v45 = vpop.permute.xlu0 %44
    %48 = vset.pattern.permute.xlu0 0
    %49 = vperm.xlu0 %48, %v18
    %v50 = vpop.permute.xlu0 %49
    %53 = vset.pattern.permute.xlu0 0
    %54 = vperm.xlu0 %53, %v19
    %v55 = vpop.permute.xlu0 %54
    %58 = vset.pattern.permute.xlu0 0
    %59 = vperm.xlu0 %58, %v20
    %v60 = vpop.permute.xlu0 %59
    %63 = vset.pattern.permute.xlu0 0
    %64 = vperm.xlu0 %63, %v21
    %v65 = vpop.permute.xlu0 %64
    %68 = vset.pattern.permute.xlu0 0
    %69 = vperm.xlu0 %68, %v22
    %v70 = vpop.permute.xlu0 %69
    %73 = vset.pattern.permute.xlu0 0
    %74 = vperm.xlu0 %73, %v23
    %v75 = vpop.permute.xlu0 %74
    %78 = vset.pattern.permute.xlu0 0
    %79 = vperm.xlu0 %78, %v24
    %v80 = vpop.permute.xlu0 %79
    %83 = vset.pattern.permute.xlu0 0
    %84 = vperm.xlu0 %83, %v25
    %v85 = vpop.permute.xlu0 %84
    %88 = vset.pattern.permute.xlu0 0
    %89 = vperm.xlu0 %88, %v26
    %v90 = vpop.permute.xlu0 %89
    %93 = vset.pattern.permute.xlu0 0
    %94 = vperm.xlu0 %93, %v27
    %v95 = vpop.permute.xlu0 %94
    %98 = vset.pattern.permute.xlu0 0
    %99 = vperm.xlu0 %98, %v28
    %v100 = vpop.permute.xlu0 %99
    %103 = vset.pattern.permute.xlu0 0
    %104 = vperm.xlu0 %103, %v29
    %v105 = vpop.permute.xlu0 %104
    %108 = vset.pattern.permute.xlu0 0
    %109 = vperm.xlu0 %108, %v30
    %v110 = vpop.permute.xlu0 %109
    %v112 = vlaneseq
    %v113 = vshrl.u32 %v112, 7
    %v114 = vsub.s32 0, %v113
    %v115 = vrot.slane %v31, %v114
    %v116 = vmul.f32 %v35, %v115
    %v117 = vmul.f32 %v40, %v115
    %v118 = vmul.f32 %v45, %v115
    %v119 = vmul.f32 %v50, %v115
    %v120 = vmul.f32 %v55, %v115
    %v121 = vmul.f32 %v60, %v115
    %v122 = vmul.f32 %v65, %v115
    %v123 = vmul.f32 %v70, %v115
    %v124 = vmul.f32 %v75, %v115
    %v125 = vmul.f32 %v80, %v115
    %v126 = vmul.f32 %v85, %v115
    %v127 = vmul.f32 %v90, %v115
    %v128 = vmul.f32 %v95, %v115
    %v129 = vmul.f32 %v100, %v115
    %v130 = vmul.f32 %v105, %v115
    %v131 = vmul.f32 %v110, %v115
    %v132 = vadd.f32 %v116, 0.0
    %v133 = vadd.f32 %v117, 0.0
    %v134 = vadd.f32 %v118, 0.0
    %v135 = vadd.f32 %v119, 0.0
    %v136 = vadd.f32 %v120, 0.0
    %v137 = vadd.f32 %v121, 0.0
    %v138 = vadd.f32 %v122, 0.0
    %v139 = vadd.f32 %v123, 0.0
    %v140 = vadd.f32 %v124, 0.0
    %v141 = vadd.f32 %v125, 0.0
    %v142 = vadd.f32 %v126, 0.0
    %v143 = vadd.f32 %v127, 0.0
    %v144 = vadd.f32 %v128, 0.0
    %v145 = vadd.f32 %v129, 0.0
    %v146 = vadd.f32 %v130, 0.0
    %v147 = vadd.f32 %v131, 0.0
    %148 = vset.pattern.permute.xlu0 1
    %149 = vperm.xlu0 %148, %v15
    %v150 = vpop.permute.xlu0 %149
    %152 = vset.pattern.permute.xlu0 1
    %153 = vperm.xlu0 %152, %v16
    %v154 = vpop.permute.xlu0 %153
    %156 = vset.pattern.permute.xlu0 1
    %157 = vperm.xlu0 %156, %v17
    %v158 = vpop.permute.xlu0 %157
    %160 = vset.pattern.permute.xlu0 1
    %161 = vperm.xlu0 %160, %v18
    %v162 = vpop.permute.xlu0 %161
    %164 = vset.pattern.permute.xlu0 1
    %165 = vperm.xlu0 %164, %v19
    %v166 = vpop.permute.xlu0 %165
    %168 = vset.pattern.permute.xlu0 1
    %169 = vperm.xlu0 %168, %v20
    %v170 = vpop.permute.xlu0 %169
    %172 = vset.pattern.permute.xlu0 1
    %173 = vperm.xlu0 %172, %v21
    %v174 = vpop.permute.xlu0 %173
    %176 = vset.pattern.permute.xlu0 1
    %177 = vperm.xlu0 %176, %v22
    %v178 = vpop.permute.xlu0 %177
    %180 = vset.pattern.permute.xlu0 1
    %181 = vperm.xlu0 %180, %v23
    %v182 = vpop.permute.xlu0 %181
    %184 = vset.pattern.permute.xlu0 1
    %185 = vperm.xlu0 %184, %v24
    %v186 = vpop.permute.xlu0 %185
    %188 = vset.pattern.permute.xlu0 1
    %189 = vperm.xlu0 %188, %v25
    %v190 = vpop.permute.xlu0 %189
    %192 = vset.pattern.permute.xlu0 1
    %193 = vperm.xlu0 %192, %v26
    %v194 = vpop.permute.xlu0 %193
    %196 = vset.pattern.permute.xlu0 1
    %197 = vperm.xlu0 %196, %v27
    %v198 = vpop.permute.xlu0 %197
    %200 = vset.pattern.permute.xlu0 1
    %201 = vperm.xlu0 %200, %v28
    %v202 = vpop.permute.xlu0 %201
    %204 = vset.pattern.permute.xlu0 1
    %205 = vperm.xlu0 %204, %v29
    %v206 = vpop.permute.xlu0 %205
    %208 = vset.pattern.permute.xlu0 1
    %209 = vperm.xlu0 %208, %v30
    %v210 = vpop.permute.xlu0 %209
    %v212 = vlaneseq
    %v213 = vshrl.u32 %v212, 7
    %v214 = vsub.s32 1, %v213
    %v215 = vrot.slane %v31, %v214
    %v216 = vmul.f32 %v150, %v215
    %v217 = vmul.f32 %v154, %v215
    %v218 = vmul.f32 %v158, %v215
    %v219 = vmul.f32 %v162, %v215
    %v220 = vmul.f32 %v166, %v215
    %v221 = vmul.f32 %v170, %v215
    %v222 = vmul.f32 %v174, %v215
    %v223 = vmul.f32 %v178, %v215
    %v224 = vmul.f32 %v182, %v215
    %v225 = vmul.f32 %v186, %v215
    %v226 = vmul.f32 %v190, %v215
    %v227 = vmul.f32 %v194, %v215
    %v228 = vmul.f32 %v198, %v215
    %v229 = vmul.f32 %v202, %v215
    %v230 = vmul.f32 %v206, %v215
    %v231 = vmul.f32 %v210, %v215
    %v232 = vadd.f32 %v132, %v216
    %v233 = vadd.f32 %v133, %v217
    %v234 = vadd.f32 %v134, %v218
    %v235 = vadd.f32 %v135, %v219
    %v236 = vadd.f32 %v136, %v220
    %v237 = vadd.f32 %v137, %v221
    %v238 = vadd.f32 %v138, %v222
    %v239 = vadd.f32 %v139, %v223
    %v240 = vadd.f32 %v140, %v224
    %v241 = vadd.f32 %v141, %v225
    %v242 = vadd.f32 %v142, %v226
    %v243 = vadd.f32 %v143, %v227
    %v244 = vadd.f32 %v144, %v228
    %v245 = vadd.f32 %v145, %v229
    %v246 = vadd.f32 %v146, %v230
    %v247 = vadd.f32 %v147, %v231
    %v248 = vld [vmem:[%s2] sm:$0x1]
    %v250 = vlaneseq
    %v251 = vshrl.u32 %v250, 7
    %v252 = vsub.s32 0, %v251
    %v253 = vrot.slane %v248, %v252
    %v255 = vadd.f32 %v232, %v253
    %v256 = vadd.f32 %v233, %v253
    %v257 = vadd.f32 %v234, %v253
    %v258 = vadd.f32 %v235, %v253
    %v259 = vadd.f32 %v236, %v253
    %v260 = vadd.f32 %v237, %v253
    %v261 = vadd.f32 %v238, %v253
    %v262 = vadd.f32 %v239, %v253
    %v263 = vadd.f32 %v240, %v253
    %v264 = vadd.f32 %v241, %v253
    %v265 = vadd.f32 %v242, %v253
    %v266 = vadd.f32 %v243, %v253
    %v267 = vadd.f32 %v244, %v253
    %v268 = vadd.f32 %v245, %v253
    %v269 = vadd.f32 %v246, %v253
    %v270 = vadd.f32 %v247, %v253
    %v271 = vand.u32 2147483647, %v255
    %vm272 = vcmp.le.f32.partialorder %v271, 0.7853982
    %vm273 = vcmp.lt.s32.totalorder %v255, 0
    %v274 = vand.u32 %v255, 2139095040
    %v275 = vshrl.u32 %v274, 23
    %v276 = vsub.s32 %v275, 127
    %v277 = vand.u32 2147483647, %v255
    %v278 = vand.u32 %v277, 8388607
    %v279 = vor.u32 %v278, 8388608
    %v280 = vsub.s32 0, %v279
    %v281 = vadd.s32 %v276, 1
    %vm282 = vcmp.gt.s32.totalorder %v281, 0
    %v283 = vsel %vm282, %v281, 0
    %v284 = vshrl.u32 %v283, 5
    %v285 = vand.u32 %v283, 31
    %v286 = vsub.s32 32, %v285
    %v287 = vshrl.u32 683565275, %v286
    %v288 = vshll.u32 683565275, %v285
    %v289 = vshrl.u32 2475754826, %v286
    %v290 = vor.u32 %v288, %v289
    %v291 = vshll.u32 2475754826, %v285
    %v292 = vshrl.u32 2131351028, %v286
    %v293 = vor.u32 %v291, %v292
    %v294 = vshll.u32 2131351028, %v285
    %v295 = vshrl.u32 2102212464, %v286
    %v296 = vor.u32 %v294, %v295
    %v297 = vshll.u32 2102212464, %v285
    %v298 = vshrl.u32 920167782, %v286
    %v299 = vor.u32 %v297, %v298
    %v300 = vshll.u32 920167782, %v285
    %v301 = vshrl.u32 1326507024, %v286
    %v302 = vor.u32 %v300, %v301
    %vm303 = vcmp.lt.s32.totalorder %v284, 1
    %vm304 = vcmp.lt.s32.totalorder %v284, 2
    %vm305 = vcmp.lt.s32.totalorder %v284, 3
    %vm306 = vcmp.lt.s32.totalorder %v284, 4
    %v307 = vsel %vm303, %v287, %v290
    %v308 = vsel %vm306, %v296, 2102212464
    %v309 = vsel %vm305, %v293, %v308
    %v310 = vsel %vm304, %v307, %v309
    %v311 = vsel %vm303, %v290, %v293
    %v312 = vsel %vm306, %v299, 920167782
    %v313 = vsel %vm305, %v296, %v312
    %v314 = vsel %vm304, %v311, %v313
    %v315 = vsel %vm303, %v293, %v296
    %v316 = vsel %vm306, %v302, 1326507024
    %v317 = vsel %vm305, %v299, %v316
    %v318 = vsel %vm304, %v315, %v317
    %v319 = vshll.u32 %v279, 8
    %v320 = vmul.u32.u64.compose %v319, %v318
    %v321 = vextract.low.u32 %v320
    %v322 = vextract.high.u32 %v320
    %v323 = vmul.u32.u64.compose %v319, %v314
    %v324 = vextract.low.u32 %v323
    %v325 = vextract.high.u32 %v323
    %v326 = vmul.u32 %v319, %v310
    %v327 = vadd.s32 %v322, %v324
    %vm328 = vc.u32 %v322, %v324
    %v329 = vadd.s32 %v325, 1
    %v330 = vsel %vm328, %v329, %v325
    %v331 = vadd.s32 %v326, %v330
    %v332 = vadd.s32 %v331, 536870912
    %v333 = vshrl.u32 %v332, 30
    %v334 = vshll.u32 %v333, 30
    %v335 = vsub.s32 %v331, %v334
    %vm336 = vcmp.lt.s32.totalorder %v335, 0
    %v337 = vsub.s32 0, %v335
    %v338 = vsel %vm336, %v337, %v335
    %v339 = vclz %v338
    %v340 = vsub.s32 %v339, 2
    %vm341 = vcmp.gt.s32.totalorder 0, %v340
    %v342 = vsel %vm341, 0, %v340
    %v343 = vsub.s32 32, %v342
    %v344 = vshll.u32 %v335, %v342
    %v345 = vshrl.u32 %v327, %v343
    %v346 = vor.u32 %v344, %v345
    %v347 = vsub.s32 4294967266, %v342
    %v348 = vadd.s32 %v347, 127
    %v349 = vshll.u32 %v348, 23
    %v350 = vor.u32 4788187, %v349
    %v351 = vand.u32 2147483647, %v350
    %v353 = vcvt.s32.f32 %v346
    %v354 = vmul.f32 %v353, %v351
    %v355 = vxor.u32 %v354, 2147483648
    %v356 = vsel %vm273, %v355, %v354
    %v357 = vsub.s32 4, %v333
    %v358 = vsel %vm273, %v357, %v333
    %v359 = vsel %vm272, %v255, %v356
    %v360 = vsel %vm272, 0, %v358
    %v361 = vcosq.f32.pop %v359
    %v362 = vsinq.f32.pop %v359
    %vm363 = vweird.f32 %v255
    %v364 = vadd.s32 %v360, 3
    %v365 = vand.u32 %v364, 3
    %vm366 = vcmp.lt.s32.totalorder %v365, 2
    %vm367 = vcmp.eq.s32.totalorder %v365, 0
    %v368 = vxor.u32 %v362, 2147483648
    %v369 = vsel %vm367, %v361, %v368
    %vm370 = vcmp.eq.s32.totalorder %v365, 2
    %v371 = vxor.u32 %v361, 2147483648
    %v372 = vsel %vm370, %v371, %v362
    %v373 = vsel %vm366, %v369, %v372
    %v374 = vsel %vm363, nan, %v373
    %v375 = vand.u32 2147483647, %v256
    %vm376 = vcmp.le.f32.partialorder %v375, 0.7853982
    %vm377 = vcmp.lt.s32.totalorder %v256, 0
    %v378 = vand.u32 %v256, 2139095040
    %v379 = vshrl.u32 %v378, 23
    %v380 = vsub.s32 %v379, 127
    %v381 = vand.u32 2147483647, %v256
    %v382 = vand.u32 %v381, 8388607
    %v383 = vor.u32 %v382, 8388608
    %v384 = vsub.s32 0, %v383
    %v385 = vadd.s32 %v380, 1
    %vm386 = vcmp.gt.s32.totalorder %v385, 0
    %v387 = vsel %vm386, %v385, 0
    %v388 = vshrl.u32 %v387, 5
    %v389 = vand.u32 %v387, 31
    %v390 = vsub.s32 32, %v389
    %v391 = vshrl.u32 683565275, %v390
    %v392 = vshll.u32 683565275, %v389
    %v393 = vshrl.u32 2475754826, %v390
    %v394 = vor.u32 %v392, %v393
    %v395 = vshll.u32 2475754826, %v389
    %v396 = vshrl.u32 2131351028, %v390
    %v397 = vor.u32 %v395, %v396
    %v398 = vshll.u32 2131351028, %v389
    %v399 = vshrl.u32 2102212464, %v390
    %v400 = vor.u32 %v398, %v399
    %v401 = vshll.u32 2102212464, %v389
    %v402 = vshrl.u32 920167782, %v390
    %v403 = vor.u32 %v401, %v402
    %v404 = vshll.u32 920167782, %v389
    %v405 = vshrl.u32 1326507024, %v390
    %v406 = vor.u32 %v404, %v405
    %vm407 = vcmp.lt.s32.totalorder %v388, 1
    %vm408 = vcmp.lt.s32.totalorder %v388, 2
    %vm409 = vcmp.lt.s32.totalorder %v388, 3
    %vm410 = vcmp.lt.s32.totalorder %v388, 4
    %v411 = vsel %vm407, %v391, %v394
    %v412 = vsel %vm410, %v400, 2102212464
    %v413 = vsel %vm409, %v397, %v412
    %v414 = vsel %vm408, %v411, %v413
    %v415 = vsel %vm407, %v394, %v397
    %v416 = vsel %vm410, %v403, 920167782
    %v417 = vsel %vm409, %v400, %v416
    %v418 = vsel %vm408, %v415, %v417
    %v419 = vsel %vm407, %v397, %v400
    %v420 = vsel %vm410, %v406, 1326507024
    %v421 = vsel %vm409, %v403, %v420
    %v422 = vsel %vm408, %v419, %v421
    %v423 = vshll.u32 %v383, 8
    %v424 = vmul.u32.u64.compose %v423, %v422
    %v425 = vextract.low.u32 %v424
    %v426 = vextract.high.u32 %v424
    %v427 = vmul.u32.u64.compose %v423, %v418
    %v428 = vextract.low.u32 %v427
    %v429 = vextract.high.u32 %v427
    %v430 = vmul.u32 %v423, %v414
    %v431 = vadd.s32 %v426, %v428
    %vm432 = vc.u32 %v426, %v428
    %v433 = vadd.s32 %v429, 1
    %v434 = vsel %vm432, %v433, %v429
    %v435 = vadd.s32 %v430, %v434
    %v436 = vadd.s32 %v435, 536870912
    %v437 = vshrl.u32 %v436, 30
    %v438 = vshll.u32 %v437, 30
    %v439 = vsub.s32 %v435, %v438
    %vm440 = vcmp.lt.s32.totalorder %v439, 0
    %v441 = vsub.s32 0, %v439
    %v442 = vsel %vm440, %v441, %v439
    %v443 = vclz %v442
    %v444 = vsub.s32 %v443, 2
    %vm445 = vcmp.gt.s32.totalorder 0, %v444
    %v446 = vsel %vm445, 0, %v444
    %v447 = vsub.s32 32, %v446
    %v448 = vshll.u32 %v439, %v446
    %v449 = vshrl.u32 %v431, %v447
    %v450 = vor.u32 %v448, %v449
    %v451 = vsub.s32 4294967266, %v446
    %v452 = vadd.s32 %v451, 127
    %v453 = vshll.u32 %v452, 23
    %v454 = vor.u32 4788187, %v453
    %v455 = vand.u32 2147483647, %v454
    %v457 = vcvt.s32.f32 %v450
    %v458 = vmul.f32 %v457, %v455
    %v459 = vxor.u32 %v458, 2147483648
    %v460 = vsel %vm377, %v459, %v458
    %v461 = vsub.s32 4, %v437
    %v462 = vsel %vm377, %v461, %v437
    %v463 = vsel %vm376, %v256, %v460
    %v464 = vsel %vm376, 0, %v462
    %v465 = vcosq.f32.pop %v463
    %v466 = vsinq.f32.pop %v463
    %vm467 = vweird.f32 %v256
    %v468 = vadd.s32 %v464, 3
    %v469 = vand.u32 %v468, 3
    %vm470 = vcmp.lt.s32.totalorder %v469, 2
    %vm471 = vcmp.eq.s32.totalorder %v469, 0
    %v472 = vxor.u32 %v466, 2147483648
    %v473 = vsel %vm471, %v465, %v472
    %vm474 = vcmp.eq.s32.totalorder %v469, 2
    %v475 = vxor.u32 %v465, 2147483648
    %v476 = vsel %vm474, %v475, %v466
    %v477 = vsel %vm470, %v473, %v476
    %v478 = vsel %vm467, nan, %v477
    %v479 = vand.u32 2147483647, %v257
    %vm480 = vcmp.le.f32.partialorder %v479, 0.7853982
    %vm481 = vcmp.lt.s32.totalorder %v257, 0
    %v482 = vand.u32 %v257, 2139095040
    %v483 = vshrl.u32 %v482, 23
    %v484 = vsub.s32 %v483, 127
    %v485 = vand.u32 2147483647, %v257
    %v486 = vand.u32 %v485, 8388607
    %v487 = vor.u32 %v486, 8388608
    %v488 = vsub.s32 0, %v487
    %v489 = vadd.s32 %v484, 1
    %vm490 = vcmp.gt.s32.totalorder %v489, 0
    %v491 = vsel %vm490, %v489, 0
    %v492 = vshrl.u32 %v491, 5
    %v493 = vand.u32 %v491, 31
    %v494 = vsub.s32 32, %v493
    %v495 = vshrl.u32 683565275, %v494
    %v496 = vshll.u32 683565275, %v493
    %v497 = vshrl.u32 2475754826, %v494
    %v498 = vor.u32 %v496, %v497
    %v499 = vshll.u32 2475754826, %v493
    %v500 = vshrl.u32 2131351028, %v494
    %v501 = vor.u32 %v499, %v500
    %v502 = vshll.u32 2131351028, %v493
    %v503 = vshrl.u32 2102212464, %v494
    %v504 = vor.u32 %v502, %v503
    %v505 = vshll.u32 2102212464, %v493
    %v506 = vshrl.u32 920167782, %v494
    %v507 = vor.u32 %v505, %v506
    %v508 = vshll.u32 920167782, %v493
    %v509 = vshrl.u32 1326507024, %v494
    %v510 = vor.u32 %v508, %v509
    %vm511 = vcmp.lt.s32.totalorder %v492, 1
    %vm512 = vcmp.lt.s32.totalorder %v492, 2
    %vm513 = vcmp.lt.s32.totalorder %v492, 3
    %vm514 = vcmp.lt.s32.totalorder %v492, 4
    %v515 = vsel %vm511, %v495, %v498
    %v516 = vsel %vm514, %v504, 2102212464
    %v517 = vsel %vm513, %v501, %v516
    %v518 = vsel %vm512, %v515, %v517
    %v519 = vsel %vm511, %v498, %v501
    %v520 = vsel %vm514, %v507, 920167782
    %v521 = vsel %vm513, %v504, %v520
    %v522 = vsel %vm512, %v519, %v521
    %v523 = vsel %vm511, %v501, %v504
    %v524 = vsel %vm514, %v510, 1326507024
    %v525 = vsel %vm513, %v507, %v524
    %v526 = vsel %vm512, %v523, %v525
    %v527 = vshll.u32 %v487, 8
    %v528 = vmul.u32.u64.compose %v527, %v526
    %v529 = vextract.low.u32 %v528
    %v530 = vextract.high.u32 %v528
    %v531 = vmul.u32.u64.compose %v527, %v522
    %v532 = vextract.low.u32 %v531
    %v533 = vextract.high.u32 %v531
    %v534 = vmul.u32 %v527, %v518
    %v535 = vadd.s32 %v530, %v532
    %vm536 = vc.u32 %v530, %v532
    %v537 = vadd.s32 %v533, 1
    %v538 = vsel %vm536, %v537, %v533
    %v539 = vadd.s32 %v534, %v538
    %v540 = vadd.s32 %v539, 536870912
    %v541 = vshrl.u32 %v540, 30
    %v542 = vshll.u32 %v541, 30
    %v543 = vsub.s32 %v539, %v542
    %vm544 = vcmp.lt.s32.totalorder %v543, 0
    %v545 = vsub.s32 0, %v543
    %v546 = vsel %vm544, %v545, %v543
    %v547 = vclz %v546
    %v548 = vsub.s32 %v547, 2
    %vm549 = vcmp.gt.s32.totalorder 0, %v548
    %v550 = vsel %vm549, 0, %v548
    %v551 = vsub.s32 32, %v550
    %v552 = vshll.u32 %v543, %v550
    %v553 = vshrl.u32 %v535, %v551
    %v554 = vor.u32 %v552, %v553
    %v555 = vsub.s32 4294967266, %v550
    %v556 = vadd.s32 %v555, 127
    %v557 = vshll.u32 %v556, 23
    %v558 = vor.u32 4788187, %v557
    %v559 = vand.u32 2147483647, %v558
    %v561 = vcvt.s32.f32 %v554
    %v562 = vmul.f32 %v561, %v559
    %v563 = vxor.u32 %v562, 2147483648
    %v564 = vsel %vm481, %v563, %v562
    %v565 = vsub.s32 4, %v541
    %v566 = vsel %vm481, %v565, %v541
    %v567 = vsel %vm480, %v257, %v564
    %v568 = vsel %vm480, 0, %v566
    %v569 = vcosq.f32.pop %v567
    %v570 = vsinq.f32.pop %v567
    %vm571 = vweird.f32 %v257
    %v572 = vadd.s32 %v568, 3
    %v573 = vand.u32 %v572, 3
    %vm574 = vcmp.lt.s32.totalorder %v573, 2
    %vm575 = vcmp.eq.s32.totalorder %v573, 0
    %v576 = vxor.u32 %v570, 2147483648
    %v577 = vsel %vm575, %v569, %v576
    %vm578 = vcmp.eq.s32.totalorder %v573, 2
    %v579 = vxor.u32 %v569, 2147483648
    %v580 = vsel %vm578, %v579, %v570
    %v581 = vsel %vm574, %v577, %v580
    %v582 = vsel %vm571, nan, %v581
    %v583 = vand.u32 2147483647, %v258
    %vm584 = vcmp.le.f32.partialorder %v583, 0.7853982
    %vm585 = vcmp.lt.s32.totalorder %v258, 0
    %v586 = vand.u32 %v258, 2139095040
    %v587 = vshrl.u32 %v586, 23
    %v588 = vsub.s32 %v587, 127
    %v589 = vand.u32 2147483647, %v258
    %v590 = vand.u32 %v589, 8388607
    %v591 = vor.u32 %v590, 8388608
    %v592 = vsub.s32 0, %v591
    %v593 = vadd.s32 %v588, 1
    %vm594 = vcmp.gt.s32.totalorder %v593, 0
    %v595 = vsel %vm594, %v593, 0
    %v596 = vshrl.u32 %v595, 5
    %v597 = vand.u32 %v595, 31
    %v598 = vsub.s32 32, %v597
    %v599 = vshrl.u32 683565275, %v598
    %v600 = vshll.u32 683565275, %v597
    %v601 = vshrl.u32 2475754826, %v598
    %v602 = vor.u32 %v600, %v601
    %v603 = vshll.u32 2475754826, %v597
    %v604 = vshrl.u32 2131351028, %v598
    %v605 = vor.u32 %v603, %v604
    %v606 = vshll.u32 2131351028, %v597
    %v607 = vshrl.u32 2102212464, %v598
    %v608 = vor.u32 %v606, %v607
    %v609 = vshll.u32 2102212464, %v597
    %v610 = vshrl.u32 920167782, %v598
    %v611 = vor.u32 %v609, %v610
    %v612 = vshll.u32 920167782, %v597
    %v613 = vshrl.u32 1326507024, %v598
    %v614 = vor.u32 %v612, %v613
    %vm615 = vcmp.lt.s32.totalorder %v596, 1
    %vm616 = vcmp.lt.s32.totalorder %v596, 2
    %vm617 = vcmp.lt.s32.totalorder %v596, 3
    %vm618 = vcmp.lt.s32.totalorder %v596, 4
    %v619 = vsel %vm615, %v599, %v602
    %v620 = vsel %vm618, %v608, 2102212464
    %v621 = vsel %vm617, %v605, %v620
    %v622 = vsel %vm616, %v619, %v621
    %v623 = vsel %vm615, %v602, %v605
    %v624 = vsel %vm618, %v611, 920167782
    %v625 = vsel %vm617, %v608, %v624
    %v626 = vsel %vm616, %v623, %v625
    %v627 = vsel %vm615, %v605, %v608
    %v628 = vsel %vm618, %v614, 1326507024
    %v629 = vsel %vm617, %v611, %v628
    %v630 = vsel %vm616, %v627, %v629
    %v631 = vshll.u32 %v591, 8
    %v632 = vmul.u32.u64.compose %v631, %v630
    %v633 = vextract.low.u32 %v632
    %v634 = vextract.high.u32 %v632
    %v635 = vmul.u32.u64.compose %v631, %v626
    %v636 = vextract.low.u32 %v635
    %v637 = vextract.high.u32 %v635
    %v638 = vmul.u32 %v631, %v622
    %v639 = vadd.s32 %v634, %v636
    %vm640 = vc.u32 %v634, %v636
    %v641 = vadd.s32 %v637, 1
    %v642 = vsel %vm640, %v641, %v637
    %v643 = vadd.s32 %v638, %v642
    %v644 = vadd.s32 %v643, 536870912
    %v645 = vshrl.u32 %v644, 30
    %v646 = vshll.u32 %v645, 30
    %v647 = vsub.s32 %v643, %v646
    %vm648 = vcmp.lt.s32.totalorder %v647, 0
    %v649 = vsub.s32 0, %v647
    %v650 = vsel %vm648, %v649, %v647
    %v651 = vclz %v650
    %v652 = vsub.s32 %v651, 2
    %vm653 = vcmp.gt.s32.totalorder 0, %v652
    %v654 = vsel %vm653, 0, %v652
    %v655 = vsub.s32 32, %v654
    %v656 = vshll.u32 %v647, %v654
    %v657 = vshrl.u32 %v639, %v655
    %v658 = vor.u32 %v656, %v657
    %v659 = vsub.s32 4294967266, %v654
    %v660 = vadd.s32 %v659, 127
    %v661 = vshll.u32 %v660, 23
    %v662 = vor.u32 4788187, %v661
    %v663 = vand.u32 2147483647, %v662
    %v665 = vcvt.s32.f32 %v658
    %v666 = vmul.f32 %v665, %v663
    %v667 = vxor.u32 %v666, 2147483648
    %v668 = vsel %vm585, %v667, %v666
    %v669 = vsub.s32 4, %v645
    %v670 = vsel %vm585, %v669, %v645
    %v671 = vsel %vm584, %v258, %v668
    %v672 = vsel %vm584, 0, %v670
    %v673 = vcosq.f32.pop %v671
    %v674 = vsinq.f32.pop %v671
    %vm675 = vweird.f32 %v258
    %v676 = vadd.s32 %v672, 3
    %v677 = vand.u32 %v676, 3
    %vm678 = vcmp.lt.s32.totalorder %v677, 2
    %vm679 = vcmp.eq.s32.totalorder %v677, 0
    %v680 = vxor.u32 %v674, 2147483648
    %v681 = vsel %vm679, %v673, %v680
    %vm682 = vcmp.eq.s32.totalorder %v677, 2
    %v683 = vxor.u32 %v673, 2147483648
    %v684 = vsel %vm682, %v683, %v674
    %v685 = vsel %vm678, %v681, %v684
    %v686 = vsel %vm675, nan, %v685
    %v687 = vand.u32 2147483647, %v259
    %vm688 = vcmp.le.f32.partialorder %v687, 0.7853982
    %vm689 = vcmp.lt.s32.totalorder %v259, 0
    %v690 = vand.u32 %v259, 2139095040
    %v691 = vshrl.u32 %v690, 23
    %v692 = vsub.s32 %v691, 127
    %v693 = vand.u32 2147483647, %v259
    %v694 = vand.u32 %v693, 8388607
    %v695 = vor.u32 %v694, 8388608
    %v696 = vsub.s32 0, %v695
    %v697 = vadd.s32 %v692, 1
    %vm698 = vcmp.gt.s32.totalorder %v697, 0
    %v699 = vsel %vm698, %v697, 0
    %v700 = vshrl.u32 %v699, 5
    %v701 = vand.u32 %v699, 31
    %v702 = vsub.s32 32, %v701
    %v703 = vshrl.u32 683565275, %v702
    %v704 = vshll.u32 683565275, %v701
    %v705 = vshrl.u32 2475754826, %v702
    %v706 = vor.u32 %v704, %v705
    %v707 = vshll.u32 2475754826, %v701
    %v708 = vshrl.u32 2131351028, %v702
    %v709 = vor.u32 %v707, %v708
    %v710 = vshll.u32 2131351028, %v701
    %v711 = vshrl.u32 2102212464, %v702
    %v712 = vor.u32 %v710, %v711
    %v713 = vshll.u32 2102212464, %v701
    %v714 = vshrl.u32 920167782, %v702
    %v715 = vor.u32 %v713, %v714
    %v716 = vshll.u32 920167782, %v701
    %v717 = vshrl.u32 1326507024, %v702
    %v718 = vor.u32 %v716, %v717
    %vm719 = vcmp.lt.s32.totalorder %v700, 1
    %vm720 = vcmp.lt.s32.totalorder %v700, 2
    %vm721 = vcmp.lt.s32.totalorder %v700, 3
    %vm722 = vcmp.lt.s32.totalorder %v700, 4
    %v723 = vsel %vm719, %v703, %v706
    %v724 = vsel %vm722, %v712, 2102212464
    %v725 = vsel %vm721, %v709, %v724
    %v726 = vsel %vm720, %v723, %v725
    %v727 = vsel %vm719, %v706, %v709
    %v728 = vsel %vm722, %v715, 920167782
    %v729 = vsel %vm721, %v712, %v728
    %v730 = vsel %vm720, %v727, %v729
    %v731 = vsel %vm719, %v709, %v712
    %v732 = vsel %vm722, %v718, 1326507024
    %v733 = vsel %vm721, %v715, %v732
    %v734 = vsel %vm720, %v731, %v733
    %v735 = vshll.u32 %v695, 8
    %v736 = vmul.u32.u64.compose %v735, %v734
    %v737 = vextract.low.u32 %v736
    %v738 = vextract.high.u32 %v736
    %v739 = vmul.u32.u64.compose %v735, %v730
    %v740 = vextract.low.u32 %v739
    %v741 = vextract.high.u32 %v739
    %v742 = vmul.u32 %v735, %v726
    %v743 = vadd.s32 %v738, %v740
    %vm744 = vc.u32 %v738, %v740
    %v745 = vadd.s32 %v741, 1
    %v746 = vsel %vm744, %v745, %v741
    %v747 = vadd.s32 %v742, %v746
    %v748 = vadd.s32 %v747, 536870912
    %v749 = vshrl.u32 %v748, 30
    %v750 = vshll.u32 %v749, 30
    %v751 = vsub.s32 %v747, %v750
    %vm752 = vcmp.lt.s32.totalorder %v751, 0
    %v753 = vsub.s32 0, %v751
    %v754 = vsel %vm752, %v753, %v751
    %v755 = vclz %v754
    %v756 = vsub.s32 %v755, 2
    %vm757 = vcmp.gt.s32.totalorder 0, %v756
    %v758 = vsel %vm757, 0, %v756
    %v759 = vsub.s32 32, %v758
    %v760 = vshll.u32 %v751, %v758
    %v761 = vshrl.u32 %v743, %v759
    %v762 = vor.u32 %v760, %v761
    %v763 = vsub.s32 4294967266, %v758
    %v764 = vadd.s32 %v763, 127
    %v765 = vshll.u32 %v764, 23
    %v766 = vor.u32 4788187, %v765
    %v767 = vand.u32 2147483647, %v766
    %v769 = vcvt.s32.f32 %v762
    %v770 = vmul.f32 %v769, %v767
    %v771 = vxor.u32 %v770, 2147483648
    %v772 = vsel %vm689, %v771, %v770
    %v773 = vsub.s32 4, %v749
    %v774 = vsel %vm689, %v773, %v749
    %v775 = vsel %vm688, %v259, %v772
    %v776 = vsel %vm688, 0, %v774
    %v777 = vcosq.f32.pop %v775
    %v778 = vsinq.f32.pop %v775
    %vm779 = vweird.f32 %v259
    %v780 = vadd.s32 %v776, 3
    %v781 = vand.u32 %v780, 3
    %vm782 = vcmp.lt.s32.totalorder %v781, 2
    %vm783 = vcmp.eq.s32.totalorder %v781, 0
    %v784 = vxor.u32 %v778, 2147483648
    %v785 = vsel %vm783, %v777, %v784
    %vm786 = vcmp.eq.s32.totalorder %v781, 2
    %v787 = vxor.u32 %v777, 2147483648
    %v788 = vsel %vm786, %v787, %v778
    %v789 = vsel %vm782, %v785, %v788
    %v790 = vsel %vm779, nan, %v789
    %v791 = vand.u32 2147483647, %v260
    %vm792 = vcmp.le.f32.partialorder %v791, 0.7853982
    %vm793 = vcmp.lt.s32.totalorder %v260, 0
    %v794 = vand.u32 %v260, 2139095040
    %v795 = vshrl.u32 %v794, 23
    %v796 = vsub.s32 %v795, 127
    %v797 = vand.u32 2147483647, %v260
    %v798 = vand.u32 %v797, 8388607
    %v799 = vor.u32 %v798, 8388608
    %v800 = vsub.s32 0, %v799
    %v801 = vadd.s32 %v796, 1
    %vm802 = vcmp.gt.s32.totalorder %v801, 0
    %v803 = vsel %vm802, %v801, 0
    %v804 = vshrl.u32 %v803, 5
    %v805 = vand.u32 %v803, 31
    %v806 = vsub.s32 32, %v805
    %v807 = vshrl.u32 683565275, %v806
    %v808 = vshll.u32 683565275, %v805
    %v809 = vshrl.u32 2475754826, %v806
    %v810 = vor.u32 %v808, %v809
    %v811 = vshll.u32 2475754826, %v805
    %v812 = vshrl.u32 2131351028, %v806
    %v813 = vor.u32 %v811, %v812
    %v814 = vshll.u32 2131351028, %v805
    %v815 = vshrl.u32 2102212464, %v806
    %v816 = vor.u32 %v814, %v815
    %v817 = vshll.u32 2102212464, %v805
    %v818 = vshrl.u32 920167782, %v806
    %v819 = vor.u32 %v817, %v818
    %v820 = vshll.u32 920167782, %v805
    %v821 = vshrl.u32 1326507024, %v806
    %v822 = vor.u32 %v820, %v821
    %vm823 = vcmp.lt.s32.totalorder %v804, 1
    %vm824 = vcmp.lt.s32.totalorder %v804, 2
    %vm825 = vcmp.lt.s32.totalorder %v804, 3
    %vm826 = vcmp.lt.s32.totalorder %v804, 4
    %v827 = vsel %vm823, %v807, %v810
    %v828 = vsel %vm826, %v816, 2102212464
    %v829 = vsel %vm825, %v813, %v828
    %v830 = vsel %vm824, %v827, %v829
    %v831 = vsel %vm823, %v810, %v813
    %v832 = vsel %vm826, %v819, 920167782
    %v833 = vsel %vm825, %v816, %v832
    %v834 = vsel %vm824, %v831, %v833
    %v835 = vsel %vm823, %v813, %v816
    %v836 = vsel %vm826, %v822, 1326507024
    %v837 = vsel %vm825, %v819, %v836
    %v838 = vsel %vm824, %v835, %v837
    %v839 = vshll.u32 %v799, 8
    %v840 = vmul.u32.u64.compose %v839, %v838
    %v841 = vextract.low.u32 %v840
    %v842 = vextract.high.u32 %v840
    %v843 = vmul.u32.u64.compose %v839, %v834
    %v844 = vextract.low.u32 %v843
    %v845 = vextract.high.u32 %v843
    %v846 = vmul.u32 %v839, %v830
    %v847 = vadd.s32 %v842, %v844
    %vm848 = vc.u32 %v842, %v844
    %v849 = vadd.s32 %v845, 1
    %v850 = vsel %vm848, %v849, %v845
    %v851 = vadd.s32 %v846, %v850
    %v852 = vadd.s32 %v851, 536870912
    %v853 = vshrl.u32 %v852, 30
    %v854 = vshll.u32 %v853, 30
    %v855 = vsub.s32 %v851, %v854
    %vm856 = vcmp.lt.s32.totalorder %v855, 0
    %v857 = vsub.s32 0, %v855
    %v858 = vsel %vm856, %v857, %v855
    %v859 = vclz %v858
    %v860 = vsub.s32 %v859, 2
    %vm861 = vcmp.gt.s32.totalorder 0, %v860
    %v862 = vsel %vm861, 0, %v860
    %v863 = vsub.s32 32, %v862
    %v864 = vshll.u32 %v855, %v862
    %v865 = vshrl.u32 %v847, %v863
    %v866 = vor.u32 %v864, %v865
    %v867 = vsub.s32 4294967266, %v862
    %v868 = vadd.s32 %v867, 127
    %v869 = vshll.u32 %v868, 23
    %v870 = vor.u32 4788187, %v869
    %v871 = vand.u32 2147483647, %v870
    %v873 = vcvt.s32.f32 %v866
    %v874 = vmul.f32 %v873, %v871
    %v875 = vxor.u32 %v874, 2147483648
    %v876 = vsel %vm793, %v875, %v874
    %v877 = vsub.s32 4, %v853
    %v878 = vsel %vm793, %v877, %v853
    %v879 = vsel %vm792, %v260, %v876
    %v880 = vsel %vm792, 0, %v878
    %v881 = vcosq.f32.pop %v879
    %v882 = vsinq.f32.pop %v879
    %vm883 = vweird.f32 %v260
    %v884 = vadd.s32 %v880, 3
    %v885 = vand.u32 %v884, 3
    %vm886 = vcmp.lt.s32.totalorder %v885, 2
    %vm887 = vcmp.eq.s32.totalorder %v885, 0
    %v888 = vxor.u32 %v882, 2147483648
    %v889 = vsel %vm887, %v881, %v888
    %vm890 = vcmp.eq.s32.totalorder %v885, 2
    %v891 = vxor.u32 %v881, 2147483648
    %v892 = vsel %vm890, %v891, %v882
    %v893 = vsel %vm886, %v889, %v892
    %v894 = vsel %vm883, nan, %v893
    %v895 = vand.u32 2147483647, %v261
    %vm896 = vcmp.le.f32.partialorder %v895, 0.7853982
    %vm897 = vcmp.lt.s32.totalorder %v261, 0
    %v898 = vand.u32 %v261, 2139095040
    %v899 = vshrl.u32 %v898, 23
    %v900 = vsub.s32 %v899, 127
    %v901 = vand.u32 2147483647, %v261
    %v902 = vand.u32 %v901, 8388607
    %v903 = vor.u32 %v902, 8388608
    %v904 = vsub.s32 0, %v903
    %v905 = vadd.s32 %v900, 1
    %vm906 = vcmp.gt.s32.totalorder %v905, 0
    %v907 = vsel %vm906, %v905, 0
    %v908 = vshrl.u32 %v907, 5
    %v909 = vand.u32 %v907, 31
    %v910 = vsub.s32 32, %v909
    %v911 = vshrl.u32 683565275, %v910
    %v912 = vshll.u32 683565275, %v909
    %v913 = vshrl.u32 2475754826, %v910
    %v914 = vor.u32 %v912, %v913
    %v915 = vshll.u32 2475754826, %v909
    %v916 = vshrl.u32 2131351028, %v910
    %v917 = vor.u32 %v915, %v916
    %v918 = vshll.u32 2131351028, %v909
    %v919 = vshrl.u32 2102212464, %v910
    %v920 = vor.u32 %v918, %v919
    %v921 = vshll.u32 2102212464, %v909
    %v922 = vshrl.u32 920167782, %v910
    %v923 = vor.u32 %v921, %v922
    %v924 = vshll.u32 920167782, %v909
    %v925 = vshrl.u32 1326507024, %v910
    %v926 = vor.u32 %v924, %v925
    %vm927 = vcmp.lt.s32.totalorder %v908, 1
    %vm928 = vcmp.lt.s32.totalorder %v908, 2
    %vm929 = vcmp.lt.s32.totalorder %v908, 3
    %vm930 = vcmp.lt.s32.totalorder %v908, 4
    %v931 = vsel %vm927, %v911, %v914
    %v932 = vsel %vm930, %v920, 2102212464
    %v933 = vsel %vm929, %v917, %v932
    %v934 = vsel %vm928, %v931, %v933
    %v935 = vsel %vm927, %v914, %v917
    %v936 = vsel %vm930, %v923, 920167782
    %v937 = vsel %vm929, %v920, %v936
    %v938 = vsel %vm928, %v935, %v937
    %v939 = vsel %vm927, %v917, %v920
    %v940 = vsel %vm930, %v926, 1326507024
    %v941 = vsel %vm929, %v923, %v940
    %v942 = vsel %vm928, %v939, %v941
    %v943 = vshll.u32 %v903, 8
    %v944 = vmul.u32.u64.compose %v943, %v942
    %v945 = vextract.low.u32 %v944
    %v946 = vextract.high.u32 %v944
    %v947 = vmul.u32.u64.compose %v943, %v938
    %v948 = vextract.low.u32 %v947
    %v949 = vextract.high.u32 %v947
    %v950 = vmul.u32 %v943, %v934
    %v951 = vadd.s32 %v946, %v948
    %vm952 = vc.u32 %v946, %v948
    %v953 = vadd.s32 %v949, 1
    %v954 = vsel %vm952, %v953, %v949
    %v955 = vadd.s32 %v950, %v954
    %v956 = vadd.s32 %v955, 536870912
    %v957 = vshrl.u32 %v956, 30
    %v958 = vshll.u32 %v957, 30
    %v959 = vsub.s32 %v955, %v958
    %vm960 = vcmp.lt.s32.totalorder %v959, 0
    %v961 = vsub.s32 0, %v959
    %v962 = vsel %vm960, %v961, %v959
    %v963 = vclz %v962
    %v964 = vsub.s32 %v963, 2
    %vm965 = vcmp.gt.s32.totalorder 0, %v964
    %v966 = vsel %vm965, 0, %v964
    %v967 = vsub.s32 32, %v966
    %v968 = vshll.u32 %v959, %v966
    %v969 = vshrl.u32 %v951, %v967
    %v970 = vor.u32 %v968, %v969
    %v971 = vsub.s32 4294967266, %v966
    %v972 = vadd.s32 %v971, 127
    %v973 = vshll.u32 %v972, 23
    %v974 = vor.u32 4788187, %v973
    %v975 = vand.u32 2147483647, %v974
    %v977 = vcvt.s32.f32 %v970
    %v978 = vmul.f32 %v977, %v975
    %v979 = vxor.u32 %v978, 2147483648
    %v980 = vsel %vm897, %v979, %v978
    %v981 = vsub.s32 4, %v957
    %v982 = vsel %vm897, %v981, %v957
    %v983 = vsel %vm896, %v261, %v980
    %v984 = vsel %vm896, 0, %v982
    %v985 = vcosq.f32.pop %v983
    %v986 = vsinq.f32.pop %v983
    %vm987 = vweird.f32 %v261
    %v988 = vadd.s32 %v984, 3
    %v989 = vand.u32 %v988, 3
    %vm990 = vcmp.lt.s32.totalorder %v989, 2
    %vm991 = vcmp.eq.s32.totalorder %v989, 0
    %v992 = vxor.u32 %v986, 2147483648
    %v993 = vsel %vm991, %v985, %v992
    %vm994 = vcmp.eq.s32.totalorder %v989, 2
    %v995 = vxor.u32 %v985, 2147483648
    %v996 = vsel %vm994, %v995, %v986
    %v997 = vsel %vm990, %v993, %v996
    %v998 = vsel %vm987, nan, %v997
    %v999 = vand.u32 2147483647, %v262
    %vm1000 = vcmp.le.f32.partialorder %v999, 0.7853982
    %vm1001 = vcmp.lt.s32.totalorder %v262, 0
    %v1002 = vand.u32 %v262, 2139095040
    %v1003 = vshrl.u32 %v1002, 23
    %v1004 = vsub.s32 %v1003, 127
    %v1005 = vand.u32 2147483647, %v262
    %v1006 = vand.u32 %v1005, 8388607
    %v1007 = vor.u32 %v1006, 8388608
    %v1008 = vsub.s32 0, %v1007
    %v1009 = vadd.s32 %v1004, 1
    %vm1010 = vcmp.gt.s32.totalorder %v1009, 0
    %v1011 = vsel %vm1010, %v1009, 0
    %v1012 = vshrl.u32 %v1011, 5
    %v1013 = vand.u32 %v1011, 31
    %v1014 = vsub.s32 32, %v1013
    %v1015 = vshrl.u32 683565275, %v1014
    %v1016 = vshll.u32 683565275, %v1013
    %v1017 = vshrl.u32 2475754826, %v1014
    %v1018 = vor.u32 %v1016, %v1017
    %v1019 = vshll.u32 2475754826, %v1013
    %v1020 = vshrl.u32 2131351028, %v1014
    %v1021 = vor.u32 %v1019, %v1020
    %v1022 = vshll.u32 2131351028, %v1013
    %v1023 = vshrl.u32 2102212464, %v1014
    %v1024 = vor.u32 %v1022, %v1023
    %v1025 = vshll.u32 2102212464, %v1013
    %v1026 = vshrl.u32 920167782, %v1014
    %v1027 = vor.u32 %v1025, %v1026
    %v1028 = vshll.u32 920167782, %v1013
    %v1029 = vshrl.u32 1326507024, %v1014
    %v1030 = vor.u32 %v1028, %v1029
    %vm1031 = vcmp.lt.s32.totalorder %v1012, 1
    %vm1032 = vcmp.lt.s32.totalorder %v1012, 2
    %vm1033 = vcmp.lt.s32.totalorder %v1012, 3
    %vm1034 = vcmp.lt.s32.totalorder %v1012, 4
    %v1035 = vsel %vm1031, %v1015, %v1018
    %v1036 = vsel %vm1034, %v1024, 2102212464
    %v1037 = vsel %vm1033, %v1021, %v1036
    %v1038 = vsel %vm1032, %v1035, %v1037
    %v1039 = vsel %vm1031, %v1018, %v1021
    %v1040 = vsel %vm1034, %v1027, 920167782
    %v1041 = vsel %vm1033, %v1024, %v1040
    %v1042 = vsel %vm1032, %v1039, %v1041
    %v1043 = vsel %vm1031, %v1021, %v1024
    %v1044 = vsel %vm1034, %v1030, 1326507024
    %v1045 = vsel %vm1033, %v1027, %v1044
    %v1046 = vsel %vm1032, %v1043, %v1045
    %v1047 = vshll.u32 %v1007, 8
    %v1048 = vmul.u32.u64.compose %v1047, %v1046
    %v1049 = vextract.low.u32 %v1048
    %v1050 = vextract.high.u32 %v1048
    %v1051 = vmul.u32.u64.compose %v1047, %v1042
    %v1052 = vextract.low.u32 %v1051
    %v1053 = vextract.high.u32 %v1051
    %v1054 = vmul.u32 %v1047, %v1038
    %v1055 = vadd.s32 %v1050, %v1052
    %vm1056 = vc.u32 %v1050, %v1052
    %v1057 = vadd.s32 %v1053, 1
    %v1058 = vsel %vm1056, %v1057, %v1053
    %v1059 = vadd.s32 %v1054, %v1058
    %v1060 = vadd.s32 %v1059, 536870912
    %v1061 = vshrl.u32 %v1060, 30
    %v1062 = vshll.u32 %v1061, 30
    %v1063 = vsub.s32 %v1059, %v1062
    %vm1064 = vcmp.lt.s32.totalorder %v1063, 0
    %v1065 = vsub.s32 0, %v1063
    %v1066 = vsel %vm1064, %v1065, %v1063
    %v1067 = vclz %v1066
    %v1068 = vsub.s32 %v1067, 2
    %vm1069 = vcmp.gt.s32.totalorder 0, %v1068
    %v1070 = vsel %vm1069, 0, %v1068
    %v1071 = vsub.s32 32, %v1070
    %v1072 = vshll.u32 %v1063, %v1070
    %v1073 = vshrl.u32 %v1055, %v1071
    %v1074 = vor.u32 %v1072, %v1073
    %v1075 = vsub.s32 4294967266, %v1070
    %v1076 = vadd.s32 %v1075, 127
    %v1077 = vshll.u32 %v1076, 23
    %v1078 = vor.u32 4788187, %v1077
    %v1079 = vand.u32 2147483647, %v1078
    %v1081 = vcvt.s32.f32 %v1074
    %v1082 = vmul.f32 %v1081, %v1079
    %v1083 = vxor.u32 %v1082, 2147483648
    %v1084 = vsel %vm1001, %v1083, %v1082
    %v1085 = vsub.s32 4, %v1061
    %v1086 = vsel %vm1001, %v1085, %v1061
    %v1087 = vsel %vm1000, %v262, %v1084
    %v1088 = vsel %vm1000, 0, %v1086
    %v1089 = vcosq.f32.pop %v1087
    %v1090 = vsinq.f32.pop %v1087
    %vm1091 = vweird.f32 %v262
    %v1092 = vadd.s32 %v1088, 3
    %v1093 = vand.u32 %v1092, 3
    %vm1094 = vcmp.lt.s32.totalorder %v1093, 2
    %vm1095 = vcmp.eq.s32.totalorder %v1093, 0
    %v1096 = vxor.u32 %v1090, 2147483648
    %v1097 = vsel %vm1095, %v1089, %v1096
    %vm1098 = vcmp.eq.s32.totalorder %v1093, 2
    %v1099 = vxor.u32 %v1089, 2147483648
    %v1100 = vsel %vm1098, %v1099, %v1090
    %v1101 = vsel %vm1094, %v1097, %v1100
    %v1102 = vsel %vm1091, nan, %v1101
    %v1103 = vand.u32 2147483647, %v263
    %vm1104 = vcmp.le.f32.partialorder %v1103, 0.7853982
    %vm1105 = vcmp.lt.s32.totalorder %v263, 0
    %v1106 = vand.u32 %v263, 2139095040
    %v1107 = vshrl.u32 %v1106, 23
    %v1108 = vsub.s32 %v1107, 127
    %v1109 = vand.u32 2147483647, %v263
    %v1110 = vand.u32 %v1109, 8388607
    %v1111 = vor.u32 %v1110, 8388608
    %v1112 = vsub.s32 0, %v1111
    %v1113 = vadd.s32 %v1108, 1
    %vm1114 = vcmp.gt.s32.totalorder %v1113, 0
    %v1115 = vsel %vm1114, %v1113, 0
    %v1116 = vshrl.u32 %v1115, 5
    %v1117 = vand.u32 %v1115, 31
    %v1118 = vsub.s32 32, %v1117
    %v1119 = vshrl.u32 683565275, %v1118
    %v1120 = vshll.u32 683565275, %v1117
    %v1121 = vshrl.u32 2475754826, %v1118
    %v1122 = vor.u32 %v1120, %v1121
    %v1123 = vshll.u32 2475754826, %v1117
    %v1124 = vshrl.u32 2131351028, %v1118
    %v1125 = vor.u32 %v1123, %v1124
    %v1126 = vshll.u32 2131351028, %v1117
    %v1127 = vshrl.u32 2102212464, %v1118
    %v1128 = vor.u32 %v1126, %v1127
    %v1129 = vshll.u32 2102212464, %v1117
    %v1130 = vshrl.u32 920167782, %v1118
    %v1131 = vor.u32 %v1129, %v1130
    %v1132 = vshll.u32 920167782, %v1117
    %v1133 = vshrl.u32 1326507024, %v1118
    %v1134 = vor.u32 %v1132, %v1133
    %vm1135 = vcmp.lt.s32.totalorder %v1116, 1
    %vm1136 = vcmp.lt.s32.totalorder %v1116, 2
    %vm1137 = vcmp.lt.s32.totalorder %v1116, 3
    %vm1138 = vcmp.lt.s32.totalorder %v1116, 4
    %v1139 = vsel %vm1135, %v1119, %v1122
    %v1140 = vsel %vm1138, %v1128, 2102212464
    %v1141 = vsel %vm1137, %v1125, %v1140
    %v1142 = vsel %vm1136, %v1139, %v1141
    %v1143 = vsel %vm1135, %v1122, %v1125
    %v1144 = vsel %vm1138, %v1131, 920167782
    %v1145 = vsel %vm1137, %v1128, %v1144
    %v1146 = vsel %vm1136, %v1143, %v1145
    %v1147 = vsel %vm1135, %v1125, %v1128
    %v1148 = vsel %vm1138, %v1134, 1326507024
    %v1149 = vsel %vm1137, %v1131, %v1148
    %v1150 = vsel %vm1136, %v1147, %v1149
    %v1151 = vshll.u32 %v1111, 8
    %v1152 = vmul.u32.u64.compose %v1151, %v1150
    %v1153 = vextract.low.u32 %v1152
    %v1154 = vextract.high.u32 %v1152
    %v1155 = vmul.u32.u64.compose %v1151, %v1146
    %v1156 = vextract.low.u32 %v1155
    %v1157 = vextract.high.u32 %v1155
    %v1158 = vmul.u32 %v1151, %v1142
    %v1159 = vadd.s32 %v1154, %v1156
    %vm1160 = vc.u32 %v1154, %v1156
    %v1161 = vadd.s32 %v1157, 1
    %v1162 = vsel %vm1160, %v1161, %v1157
    %v1163 = vadd.s32 %v1158, %v1162
    %v1164 = vadd.s32 %v1163, 536870912
    %v1165 = vshrl.u32 %v1164, 30
    %v1166 = vshll.u32 %v1165, 30
    %v1167 = vsub.s32 %v1163, %v1166
    %vm1168 = vcmp.lt.s32.totalorder %v1167, 0
    %v1169 = vsub.s32 0, %v1167
    %v1170 = vsel %vm1168, %v1169, %v1167
    %v1171 = vclz %v1170
    %v1172 = vsub.s32 %v1171, 2
    %vm1173 = vcmp.gt.s32.totalorder 0, %v1172
    %v1174 = vsel %vm1173, 0, %v1172
    %v1175 = vsub.s32 32, %v1174
    %v1176 = vshll.u32 %v1167, %v1174
    %v1177 = vshrl.u32 %v1159, %v1175
    %v1178 = vor.u32 %v1176, %v1177
    %v1179 = vsub.s32 4294967266, %v1174
    %v1180 = vadd.s32 %v1179, 127
    %v1181 = vshll.u32 %v1180, 23
    %v1182 = vor.u32 4788187, %v1181
    %v1183 = vand.u32 2147483647, %v1182
    %v1185 = vcvt.s32.f32 %v1178
    %v1186 = vmul.f32 %v1185, %v1183
    %v1187 = vxor.u32 %v1186, 2147483648
    %v1188 = vsel %vm1105, %v1187, %v1186
    %v1189 = vsub.s32 4, %v1165
    %v1190 = vsel %vm1105, %v1189, %v1165
    %v1191 = vsel %vm1104, %v263, %v1188
    %v1192 = vsel %vm1104, 0, %v1190
    %v1193 = vcosq.f32.pop %v1191
    %v1194 = vsinq.f32.pop %v1191
    %vm1195 = vweird.f32 %v263
    %v1196 = vadd.s32 %v1192, 3
    %v1197 = vand.u32 %v1196, 3
    %vm1198 = vcmp.lt.s32.totalorder %v1197, 2
    %vm1199 = vcmp.eq.s32.totalorder %v1197, 0
    %v1200 = vxor.u32 %v1194, 2147483648
    %v1201 = vsel %vm1199, %v1193, %v1200
    %vm1202 = vcmp.eq.s32.totalorder %v1197, 2
    %v1203 = vxor.u32 %v1193, 2147483648
    %v1204 = vsel %vm1202, %v1203, %v1194
    %v1205 = vsel %vm1198, %v1201, %v1204
    %v1206 = vsel %vm1195, nan, %v1205
    %v1207 = vand.u32 2147483647, %v264
    %vm1208 = vcmp.le.f32.partialorder %v1207, 0.7853982
    %vm1209 = vcmp.lt.s32.totalorder %v264, 0
    %v1210 = vand.u32 %v264, 2139095040
    %v1211 = vshrl.u32 %v1210, 23
    %v1212 = vsub.s32 %v1211, 127
    %v1213 = vand.u32 2147483647, %v264
    %v1214 = vand.u32 %v1213, 8388607
    %v1215 = vor.u32 %v1214, 8388608
    %v1216 = vsub.s32 0, %v1215
    %v1217 = vadd.s32 %v1212, 1
    %vm1218 = vcmp.gt.s32.totalorder %v1217, 0
    %v1219 = vsel %vm1218, %v1217, 0
    %v1220 = vshrl.u32 %v1219, 5
    %v1221 = vand.u32 %v1219, 31
    %v1222 = vsub.s32 32, %v1221
    %v1223 = vshrl.u32 683565275, %v1222
    %v1224 = vshll.u32 683565275, %v1221
    %v1225 = vshrl.u32 2475754826, %v1222
    %v1226 = vor.u32 %v1224, %v1225
    %v1227 = vshll.u32 2475754826, %v1221
    %v1228 = vshrl.u32 2131351028, %v1222
    %v1229 = vor.u32 %v1227, %v1228
    %v1230 = vshll.u32 2131351028, %v1221
    %v1231 = vshrl.u32 2102212464, %v1222
    %v1232 = vor.u32 %v1230, %v1231
    %v1233 = vshll.u32 2102212464, %v1221
    %v1234 = vshrl.u32 920167782, %v1222
    %v1235 = vor.u32 %v1233, %v1234
    %v1236 = vshll.u32 920167782, %v1221
    %v1237 = vshrl.u32 1326507024, %v1222
    %v1238 = vor.u32 %v1236, %v1237
    %vm1239 = vcmp.lt.s32.totalorder %v1220, 1
    %vm1240 = vcmp.lt.s32.totalorder %v1220, 2
    %vm1241 = vcmp.lt.s32.totalorder %v1220, 3
    %vm1242 = vcmp.lt.s32.totalorder %v1220, 4
    %v1243 = vsel %vm1239, %v1223, %v1226
    %v1244 = vsel %vm1242, %v1232, 2102212464
    %v1245 = vsel %vm1241, %v1229, %v1244
    %v1246 = vsel %vm1240, %v1243, %v1245
    %v1247 = vsel %vm1239, %v1226, %v1229
    %v1248 = vsel %vm1242, %v1235, 920167782
    %v1249 = vsel %vm1241, %v1232, %v1248
    %v1250 = vsel %vm1240, %v1247, %v1249
    %v1251 = vsel %vm1239, %v1229, %v1232
    %v1252 = vsel %vm1242, %v1238, 1326507024
    %v1253 = vsel %vm1241, %v1235, %v1252
    %v1254 = vsel %vm1240, %v1251, %v1253
    %v1255 = vshll.u32 %v1215, 8
    %v1256 = vmul.u32.u64.compose %v1255, %v1254
    %v1257 = vextract.low.u32 %v1256
    %v1258 = vextract.high.u32 %v1256
    %v1259 = vmul.u32.u64.compose %v1255, %v1250
    %v1260 = vextract.low.u32 %v1259
    %v1261 = vextract.high.u32 %v1259
    %v1262 = vmul.u32 %v1255, %v1246
    %v1263 = vadd.s32 %v1258, %v1260
    %vm1264 = vc.u32 %v1258, %v1260
    %v1265 = vadd.s32 %v1261, 1
    %v1266 = vsel %vm1264, %v1265, %v1261
    %v1267 = vadd.s32 %v1262, %v1266
    %v1268 = vadd.s32 %v1267, 536870912
    %v1269 = vshrl.u32 %v1268, 30
    %v1270 = vshll.u32 %v1269, 30
    %v1271 = vsub.s32 %v1267, %v1270
    %vm1272 = vcmp.lt.s32.totalorder %v1271, 0
    %v1273 = vsub.s32 0, %v1271
    %v1274 = vsel %vm1272, %v1273, %v1271
    %v1275 = vclz %v1274
    %v1276 = vsub.s32 %v1275, 2
    %vm1277 = vcmp.gt.s32.totalorder 0, %v1276
    %v1278 = vsel %vm1277, 0, %v1276
    %v1279 = vsub.s32 32, %v1278
    %v1280 = vshll.u32 %v1271, %v1278
    %v1281 = vshrl.u32 %v1263, %v1279
    %v1282 = vor.u32 %v1280, %v1281
    %v1283 = vsub.s32 4294967266, %v1278
    %v1284 = vadd.s32 %v1283, 127
    %v1285 = vshll.u32 %v1284, 23
    %v1286 = vor.u32 4788187, %v1285
    %v1287 = vand.u32 2147483647, %v1286
    %v1289 = vcvt.s32.f32 %v1282
    %v1290 = vmul.f32 %v1289, %v1287
    %v1291 = vxor.u32 %v1290, 2147483648
    %v1292 = vsel %vm1209, %v1291, %v1290
    %v1293 = vsub.s32 4, %v1269
    %v1294 = vsel %vm1209, %v1293, %v1269
    %v1295 = vsel %vm1208, %v264, %v1292
    %v1296 = vsel %vm1208, 0, %v1294
    %v1297 = vcosq.f32.pop %v1295
    %v1298 = vsinq.f32.pop %v1295
    %vm1299 = vweird.f32 %v264
    %v1300 = vadd.s32 %v1296, 3
    %v1301 = vand.u32 %v1300, 3
    %vm1302 = vcmp.lt.s32.totalorder %v1301, 2
    %vm1303 = vcmp.eq.s32.totalorder %v1301, 0
    %v1304 = vxor.u32 %v1298, 2147483648
    %v1305 = vsel %vm1303, %v1297, %v1304
    %vm1306 = vcmp.eq.s32.totalorder %v1301, 2
    %v1307 = vxor.u32 %v1297, 2147483648
    %v1308 = vsel %vm1306, %v1307, %v1298
    %v1309 = vsel %vm1302, %v1305, %v1308
    %v1310 = vsel %vm1299, nan, %v1309
    %v1311 = vand.u32 2147483647, %v265
    %vm1312 = vcmp.le.f32.partialorder %v1311, 0.7853982
    %vm1313 = vcmp.lt.s32.totalorder %v265, 0
    %v1314 = vand.u32 %v265, 2139095040
    %v1315 = vshrl.u32 %v1314, 23
    %v1316 = vsub.s32 %v1315, 127
    %v1317 = vand.u32 2147483647, %v265
    %v1318 = vand.u32 %v1317, 8388607
    %v1319 = vor.u32 %v1318, 8388608
    %v1320 = vsub.s32 0, %v1319
    %v1321 = vadd.s32 %v1316, 1
    %vm1322 = vcmp.gt.s32.totalorder %v1321, 0
    %v1323 = vsel %vm1322, %v1321, 0
    %v1324 = vshrl.u32 %v1323, 5
    %v1325 = vand.u32 %v1323, 31
    %v1326 = vsub.s32 32, %v1325
    %v1327 = vshrl.u32 683565275, %v1326
    %v1328 = vshll.u32 683565275, %v1325
    %v1329 = vshrl.u32 2475754826, %v1326
    %v1330 = vor.u32 %v1328, %v1329
    %v1331 = vshll.u32 2475754826, %v1325
    %v1332 = vshrl.u32 2131351028, %v1326
    %v1333 = vor.u32 %v1331, %v1332
    %v1334 = vshll.u32 2131351028, %v1325
    %v1335 = vshrl.u32 2102212464, %v1326
    %v1336 = vor.u32 %v1334, %v1335
    %v1337 = vshll.u32 2102212464, %v1325
    %v1338 = vshrl.u32 920167782, %v1326
    %v1339 = vor.u32 %v1337, %v1338
    %v1340 = vshll.u32 920167782, %v1325
    %v1341 = vshrl.u32 1326507024, %v1326
    %v1342 = vor.u32 %v1340, %v1341
    %vm1343 = vcmp.lt.s32.totalorder %v1324, 1
    %vm1344 = vcmp.lt.s32.totalorder %v1324, 2
    %vm1345 = vcmp.lt.s32.totalorder %v1324, 3
    %vm1346 = vcmp.lt.s32.totalorder %v1324, 4
    %v1347 = vsel %vm1343, %v1327, %v1330
    %v1348 = vsel %vm1346, %v1336, 2102212464
    %v1349 = vsel %vm1345, %v1333, %v1348
    %v1350 = vsel %vm1344, %v1347, %v1349
    %v1351 = vsel %vm1343, %v1330, %v1333
    %v1352 = vsel %vm1346, %v1339, 920167782
    %v1353 = vsel %vm1345, %v1336, %v1352
    %v1354 = vsel %vm1344, %v1351, %v1353
    %v1355 = vsel %vm1343, %v1333, %v1336
    %v1356 = vsel %vm1346, %v1342, 1326507024
    %v1357 = vsel %vm1345, %v1339, %v1356
    %v1358 = vsel %vm1344, %v1355, %v1357
    %v1359 = vshll.u32 %v1319, 8
    %v1360 = vmul.u32.u64.compose %v1359, %v1358
    %v1361 = vextract.low.u32 %v1360
    %v1362 = vextract.high.u32 %v1360
    %v1363 = vmul.u32.u64.compose %v1359, %v1354
    %v1364 = vextract.low.u32 %v1363
    %v1365 = vextract.high.u32 %v1363
    %v1366 = vmul.u32 %v1359, %v1350
    %v1367 = vadd.s32 %v1362, %v1364
    %vm1368 = vc.u32 %v1362, %v1364
    %v1369 = vadd.s32 %v1365, 1
    %v1370 = vsel %vm1368, %v1369, %v1365
    %v1371 = vadd.s32 %v1366, %v1370
    %v1372 = vadd.s32 %v1371, 536870912
    %v1373 = vshrl.u32 %v1372, 30
    %v1374 = vshll.u32 %v1373, 30
    %v1375 = vsub.s32 %v1371, %v1374
    %vm1376 = vcmp.lt.s32.totalorder %v1375, 0
    %v1377 = vsub.s32 0, %v1375
    %v1378 = vsel %vm1376, %v1377, %v1375
    %v1379 = vclz %v1378
    %v1380 = vsub.s32 %v1379, 2
    %vm1381 = vcmp.gt.s32.totalorder 0, %v1380
    %v1382 = vsel %vm1381, 0, %v1380
    %v1383 = vsub.s32 32, %v1382
    %v1384 = vshll.u32 %v1375, %v1382
    %v1385 = vshrl.u32 %v1367, %v1383
    %v1386 = vor.u32 %v1384, %v1385
    %v1387 = vsub.s32 4294967266, %v1382
    %v1388 = vadd.s32 %v1387, 127
    %v1389 = vshll.u32 %v1388, 23
    %v1390 = vor.u32 4788187, %v1389
    %v1391 = vand.u32 2147483647, %v1390
    %v1393 = vcvt.s32.f32 %v1386
    %v1394 = vmul.f32 %v1393, %v1391
    %v1395 = vxor.u32 %v1394, 2147483648
    %v1396 = vsel %vm1313, %v1395, %v1394
    %v1397 = vsub.s32 4, %v1373
    %v1398 = vsel %vm1313, %v1397, %v1373
    %v1399 = vsel %vm1312, %v265, %v1396
    %v1400 = vsel %vm1312, 0, %v1398
    %v1401 = vcosq.f32.pop %v1399
    %v1402 = vsinq.f32.pop %v1399
    %vm1403 = vweird.f32 %v265
    %v1404 = vadd.s32 %v1400, 3
    %v1405 = vand.u32 %v1404, 3
    %vm1406 = vcmp.lt.s32.totalorder %v1405, 2
    %vm1407 = vcmp.eq.s32.totalorder %v1405, 0
    %v1408 = vxor.u32 %v1402, 2147483648
    %v1409 = vsel %vm1407, %v1401, %v1408
    %vm1410 = vcmp.eq.s32.totalorder %v1405, 2
    %v1411 = vxor.u32 %v1401, 2147483648
    %v1412 = vsel %vm1410, %v1411, %v1402
    %v1413 = vsel %vm1406, %v1409, %v1412
    %v1414 = vsel %vm1403, nan, %v1413
    %v1415 = vand.u32 2147483647, %v266
    %vm1416 = vcmp.le.f32.partialorder %v1415, 0.7853982
    %vm1417 = vcmp.lt.s32.totalorder %v266, 0
    %v1418 = vand.u32 %v266, 2139095040
    %v1419 = vshrl.u32 %v1418, 23
    %v1420 = vsub.s32 %v1419, 127
    %v1421 = vand.u32 2147483647, %v266
    %v1422 = vand.u32 %v1421, 8388607
    %v1423 = vor.u32 %v1422, 8388608
    %v1424 = vsub.s32 0, %v1423
    %v1425 = vadd.s32 %v1420, 1
    %vm1426 = vcmp.gt.s32.totalorder %v1425, 0
    %v1427 = vsel %vm1426, %v1425, 0
    %v1428 = vshrl.u32 %v1427, 5
    %v1429 = vand.u32 %v1427, 31
    %v1430 = vsub.s32 32, %v1429
    %v1431 = vshrl.u32 683565275, %v1430
    %v1432 = vshll.u32 683565275, %v1429
    %v1433 = vshrl.u32 2475754826, %v1430
    %v1434 = vor.u32 %v1432, %v1433
    %v1435 = vshll.u32 2475754826, %v1429
    %v1436 = vshrl.u32 2131351028, %v1430
    %v1437 = vor.u32 %v1435, %v1436
    %v1438 = vshll.u32 2131351028, %v1429
    %v1439 = vshrl.u32 2102212464, %v1430
    %v1440 = vor.u32 %v1438, %v1439
    %v1441 = vshll.u32 2102212464, %v1429
    %v1442 = vshrl.u32 920167782, %v1430
    %v1443 = vor.u32 %v1441, %v1442
    %v1444 = vshll.u32 920167782, %v1429
    %v1445 = vshrl.u32 1326507024, %v1430
    %v1446 = vor.u32 %v1444, %v1445
    %vm1447 = vcmp.lt.s32.totalorder %v1428, 1
    %vm1448 = vcmp.lt.s32.totalorder %v1428, 2
    %vm1449 = vcmp.lt.s32.totalorder %v1428, 3
    %vm1450 = vcmp.lt.s32.totalorder %v1428, 4
    %v1451 = vsel %vm1447, %v1431, %v1434
    %v1452 = vsel %vm1450, %v1440, 2102212464
    %v1453 = vsel %vm1449, %v1437, %v1452
    %v1454 = vsel %vm1448, %v1451, %v1453
    %v1455 = vsel %vm1447, %v1434, %v1437
    %v1456 = vsel %vm1450, %v1443, 920167782
    %v1457 = vsel %vm1449, %v1440, %v1456
    %v1458 = vsel %vm1448, %v1455, %v1457
    %v1459 = vsel %vm1447, %v1437, %v1440
    %v1460 = vsel %vm1450, %v1446, 1326507024
    %v1461 = vsel %vm1449, %v1443, %v1460
    %v1462 = vsel %vm1448, %v1459, %v1461
    %v1463 = vshll.u32 %v1423, 8
    %v1464 = vmul.u32.u64.compose %v1463, %v1462
    %v1465 = vextract.low.u32 %v1464
    %v1466 = vextract.high.u32 %v1464
    %v1467 = vmul.u32.u64.compose %v1463, %v1458
    %v1468 = vextract.low.u32 %v1467
    %v1469 = vextract.high.u32 %v1467
    %v1470 = vmul.u32 %v1463, %v1454
    %v1471 = vadd.s32 %v1466, %v1468
    %vm1472 = vc.u32 %v1466, %v1468
    %v1473 = vadd.s32 %v1469, 1
    %v1474 = vsel %vm1472, %v1473, %v1469
    %v1475 = vadd.s32 %v1470, %v1474
    %v1476 = vadd.s32 %v1475, 536870912
    %v1477 = vshrl.u32 %v1476, 30
    %v1478 = vshll.u32 %v1477, 30
    %v1479 = vsub.s32 %v1475, %v1478
    %vm1480 = vcmp.lt.s32.totalorder %v1479, 0
    %v1481 = vsub.s32 0, %v1479
    %v1482 = vsel %vm1480, %v1481, %v1479
    %v1483 = vclz %v1482
    %v1484 = vsub.s32 %v1483, 2
    %vm1485 = vcmp.gt.s32.totalorder 0, %v1484
    %v1486 = vsel %vm1485, 0, %v1484
    %v1487 = vsub.s32 32, %v1486
    %v1488 = vshll.u32 %v1479, %v1486
    %v1489 = vshrl.u32 %v1471, %v1487
    %v1490 = vor.u32 %v1488, %v1489
    %v1491 = vsub.s32 4294967266, %v1486
    %v1492 = vadd.s32 %v1491, 127
    %v1493 = vshll.u32 %v1492, 23
    %v1494 = vor.u32 4788187, %v1493
    %v1495 = vand.u32 2147483647, %v1494
    %v1497 = vcvt.s32.f32 %v1490
    %v1498 = vmul.f32 %v1497, %v1495
    %v1499 = vxor.u32 %v1498, 2147483648
    %v1500 = vsel %vm1417, %v1499, %v1498
    %v1501 = vsub.s32 4, %v1477
    %v1502 = vsel %vm1417, %v1501, %v1477
    %v1503 = vsel %vm1416, %v266, %v1500
    %v1504 = vsel %vm1416, 0, %v1502
    %v1505 = vcosq.f32.pop %v1503
    %v1506 = vsinq.f32.pop %v1503
    %vm1507 = vweird.f32 %v266
    %v1508 = vadd.s32 %v1504, 3
    %v1509 = vand.u32 %v1508, 3
    %vm1510 = vcmp.lt.s32.totalorder %v1509, 2
    %vm1511 = vcmp.eq.s32.totalorder %v1509, 0
    %v1512 = vxor.u32 %v1506, 2147483648
    %v1513 = vsel %vm1511, %v1505, %v1512
    %vm1514 = vcmp.eq.s32.totalorder %v1509, 2
    %v1515 = vxor.u32 %v1505, 2147483648
    %v1516 = vsel %vm1514, %v1515, %v1506
    %v1517 = vsel %vm1510, %v1513, %v1516
    %v1518 = vsel %vm1507, nan, %v1517
    %v1519 = vand.u32 2147483647, %v267
    %vm1520 = vcmp.le.f32.partialorder %v1519, 0.7853982
    %vm1521 = vcmp.lt.s32.totalorder %v267, 0
    %v1522 = vand.u32 %v267, 2139095040
    %v1523 = vshrl.u32 %v1522, 23
    %v1524 = vsub.s32 %v1523, 127
    %v1525 = vand.u32 2147483647, %v267
    %v1526 = vand.u32 %v1525, 8388607
    %v1527 = vor.u32 %v1526, 8388608
    %v1528 = vsub.s32 0, %v1527
    %v1529 = vadd.s32 %v1524, 1
    %vm1530 = vcmp.gt.s32.totalorder %v1529, 0
    %v1531 = vsel %vm1530, %v1529, 0
    %v1532 = vshrl.u32 %v1531, 5
    %v1533 = vand.u32 %v1531, 31
    %v1534 = vsub.s32 32, %v1533
    %v1535 = vshrl.u32 683565275, %v1534
    %v1536 = vshll.u32 683565275, %v1533
    %v1537 = vshrl.u32 2475754826, %v1534
    %v1538 = vor.u32 %v1536, %v1537
    %v1539 = vshll.u32 2475754826, %v1533
    %v1540 = vshrl.u32 2131351028, %v1534
    %v1541 = vor.u32 %v1539, %v1540
    %v1542 = vshll.u32 2131351028, %v1533
    %v1543 = vshrl.u32 2102212464, %v1534
    %v1544 = vor.u32 %v1542, %v1543
    %v1545 = vshll.u32 2102212464, %v1533
    %v1546 = vshrl.u32 920167782, %v1534
    %v1547 = vor.u32 %v1545, %v1546
    %v1548 = vshll.u32 920167782, %v1533
    %v1549 = vshrl.u32 1326507024, %v1534
    %v1550 = vor.u32 %v1548, %v1549
    %vm1551 = vcmp.lt.s32.totalorder %v1532, 1
    %vm1552 = vcmp.lt.s32.totalorder %v1532, 2
    %vm1553 = vcmp.lt.s32.totalorder %v1532, 3
    %vm1554 = vcmp.lt.s32.totalorder %v1532, 4
    %v1555 = vsel %vm1551, %v1535, %v1538
    %v1556 = vsel %vm1554, %v1544, 2102212464
    %v1557 = vsel %vm1553, %v1541, %v1556
    %v1558 = vsel %vm1552, %v1555, %v1557
    %v1559 = vsel %vm1551, %v1538, %v1541
    %v1560 = vsel %vm1554, %v1547, 920167782
    %v1561 = vsel %vm1553, %v1544, %v1560
    %v1562 = vsel %vm1552, %v1559, %v1561
    %v1563 = vsel %vm1551, %v1541, %v1544
    %v1564 = vsel %vm1554, %v1550, 1326507024
    %v1565 = vsel %vm1553, %v1547, %v1564
    %v1566 = vsel %vm1552, %v1563, %v1565
    %v1567 = vshll.u32 %v1527, 8
    %v1568 = vmul.u32.u64.compose %v1567, %v1566
    %v1569 = vextract.low.u32 %v1568
    %v1570 = vextract.high.u32 %v1568
    %v1571 = vmul.u32.u64.compose %v1567, %v1562
    %v1572 = vextract.low.u32 %v1571
    %v1573 = vextract.high.u32 %v1571
    %v1574 = vmul.u32 %v1567, %v1558
    %v1575 = vadd.s32 %v1570, %v1572
    %vm1576 = vc.u32 %v1570, %v1572
    %v1577 = vadd.s32 %v1573, 1
    %v1578 = vsel %vm1576, %v1577, %v1573
    %v1579 = vadd.s32 %v1574, %v1578
    %v1580 = vadd.s32 %v1579, 536870912
    %v1581 = vshrl.u32 %v1580, 30
    %v1582 = vshll.u32 %v1581, 30
    %v1583 = vsub.s32 %v1579, %v1582
    %vm1584 = vcmp.lt.s32.totalorder %v1583, 0
    %v1585 = vsub.s32 0, %v1583
    %v1586 = vsel %vm1584, %v1585, %v1583
    %v1587 = vclz %v1586
    %v1588 = vsub.s32 %v1587, 2
    %vm1589 = vcmp.gt.s32.totalorder 0, %v1588
    %v1590 = vsel %vm1589, 0, %v1588
    %v1591 = vsub.s32 32, %v1590
    %v1592 = vshll.u32 %v1583, %v1590
    %v1593 = vshrl.u32 %v1575, %v1591
    %v1594 = vor.u32 %v1592, %v1593
    %v1595 = vsub.s32 4294967266, %v1590
    %v1596 = vadd.s32 %v1595, 127
    %v1597 = vshll.u32 %v1596, 23
    %v1598 = vor.u32 4788187, %v1597
    %v1599 = vand.u32 2147483647, %v1598
    %v1601 = vcvt.s32.f32 %v1594
    %v1602 = vmul.f32 %v1601, %v1599
    %v1603 = vxor.u32 %v1602, 2147483648
    %v1604 = vsel %vm1521, %v1603, %v1602
    %v1605 = vsub.s32 4, %v1581
    %v1606 = vsel %vm1521, %v1605, %v1581
    %v1607 = vsel %vm1520, %v267, %v1604
    %v1608 = vsel %vm1520, 0, %v1606
    %v1609 = vcosq.f32.pop %v1607
    %v1610 = vsinq.f32.pop %v1607
    %vm1611 = vweird.f32 %v267
    %v1612 = vadd.s32 %v1608, 3
    %v1613 = vand.u32 %v1612, 3
    %vm1614 = vcmp.lt.s32.totalorder %v1613, 2
    %vm1615 = vcmp.eq.s32.totalorder %v1613, 0
    %v1616 = vxor.u32 %v1610, 2147483648
    %v1617 = vsel %vm1615, %v1609, %v1616
    %vm1618 = vcmp.eq.s32.totalorder %v1613, 2
    %v1619 = vxor.u32 %v1609, 2147483648
    %v1620 = vsel %vm1618, %v1619, %v1610
    %v1621 = vsel %vm1614, %v1617, %v1620
    %v1622 = vsel %vm1611, nan, %v1621
    %v1623 = vand.u32 2147483647, %v268
    %vm1624 = vcmp.le.f32.partialorder %v1623, 0.7853982
    %vm1625 = vcmp.lt.s32.totalorder %v268, 0
    %v1626 = vand.u32 %v268, 2139095040
    %v1627 = vshrl.u32 %v1626, 23
    %v1628 = vsub.s32 %v1627, 127
    %v1629 = vand.u32 2147483647, %v268
    %v1630 = vand.u32 %v1629, 8388607
    %v1631 = vor.u32 %v1630, 8388608
    %v1632 = vsub.s32 0, %v1631
    %v1633 = vadd.s32 %v1628, 1
    %vm1634 = vcmp.gt.s32.totalorder %v1633, 0
    %v1635 = vsel %vm1634, %v1633, 0
    %v1636 = vshrl.u32 %v1635, 5
    %v1637 = vand.u32 %v1635, 31
    %v1638 = vsub.s32 32, %v1637
    %v1639 = vshrl.u32 683565275, %v1638
    %v1640 = vshll.u32 683565275, %v1637
    %v1641 = vshrl.u32 2475754826, %v1638
    %v1642 = vor.u32 %v1640, %v1641
    %v1643 = vshll.u32 2475754826, %v1637
    %v1644 = vshrl.u32 2131351028, %v1638
    %v1645 = vor.u32 %v1643, %v1644
    %v1646 = vshll.u32 2131351028, %v1637
    %v1647 = vshrl.u32 2102212464, %v1638
    %v1648 = vor.u32 %v1646, %v1647
    %v1649 = vshll.u32 2102212464, %v1637
    %v1650 = vshrl.u32 920167782, %v1638
    %v1651 = vor.u32 %v1649, %v1650
    %v1652 = vshll.u32 920167782, %v1637
    %v1653 = vshrl.u32 1326507024, %v1638
    %v1654 = vor.u32 %v1652, %v1653
    %vm1655 = vcmp.lt.s32.totalorder %v1636, 1
    %vm1656 = vcmp.lt.s32.totalorder %v1636, 2
    %vm1657 = vcmp.lt.s32.totalorder %v1636, 3
    %vm1658 = vcmp.lt.s32.totalorder %v1636, 4
    %v1659 = vsel %vm1655, %v1639, %v1642
    %v1660 = vsel %vm1658, %v1648, 2102212464
    %v1661 = vsel %vm1657, %v1645, %v1660
    %v1662 = vsel %vm1656, %v1659, %v1661
    %v1663 = vsel %vm1655, %v1642, %v1645
    %v1664 = vsel %vm1658, %v1651, 920167782
    %v1665 = vsel %vm1657, %v1648, %v1664
    %v1666 = vsel %vm1656, %v1663, %v1665
    %v1667 = vsel %vm1655, %v1645, %v1648
    %v1668 = vsel %vm1658, %v1654, 1326507024
    %v1669 = vsel %vm1657, %v1651, %v1668
    %v1670 = vsel %vm1656, %v1667, %v1669
    %v1671 = vshll.u32 %v1631, 8
    %v1672 = vmul.u32.u64.compose %v1671, %v1670
    %v1673 = vextract.low.u32 %v1672
    %v1674 = vextract.high.u32 %v1672
    %v1675 = vmul.u32.u64.compose %v1671, %v1666
    %v1676 = vextract.low.u32 %v1675
    %v1677 = vextract.high.u32 %v1675
    %v1678 = vmul.u32 %v1671, %v1662
    %v1679 = vadd.s32 %v1674, %v1676
    %vm1680 = vc.u32 %v1674, %v1676
    %v1681 = vadd.s32 %v1677, 1
    %v1682 = vsel %vm1680, %v1681, %v1677
    %v1683 = vadd.s32 %v1678, %v1682
    %v1684 = vadd.s32 %v1683, 536870912
    %v1685 = vshrl.u32 %v1684, 30
    %v1686 = vshll.u32 %v1685, 30
    %v1687 = vsub.s32 %v1683, %v1686
    %vm1688 = vcmp.lt.s32.totalorder %v1687, 0
    %v1689 = vsub.s32 0, %v1687
    %v1690 = vsel %vm1688, %v1689, %v1687
    %v1691 = vclz %v1690
    %v1692 = vsub.s32 %v1691, 2
    %vm1693 = vcmp.gt.s32.totalorder 0, %v1692
    %v1694 = vsel %vm1693, 0, %v1692
    %v1695 = vsub.s32 32, %v1694
    %v1696 = vshll.u32 %v1687, %v1694
    %v1697 = vshrl.u32 %v1679, %v1695
    %v1698 = vor.u32 %v1696, %v1697
    %v1699 = vsub.s32 4294967266, %v1694
    %v1700 = vadd.s32 %v1699, 127
    %v1701 = vshll.u32 %v1700, 23
    %v1702 = vor.u32 4788187, %v1701
    %v1703 = vand.u32 2147483647, %v1702
    %v1705 = vcvt.s32.f32 %v1698
    %v1706 = vmul.f32 %v1705, %v1703
    %v1707 = vxor.u32 %v1706, 2147483648
    %v1708 = vsel %vm1625, %v1707, %v1706
    %v1709 = vsub.s32 4, %v1685
    %v1710 = vsel %vm1625, %v1709, %v1685
    %v1711 = vsel %vm1624, %v268, %v1708
    %v1712 = vsel %vm1624, 0, %v1710
    %v1713 = vcosq.f32.pop %v1711
    %v1714 = vsinq.f32.pop %v1711
    %vm1715 = vweird.f32 %v268
    %v1716 = vadd.s32 %v1712, 3
    %v1717 = vand.u32 %v1716, 3
    %vm1718 = vcmp.lt.s32.totalorder %v1717, 2
    %vm1719 = vcmp.eq.s32.totalorder %v1717, 0
    %v1720 = vxor.u32 %v1714, 2147483648
    %v1721 = vsel %vm1719, %v1713, %v1720
    %vm1722 = vcmp.eq.s32.totalorder %v1717, 2
    %v1723 = vxor.u32 %v1713, 2147483648
    %v1724 = vsel %vm1722, %v1723, %v1714
    %v1725 = vsel %vm1718, %v1721, %v1724
    %v1726 = vsel %vm1715, nan, %v1725
    %v1727 = vand.u32 2147483647, %v269
    %vm1728 = vcmp.le.f32.partialorder %v1727, 0.7853982
    %vm1729 = vcmp.lt.s32.totalorder %v269, 0
    %v1730 = vand.u32 %v269, 2139095040
    %v1731 = vshrl.u32 %v1730, 23
    %v1732 = vsub.s32 %v1731, 127
    %v1733 = vand.u32 2147483647, %v269
    %v1734 = vand.u32 %v1733, 8388607
    %v1735 = vor.u32 %v1734, 8388608
    %v1736 = vsub.s32 0, %v1735
    %v1737 = vadd.s32 %v1732, 1
    %vm1738 = vcmp.gt.s32.totalorder %v1737, 0
    %v1739 = vsel %vm1738, %v1737, 0
    %v1740 = vshrl.u32 %v1739, 5
    %v1741 = vand.u32 %v1739, 31
    %v1742 = vsub.s32 32, %v1741
    %v1743 = vshrl.u32 683565275, %v1742
    %v1744 = vshll.u32 683565275, %v1741
    %v1745 = vshrl.u32 2475754826, %v1742
    %v1746 = vor.u32 %v1744, %v1745
    %v1747 = vshll.u32 2475754826, %v1741
    %v1748 = vshrl.u32 2131351028, %v1742
    %v1749 = vor.u32 %v1747, %v1748
    %v1750 = vshll.u32 2131351028, %v1741
    %v1751 = vshrl.u32 2102212464, %v1742
    %v1752 = vor.u32 %v1750, %v1751
    %v1753 = vshll.u32 2102212464, %v1741
    %v1754 = vshrl.u32 920167782, %v1742
    %v1755 = vor.u32 %v1753, %v1754
    %v1756 = vshll.u32 920167782, %v1741
    %v1757 = vshrl.u32 1326507024, %v1742
    %v1758 = vor.u32 %v1756, %v1757
    %vm1759 = vcmp.lt.s32.totalorder %v1740, 1
    %vm1760 = vcmp.lt.s32.totalorder %v1740, 2
    %vm1761 = vcmp.lt.s32.totalorder %v1740, 3
    %vm1762 = vcmp.lt.s32.totalorder %v1740, 4
    %v1763 = vsel %vm1759, %v1743, %v1746
    %v1764 = vsel %vm1762, %v1752, 2102212464
    %v1765 = vsel %vm1761, %v1749, %v1764
    %v1766 = vsel %vm1760, %v1763, %v1765
    %v1767 = vsel %vm1759, %v1746, %v1749
    %v1768 = vsel %vm1762, %v1755, 920167782
    %v1769 = vsel %vm1761, %v1752, %v1768
    %v1770 = vsel %vm1760, %v1767, %v1769
    %v1771 = vsel %vm1759, %v1749, %v1752
    %v1772 = vsel %vm1762, %v1758, 1326507024
    %v1773 = vsel %vm1761, %v1755, %v1772
    %v1774 = vsel %vm1760, %v1771, %v1773
    %v1775 = vshll.u32 %v1735, 8
    %v1776 = vmul.u32.u64.compose %v1775, %v1774
    %v1777 = vextract.low.u32 %v1776
    %v1778 = vextract.high.u32 %v1776
    %v1779 = vmul.u32.u64.compose %v1775, %v1770
    %v1780 = vextract.low.u32 %v1779
    %v1781 = vextract.high.u32 %v1779
    %v1782 = vmul.u32 %v1775, %v1766
    %v1783 = vadd.s32 %v1778, %v1780
    %vm1784 = vc.u32 %v1778, %v1780
    %v1785 = vadd.s32 %v1781, 1
    %v1786 = vsel %vm1784, %v1785, %v1781
    %v1787 = vadd.s32 %v1782, %v1786
    %v1788 = vadd.s32 %v1787, 536870912
    %v1789 = vshrl.u32 %v1788, 30
    %v1790 = vshll.u32 %v1789, 30
    %v1791 = vsub.s32 %v1787, %v1790
    %vm1792 = vcmp.lt.s32.totalorder %v1791, 0
    %v1793 = vsub.s32 0, %v1791
    %v1794 = vsel %vm1792, %v1793, %v1791
    %v1795 = vclz %v1794
    %v1796 = vsub.s32 %v1795, 2
    %vm1797 = vcmp.gt.s32.totalorder 0, %v1796
    %v1798 = vsel %vm1797, 0, %v1796
    %v1799 = vsub.s32 32, %v1798
    %v1800 = vshll.u32 %v1791, %v1798
    %v1801 = vshrl.u32 %v1783, %v1799
    %v1802 = vor.u32 %v1800, %v1801
    %v1803 = vsub.s32 4294967266, %v1798
    %v1804 = vadd.s32 %v1803, 127
    %v1805 = vshll.u32 %v1804, 23
    %v1806 = vor.u32 4788187, %v1805
    %v1807 = vand.u32 2147483647, %v1806
    %v1809 = vcvt.s32.f32 %v1802
    %v1810 = vmul.f32 %v1809, %v1807
    %v1811 = vxor.u32 %v1810, 2147483648
    %v1812 = vsel %vm1729, %v1811, %v1810
    %v1813 = vsub.s32 4, %v1789
    %v1814 = vsel %vm1729, %v1813, %v1789
    %v1815 = vsel %vm1728, %v269, %v1812
    %v1816 = vsel %vm1728, 0, %v1814
    %v1817 = vcosq.f32.pop %v1815
    %v1818 = vsinq.f32.pop %v1815
    %vm1819 = vweird.f32 %v269
    %v1820 = vadd.s32 %v1816, 3
    %v1821 = vand.u32 %v1820, 3
    %vm1822 = vcmp.lt.s32.totalorder %v1821, 2
    %vm1823 = vcmp.eq.s32.totalorder %v1821, 0
    %v1824 = vxor.u32 %v1818, 2147483648
    %v1825 = vsel %vm1823, %v1817, %v1824
    %vm1826 = vcmp.eq.s32.totalorder %v1821, 2
    %v1827 = vxor.u32 %v1817, 2147483648
    %v1828 = vsel %vm1826, %v1827, %v1818
    %v1829 = vsel %vm1822, %v1825, %v1828
    %v1830 = vsel %vm1819, nan, %v1829
    %v1831 = vand.u32 2147483647, %v270
    %vm1832 = vcmp.le.f32.partialorder %v1831, 0.7853982
    %vm1833 = vcmp.lt.s32.totalorder %v270, 0
    %v1834 = vand.u32 %v270, 2139095040
    %v1835 = vshrl.u32 %v1834, 23
    %v1836 = vsub.s32 %v1835, 127
    %v1837 = vand.u32 2147483647, %v270
    %v1838 = vand.u32 %v1837, 8388607
    %v1839 = vor.u32 %v1838, 8388608
    %v1840 = vsub.s32 0, %v1839
    %v1841 = vadd.s32 %v1836, 1
    %vm1842 = vcmp.gt.s32.totalorder %v1841, 0
    %v1843 = vsel %vm1842, %v1841, 0
    %v1844 = vshrl.u32 %v1843, 5
    %v1845 = vand.u32 %v1843, 31
    %v1846 = vsub.s32 32, %v1845
    %v1847 = vshrl.u32 683565275, %v1846
    %v1848 = vshll.u32 683565275, %v1845
    %v1849 = vshrl.u32 2475754826, %v1846
    %v1850 = vor.u32 %v1848, %v1849
    %v1851 = vshll.u32 2475754826, %v1845
    %v1852 = vshrl.u32 2131351028, %v1846
    %v1853 = vor.u32 %v1851, %v1852
    %v1854 = vshll.u32 2131351028, %v1845
    %v1855 = vshrl.u32 2102212464, %v1846
    %v1856 = vor.u32 %v1854, %v1855
    %v1857 = vshll.u32 2102212464, %v1845
    %v1858 = vshrl.u32 920167782, %v1846
    %v1859 = vor.u32 %v1857, %v1858
    %v1860 = vshll.u32 920167782, %v1845
    %v1861 = vshrl.u32 1326507024, %v1846
    %v1862 = vor.u32 %v1860, %v1861
    %vm1863 = vcmp.lt.s32.totalorder %v1844, 1
    %vm1864 = vcmp.lt.s32.totalorder %v1844, 2
    %vm1865 = vcmp.lt.s32.totalorder %v1844, 3
    %vm1866 = vcmp.lt.s32.totalorder %v1844, 4
    %v1867 = vsel %vm1863, %v1847, %v1850
    %v1868 = vsel %vm1866, %v1856, 2102212464
    %v1869 = vsel %vm1865, %v1853, %v1868
    %v1870 = vsel %vm1864, %v1867, %v1869
    %v1871 = vsel %vm1863, %v1850, %v1853
    %v1872 = vsel %vm1866, %v1859, 920167782
    %v1873 = vsel %vm1865, %v1856, %v1872
    %v1874 = vsel %vm1864, %v1871, %v1873
    %v1875 = vsel %vm1863, %v1853, %v1856
    %v1876 = vsel %vm1866, %v1862, 1326507024
    %v1877 = vsel %vm1865, %v1859, %v1876
    %v1878 = vsel %vm1864, %v1875, %v1877
    %v1879 = vshll.u32 %v1839, 8
    %v1880 = vmul.u32.u64.compose %v1879, %v1878
    %v1881 = vextract.low.u32 %v1880
    %v1882 = vextract.high.u32 %v1880
    %v1883 = vmul.u32.u64.compose %v1879, %v1874
    %v1884 = vextract.low.u32 %v1883
    %v1885 = vextract.high.u32 %v1883
    %v1886 = vmul.u32 %v1879, %v1870
    %v1887 = vadd.s32 %v1882, %v1884
    %vm1888 = vc.u32 %v1882, %v1884
    %v1889 = vadd.s32 %v1885, 1
    %v1890 = vsel %vm1888, %v1889, %v1885
    %v1891 = vadd.s32 %v1886, %v1890
    %v1892 = vadd.s32 %v1891, 536870912
    %v1893 = vshrl.u32 %v1892, 30
    %v1894 = vshll.u32 %v1893, 30
    %v1895 = vsub.s32 %v1891, %v1894
    %vm1896 = vcmp.lt.s32.totalorder %v1895, 0
    %v1897 = vsub.s32 0, %v1895
    %v1898 = vsel %vm1896, %v1897, %v1895
    %v1899 = vclz %v1898
    %v1900 = vsub.s32 %v1899, 2
    %vm1901 = vcmp.gt.s32.totalorder 0, %v1900
    %v1902 = vsel %vm1901, 0, %v1900
    %v1903 = vsub.s32 32, %v1902
    %v1904 = vshll.u32 %v1895, %v1902
    %v1905 = vshrl.u32 %v1887, %v1903
    %v1906 = vor.u32 %v1904, %v1905
    %v1907 = vsub.s32 4294967266, %v1902
    %v1908 = vadd.s32 %v1907, 127
    %v1909 = vshll.u32 %v1908, 23
    %v1910 = vor.u32 4788187, %v1909
    %v1911 = vand.u32 2147483647, %v1910
    %v1913 = vcvt.s32.f32 %v1906
    %v1914 = vmul.f32 %v1913, %v1911
    %v1915 = vxor.u32 %v1914, 2147483648
    %v1916 = vsel %vm1833, %v1915, %v1914
    %v1917 = vsub.s32 4, %v1893
    %v1918 = vsel %vm1833, %v1917, %v1893
    %v1919 = vsel %vm1832, %v270, %v1916
    %v1920 = vsel %vm1832, 0, %v1918
    %v1921 = vcosq.f32.pop %v1919
    %v1922 = vsinq.f32.pop %v1919
    %vm1923 = vweird.f32 %v270
    %v1924 = vadd.s32 %v1920, 3
    %v1925 = vand.u32 %v1924, 3
    %vm1926 = vcmp.lt.s32.totalorder %v1925, 2
    %vm1927 = vcmp.eq.s32.totalorder %v1925, 0
    %v1928 = vxor.u32 %v1922, 2147483648
    %v1929 = vsel %vm1927, %v1921, %v1928
    %vm1930 = vcmp.eq.s32.totalorder %v1925, 2
    %v1931 = vxor.u32 %v1921, 2147483648
    %v1932 = vsel %vm1930, %v1931, %v1922
    %v1933 = vsel %vm1926, %v1929, %v1932
    %v1934 = vsel %vm1923, nan, %v1933
    %1935 = vst [vmem:[#allocation2] sm:$0xff] %v374
    %1936 = vst [vmem:[#allocation2 + $0x8] sm:$0xff] %v478
    %1937 = vst [vmem:[#allocation2 + $0x10] sm:$0xff] %v582
    %1938 = vst [vmem:[#allocation2 + $0x18] sm:$0xff] %v686
    %1939 = vst [vmem:[#allocation2 + $0x20] sm:$0xff] %v790
    %1940 = vst [vmem:[#allocation2 + $0x28] sm:$0xff] %v894
    %1941 = vst [vmem:[#allocation2 + $0x30] sm:$0xff] %v998
    %1942 = vst [vmem:[#allocation2 + $0x38] sm:$0xff] %v1102
    %1943 = vst [vmem:[#allocation2 + $0x40] sm:$0xff] %v1206
    %1944 = vst [vmem:[#allocation2 + $0x48] sm:$0xff] %v1310
    %1945 = vst [vmem:[#allocation2 + $0x50] sm:$0xff] %v1414
    %1946 = vst [vmem:[#allocation2 + $0x58] sm:$0xff] %v1518
    %1947 = vst [vmem:[#allocation2 + $0x60] sm:$0xff] %v1622
    %1948 = vst [vmem:[#allocation2 + $0x68] sm:$0xff] %v1726
    %1949 = vst [vmem:[#allocation2 + $0x70] sm:$0xff] %v1830
    %1950 = vst [vmem:[#allocation2 + $0x78] sm:$0xff] %v1934
    // Predicated region
    $region14: #{tpu_custom_call.1} parent=1 // pred_check
      _
    $region15: #{tpu_custom_call.1} parent=1 // pred_check_branch
      %1952 = sbr.rel (0) target = $region17
    $region16: #{tpu_custom_call.1} parent=1 // pred_region
      %s1954 = ssub.s32 2048, 2048
      %1955 = vsyncadd [#allocation3], %s1954
      %s1956 = sshll.u32 [#allocation2], 4
      %s1957 = int_to_ptr.vmem [resolvable:$true] %s1956
      %1962 = dma.vmem_to_hbm [thread:$0]  %s1957, 2048, %s3, [#allocation3], 128, 128, 8
    $region17: #{tpu_custom_call.1} parent=1 // pred_fallthru
      _
    // Predicated region
    $region18: #{tpu_custom_call.1} parent=1 // pred_check
      _
    $region19: #{tpu_custom_call.1} parent=1 // pred_check_branch
      %1964 = sbr.rel (0) target = $region21
    $region20: #{tpu_custom_call.1} parent=1 // pred_region
      %1965 = dma.done [#allocation3], 2048
    $region21: #{tpu_custom_call.1} parent=1 // pred_fallthru
      _
    %1966 = vsyncpa [#allocation3], 1

// kernel: tpu_custom_call.1
$region0: #{tpu_custom_call.1}
  #allocation0 [shape = 'u32[]', space=smem, size = 0x4, offset = 0x4, fixed_abs, tag = 'smem constant byte address 0x4 - core index']
  #allocation1 [shape = 'u32[144,128]{1,0:T(1,128)}', space=vmem, size = 0x12000, scoped, tag = 'internal scratch']
  %s0 = inlined_call_operand.vmem [shape: f32[128,2], index: 0, kind: input, shape index: {}]
  %s1 = inlined_call_operand.vmem [shape: f32[2,128], index: 1, kind: input, shape index: {}]
  %s2 = inlined_call_operand.vmem [shape: f32[1,128], index: 2, kind: input, shape index: {}]
  %s3 = inlined_call_operand.hbm [shape: f32[128,128], index: 3, kind: output, shape index: {}]
  %s4 = sld [smem:[#allocation0]]
  $region22: #{tpu_custom_call.1} parent=0
    _
  %s6 = ssub.s32 1, %s4
  %s7 = scalar_select 0, %s6, %s4
  $region1: #{tpu_custom_call.1} parent=0
    #allocation2 [shape = 'u8[65536]{0}', space=vmem, size = 0x10000, scoped, tag = 'output window, operand 0, single buffered']
    #allocation3 [shape = 's32[1]{0}', space=sflag, size = 0x4, scoped, tag = 'scoped memory for tpu_custom_call.1']
    %8 = vsyncpa [#allocation3], 0
    // Predicated region
    $region2: #{tpu_custom_call.1} parent=1 // pred_check
      _
    $region3: #{tpu_custom_call.1} parent=1 // pred_check_branch
      %10 = sbr.rel (0) target = $region5
    $region4: #{tpu_custom_call.1} parent=1 // pred_region
      _
    $region5: #{tpu_custom_call.1} parent=1 // pred_fallthru
      _
    // Predicated region
    $region6: #{tpu_custom_call.1} parent=1 // pred_check
      _
    $region7: #{tpu_custom_call.1} parent=1 // pred_check_branch
      %12 = sbr.rel (0) target = $region9
    $region8: #{tpu_custom_call.1} parent=1 // pred_region
      _
    $region9: #{tpu_custom_call.1} parent=1 // pred_fallthru
      _
    // Predicated region
    $region10: #{tpu_custom_call.1} parent=1 // pred_check
      _
    $region11: #{tpu_custom_call.1} parent=1 // pred_check_branch
      %14 = sbr.rel (0) target = $region13
    $region12: #{tpu_custom_call.1} parent=1 // pred_region
      _
    $region13: #{tpu_custom_call.1} parent=1 // pred_fallthru
      _
    %v15 = vld [vmem:[%s0] sm:$0xff]
    %v16 = vld [vmem:[%s0 + $0x8] sm:$0xff]
    %v17 = vld [vmem:[%s0 + $0x10] sm:$0xff]
    %v18 = vld [vmem:[%s0 + $0x18] sm:$0xff]
    %v19 = vld [vmem:[%s0 + $0x20] sm:$0xff]
    %v20 = vld [vmem:[%s0 + $0x28] sm:$0xff]
    %v21 = vld [vmem:[%s0 + $0x30] sm:$0xff]
    %v22 = vld [vmem:[%s0 + $0x38] sm:$0xff]
    %v23 = vld [vmem:[%s0 + $0x40] sm:$0xff]
    %v24 = vld [vmem:[%s0 + $0x48] sm:$0xff]
    %v25 = vld [vmem:[%s0 + $0x50] sm:$0xff]
    %v26 = vld [vmem:[%s0 + $0x58] sm:$0xff]
    %v27 = vld [vmem:[%s0 + $0x60] sm:$0xff]
    %v28 = vld [vmem:[%s0 + $0x68] sm:$0xff]
    %v29 = vld [vmem:[%s0 + $0x70] sm:$0xff]
    %v30 = vld [vmem:[%s0 + $0x78] sm:$0xff]
    %v31 = vld [vmem:[%s1] sm:$0x3]
    %33 = vset.pattern.permute.xlu0 0
    %34 = vperm.xlu0 %33, %v15
    %v35 = vpop.permute.xlu0 %34
    %38 = vset.pattern.permute.xlu0 0
    %39 = vperm.xlu0 %38, %v16
    %v40 = vpop.permute.xlu0 %39
    %43 = vset.pattern.permute.xlu0 0
    %44 = vperm.xlu0 %43, %v17
    %v45 = vpop.permute.xlu0 %44
    %48 = vset.pattern.permute.xlu0 0
    %49 = vperm.xlu0 %48, %v18
    %v50 = vpop.permute.xlu0 %49
    %53 = vset.pattern.permute.xlu0 0
    %54 = vperm.xlu0 %53, %v19
    %v55 = vpop.permute.xlu0 %54
    %58 = vset.pattern.permute.xlu0 0
    %59 = vperm.xlu0 %58, %v20
    %v60 = vpop.permute.xlu0 %59
    %63 = vset.pattern.permute.xlu0 0
    %64 = vperm.xlu0 %63, %v21
    %v65 = vpop.permute.xlu0 %64
    %68 = vset.pattern.permute.xlu0 0
    %69 = vperm.xlu0 %68, %v22
    %v70 = vpop.permute.xlu0 %69
    %73 = vset.pattern.permute.xlu0 0
    %74 = vperm.xlu0 %73, %v23
    %v75 = vpop.permute.xlu0 %74
    %78 = vset.pattern.permute.xlu0 0
    %79 = vperm.xlu0 %78, %v24
    %v80 = vpop.permute.xlu0 %79
    %83 = vset.pattern.permute.xlu0 0
    %84 = vperm.xlu0 %83, %v25
    %v85 = vpop.permute.xlu0 %84
    %88 = vset.pattern.permute.xlu0 0
    %89 = vperm.xlu0 %88, %v26
    %v90 = vpop.permute.xlu0 %89
    %93 = vset.pattern.permute.xlu0 0
    %94 = vperm.xlu0 %93, %v27
    %v95 = vpop.permute.xlu0 %94
    %98 = vset.pattern.permute.xlu0 0
    %99 = vperm.xlu0 %98, %v28
    %v100 = vpop.permute.xlu0 %99
    %103 = vset.pattern.permute.xlu0 0
    %104 = vperm.xlu0 %103, %v29
    %v105 = vpop.permute.xlu0 %104
    %108 = vset.pattern.permute.xlu0 0
    %109 = vperm.xlu0 %108, %v30
    %v110 = vpop.permute.xlu0 %109
    %v112 = vlaneseq
    %v113 = vshrl.u32 %v112, 7
    %v114 = vsub.s32 0, %v113
    %v115 = vrot.slane %v31, %v114
    %v116 = vmul.f32 %v35, %v115
    %v117 = vmul.f32 %v40, %v115
    %v118 = vmul.f32 %v45, %v115
    %v119 = vmul.f32 %v50, %v115
    %v120 = vmul.f32 %v55, %v115
    %v121 = vmul.f32 %v60, %v115
    %v122 = vmul.f32 %v65, %v115
    %v123 = vmul.f32 %v70, %v115
    %v124 = vmul.f32 %v75, %v115
    %v125 = vmul.f32 %v80, %v115
    %v126 = vmul.f32 %v85, %v115
    %v127 = vmul.f32 %v90, %v115
    %v128 = vmul.f32 %v95, %v115
    %v129 = vmul.f32 %v100, %v115
    %v130 = vmul.f32 %v105, %v115
    %v131 = vmul.f32 %v110, %v115
    %v132 = vadd.f32 %v116, 0.0
    %v133 = vadd.f32 %v117, 0.0
    %v134 = vadd.f32 %v118, 0.0
    %v135 = vadd.f32 %v119, 0.0
    %v136 = vadd.f32 %v120, 0.0
    %v137 = vadd.f32 %v121, 0.0
    %v138 = vadd.f32 %v122, 0.0
    %v139 = vadd.f32 %v123, 0.0
    %v140 = vadd.f32 %v124, 0.0
    %v141 = vadd.f32 %v125, 0.0
    %v142 = vadd.f32 %v126, 0.0
    %v143 = vadd.f32 %v127, 0.0
    %v144 = vadd.f32 %v128, 0.0
    %v145 = vadd.f32 %v129, 0.0
    %v146 = vadd.f32 %v130, 0.0
    %v147 = vadd.f32 %v131, 0.0
    %148 = vset.pattern.permute.xlu0 1
    %149 = vperm.xlu0 %148, %v15
    %v150 = vpop.permute.xlu0 %149
    %152 = vset.pattern.permute.xlu0 1
    %153 = vperm.xlu0 %152, %v16
    %v154 = vpop.permute.xlu0 %153
    %156 = vset.pattern.permute.xlu0 1
    %157 = vperm.xlu0 %156, %v17
    %v158 = vpop.permute.xlu0 %157
    %160 = vset.pattern.permute.xlu0 1
    %161 = vperm.xlu0 %160, %v18
    %v162 = vpop.permute.xlu0 %161
    %164 = vset.pattern.permute.xlu0 1
    %165 = vperm.xlu0 %164, %v19
    %v166 = vpop.permute.xlu0 %165
    %168 = vset.pattern.permute.xlu0 1
    %169 = vperm.xlu0 %168, %v20
    %v170 = vpop.permute.xlu0 %169
    %172 = vset.pattern.permute.xlu0 1
    %173 = vperm.xlu0 %172, %v21
    %v174 = vpop.permute.xlu0 %173
    %176 = vset.pattern.permute.xlu0 1
    %177 = vperm.xlu0 %176, %v22
    %v178 = vpop.permute.xlu0 %177
    %180 = vset.pattern.permute.xlu0 1
    %181 = vperm.xlu0 %180, %v23
    %v182 = vpop.permute.xlu0 %181
    %184 = vset.pattern.permute.xlu0 1
    %185 = vperm.xlu0 %184, %v24
    %v186 = vpop.permute.xlu0 %185
    %188 = vset.pattern.permute.xlu0 1
    %189 = vperm.xlu0 %188, %v25
    %v190 = vpop.permute.xlu0 %189
    %192 = vset.pattern.permute.xlu0 1
    %193 = vperm.xlu0 %192, %v26
    %v194 = vpop.permute.xlu0 %193
    %196 = vset.pattern.permute.xlu0 1
    %197 = vperm.xlu0 %196, %v27
    %v198 = vpop.permute.xlu0 %197
    %200 = vset.pattern.permute.xlu0 1
    %201 = vperm.xlu0 %200, %v28
    %v202 = vpop.permute.xlu0 %201
    %204 = vset.pattern.permute.xlu0 1
    %205 = vperm.xlu0 %204, %v29
    %v206 = vpop.permute.xlu0 %205
    %208 = vset.pattern.permute.xlu0 1
    %209 = vperm.xlu0 %208, %v30
    %v210 = vpop.permute.xlu0 %209
    %v212 = vlaneseq
    %v213 = vshrl.u32 %v212, 7
    %v214 = vsub.s32 1, %v213
    %v215 = vrot.slane %v31, %v214
    %v216 = vmul.f32 %v150, %v215
    %v217 = vmul.f32 %v154, %v215
    %v218 = vmul.f32 %v158, %v215
    %v219 = vmul.f32 %v162, %v215
    %v220 = vmul.f32 %v166, %v215
    %v221 = vmul.f32 %v170, %v215
    %v222 = vmul.f32 %v174, %v215
    %v223 = vmul.f32 %v178, %v215
    %v224 = vmul.f32 %v182, %v215
    %v225 = vmul.f32 %v186, %v215
    %v226 = vmul.f32 %v190, %v215
    %v227 = vmul.f32 %v194, %v215
    %v228 = vmul.f32 %v198, %v215
    %v229 = vmul.f32 %v202, %v215
    %v230 = vmul.f32 %v206, %v215
    %v231 = vmul.f32 %v210, %v215
    %v232 = vadd.f32 %v132, %v216
    %v233 = vadd.f32 %v133, %v217
    %v234 = vadd.f32 %v134, %v218
    %v235 = vadd.f32 %v135, %v219
    %v236 = vadd.f32 %v136, %v220
    %v237 = vadd.f32 %v137, %v221
    %v238 = vadd.f32 %v138, %v222
    %v239 = vadd.f32 %v139, %v223
    %v240 = vadd.f32 %v140, %v224
    %v241 = vadd.f32 %v141, %v225
    %v242 = vadd.f32 %v142, %v226
    %v243 = vadd.f32 %v143, %v227
    %v244 = vadd.f32 %v144, %v228
    %v245 = vadd.f32 %v145, %v229
    %v246 = vadd.f32 %v146, %v230
    %v247 = vadd.f32 %v147, %v231
    %v248 = vld [vmem:[%s2] sm:$0x1]
    %v250 = vlaneseq
    %v251 = vshrl.u32 %v250, 7
    %v252 = vsub.s32 0, %v251
    %v253 = vrot.slane %v248, %v252
    %v255 = vadd.f32 %v232, %v253
    %v256 = vadd.f32 %v233, %v253
    %v257 = vadd.f32 %v234, %v253
    %v258 = vadd.f32 %v235, %v253
    %v259 = vadd.f32 %v236, %v253
    %v260 = vadd.f32 %v237, %v253
    %v261 = vadd.f32 %v238, %v253
    %v262 = vadd.f32 %v239, %v253
    %v263 = vadd.f32 %v240, %v253
    %v264 = vadd.f32 %v241, %v253
    %v265 = vadd.f32 %v242, %v253
    %v266 = vadd.f32 %v243, %v253
    %v267 = vadd.f32 %v244, %v253
    %v268 = vadd.f32 %v245, %v253
    %v269 = vadd.f32 %v246, %v253
    %v270 = vadd.f32 %v247, %v253
    %v271 = vand.u32 2147483647, %v255
    %vm272 = vcmp.le.f32.partialorder %v271, 0.7853982
    %vm273 = vcmp.lt.s32.totalorder %v255, 0
    %v274 = vand.u32 %v255, 2139095040
    %v275 = vshrl.u32 %v274, 23
    %v276 = vsub.s32 %v275, 127
    %v277 = vand.u32 2147483647, %v255
    %v278 = vand.u32 %v277, 8388607
    %v279 = vor.u32 %v278, 8388608
    %v280 = vsub.s32 0, %v279
    %v281 = vadd.s32 %v276, 1
    %vm282 = vcmp.gt.s32.totalorder %v281, 0
    %v283 = vsel %vm282, %v281, 0
    %v284 = vshrl.u32 %v283, 5
    %v285 = vand.u32 %v283, 31
    %v286 = vsub.s32 32, %v285
    %v287 = vshrl.u32 683565275, %v286
    %v288 = vshll.u32 683565275, %v285
    %v289 = vshrl.u32 2475754826, %v286
    %v290 = vor.u32 %v288, %v289
    %v291 = vshll.u32 2475754826, %v285
    %v292 = vshrl.u32 2131351028, %v286
    %v293 = vor.u32 %v291, %v292
    %v294 = vshll.u32 2131351028, %v285
    %v295 = vshrl.u32 2102212464, %v286
    %v296 = vor.u32 %v294, %v295
    %v297 = vshll.u32 2102212464, %v285
    %v298 = vshrl.u32 920167782, %v286
    %v299 = vor.u32 %v297, %v298
    %v300 = vshll.u32 920167782, %v285
    %v301 = vshrl.u32 1326507024, %v286
    %v302 = vor.u32 %v300, %v301
    %vm303 = vcmp.lt.s32.totalorder %v284, 1
    %vm304 = vcmp.lt.s32.totalorder %v284, 2
    %vm305 = vcmp.lt.s32.totalorder %v284, 3
    %vm306 = vcmp.lt.s32.totalorder %v284, 4
    %v307 = vsel %vm303, %v287, %v290
    %v308 = vsel %vm306, %v296, 2102212464
    %v309 = vsel %vm305, %v293, %v308
    %v310 = vsel %vm304, %v307, %v309
    %v311 = vsel %vm303, %v290, %v293
    %v312 = vsel %vm306, %v299, 920167782
    %v313 = vsel %vm305, %v296, %v312
    %v314 = vsel %vm304, %v311, %v313
    %v315 = vsel %vm303, %v293, %v296
    %v316 = vsel %vm306, %v302, 1326507024
    %v317 = vsel %vm305, %v299, %v316
    %v318 = vsel %vm304, %v315, %v317
    %v319 = vshll.u32 %v279, 8
    %v320 = vmul.u32.u64.compose %v319, %v318
    %v321 = vextract.low.u32 %v320
    %v322 = vextract.high.u32 %v320
    %v323 = vmul.u32.u64.compose %v319, %v314
    %v324 = vextract.low.u32 %v323
    %v325 = vextract.high.u32 %v323
    %v326 = vmul.u32 %v319, %v310
    %v327 = vadd.s32 %v322, %v324
    %vm328 = vc.u32 %v322, %v324
    %v329 = vadd.s32 %v325, 1
    %v330 = vsel %vm328, %v329, %v325
    %v331 = vadd.s32 %v326, %v330
    %v332 = vadd.s32 %v331, 536870912
    %v333 = vshrl.u32 %v332, 30
    %v334 = vshll.u32 %v333, 30
    %v335 = vsub.s32 %v331, %v334
    %vm336 = vcmp.lt.s32.totalorder %v335, 0
    %v337 = vsub.s32 0, %v335
    %v338 = vsel %vm336, %v337, %v335
    %v339 = vclz %v338
    %v340 = vsub.s32 %v339, 2
    %vm341 = vcmp.gt.s32.totalorder 0, %v340
    %v342 = vsel %vm341, 0, %v340
    %v343 = vsub.s32 32, %v342
    %v344 = vshll.u32 %v335, %v342
    %v345 = vshrl.u32 %v327, %v343
    %v346 = vor.u32 %v344, %v345
    %v347 = vsub.s32 4294967266, %v342
    %v348 = vadd.s32 %v347, 127
    %v349 = vshll.u32 %v348, 23
    %v350 = vor.u32 4788187, %v349
    %v351 = vand.u32 2147483647, %v350
    %v353 = vcvt.s32.f32 %v346
    %v354 = vmul.f32 %v353, %v351
    %v355 = vxor.u32 %v354, 2147483648
    %v356 = vsel %vm273, %v355, %v354
    %v357 = vsub.s32 4, %v333
    %v358 = vsel %vm273, %v357, %v333
    %v359 = vsel %vm272, %v255, %v356
    %v360 = vsel %vm272, 0, %v358
    %v361 = vcosq.f32.pop %v359
    %v362 = vsinq.f32.pop %v359
    %vm363 = vweird.f32 %v255
    %v364 = vadd.s32 %v360, 3
    %v365 = vand.u32 %v364, 3
    %vm366 = vcmp.lt.s32.totalorder %v365, 2
    %vm367 = vcmp.eq.s32.totalorder %v365, 0
    %v368 = vxor.u32 %v362, 2147483648
    %v369 = vsel %vm367, %v361, %v368
    %vm370 = vcmp.eq.s32.totalorder %v365, 2
    %v371 = vxor.u32 %v361, 2147483648
    %v372 = vsel %vm370, %v371, %v362
    %v373 = vsel %vm366, %v369, %v372
    %v374 = vsel %vm363, nan, %v373
    %v375 = vand.u32 2147483647, %v256
    %vm376 = vcmp.le.f32.partialorder %v375, 0.7853982
    %vm377 = vcmp.lt.s32.totalorder %v256, 0
    %v378 = vand.u32 %v256, 2139095040
    %v379 = vshrl.u32 %v378, 23
    %v380 = vsub.s32 %v379, 127
    %v381 = vand.u32 2147483647, %v256
    %v382 = vand.u32 %v381, 8388607
    %v383 = vor.u32 %v382, 8388608
    %v384 = vsub.s32 0, %v383
    %v385 = vadd.s32 %v380, 1
    %vm386 = vcmp.gt.s32.totalorder %v385, 0
    %v387 = vsel %vm386, %v385, 0
    %v388 = vshrl.u32 %v387, 5
    %v389 = vand.u32 %v387, 31
    %v390 = vsub.s32 32, %v389
    %v391 = vshrl.u32 683565275, %v390
    %v392 = vshll.u32 683565275, %v389
    %v393 = vshrl.u32 2475754826, %v390
    %v394 = vor.u32 %v392, %v393
    %v395 = vshll.u32 2475754826, %v389
    %v396 = vshrl.u32 2131351028, %v390
    %v397 = vor.u32 %v395, %v396
    %v398 = vshll.u32 2131351028, %v389
    %v399 = vshrl.u32 2102212464, %v390
    %v400 = vor.u32 %v398, %v399
    %v401 = vshll.u32 2102212464, %v389
    %v402 = vshrl.u32 920167782, %v390
    %v403 = vor.u32 %v401, %v402
    %v404 = vshll.u32 920167782, %v389
    %v405 = vshrl.u32 1326507024, %v390
    %v406 = vor.u32 %v404, %v405
    %vm407 = vcmp.lt.s32.totalorder %v388, 1
    %vm408 = vcmp.lt.s32.totalorder %v388, 2
    %vm409 = vcmp.lt.s32.totalorder %v388, 3
    %vm410 = vcmp.lt.s32.totalorder %v388, 4
    %v411 = vsel %vm407, %v391, %v394
    %v412 = vsel %vm410, %v400, 2102212464
    %v413 = vsel %vm409, %v397, %v412
    %v414 = vsel %vm408, %v411, %v413
    %v415 = vsel %vm407, %v394, %v397
    %v416 = vsel %vm410, %v403, 920167782
    %v417 = vsel %vm409, %v400, %v416
    %v418 = vsel %vm408, %v415, %v417
    %v419 = vsel %vm407, %v397, %v400
    %v420 = vsel %vm410, %v406, 1326507024
    %v421 = vsel %vm409, %v403, %v420
    %v422 = vsel %vm408, %v419, %v421
    %v423 = vshll.u32 %v383, 8
    %v424 = vmul.u32.u64.compose %v423, %v422
    %v425 = vextract.low.u32 %v424
    %v426 = vextract.high.u32 %v424
    %v427 = vmul.u32.u64.compose %v423, %v418
    %v428 = vextract.low.u32 %v427
    %v429 = vextract.high.u32 %v427
    %v430 = vmul.u32 %v423, %v414
    %v431 = vadd.s32 %v426, %v428
    %vm432 = vc.u32 %v426, %v428
    %v433 = vadd.s32 %v429, 1
    %v434 = vsel %vm432, %v433, %v429
    %v435 = vadd.s32 %v430, %v434
    %v436 = vadd.s32 %v435, 536870912
    %v437 = vshrl.u32 %v436, 30
    %v438 = vshll.u32 %v437, 30
    %v439 = vsub.s32 %v435, %v438
    %vm440 = vcmp.lt.s32.totalorder %v439, 0
    %v441 = vsub.s32 0, %v439
    %v442 = vsel %vm440, %v441, %v439
    %v443 = vclz %v442
    %v444 = vsub.s32 %v443, 2
    %vm445 = vcmp.gt.s32.totalorder 0, %v444
    %v446 = vsel %vm445, 0, %v444
    %v447 = vsub.s32 32, %v446
    %v448 = vshll.u32 %v439, %v446
    %v449 = vshrl.u32 %v431, %v447
    %v450 = vor.u32 %v448, %v449
    %v451 = vsub.s32 4294967266, %v446
    %v452 = vadd.s32 %v451, 127
    %v453 = vshll.u32 %v452, 23
    %v454 = vor.u32 4788187, %v453
    %v455 = vand.u32 2147483647, %v454
    %v457 = vcvt.s32.f32 %v450
    %v458 = vmul.f32 %v457, %v455
    %v459 = vxor.u32 %v458, 2147483648
    %v460 = vsel %vm377, %v459, %v458
    %v461 = vsub.s32 4, %v437
    %v462 = vsel %vm377, %v461, %v437
    %v463 = vsel %vm376, %v256, %v460
    %v464 = vsel %vm376, 0, %v462
    %v465 = vcosq.f32.pop %v463
    %v466 = vsinq.f32.pop %v463
    %vm467 = vweird.f32 %v256
    %v468 = vadd.s32 %v464, 3
    %v469 = vand.u32 %v468, 3
    %vm470 = vcmp.lt.s32.totalorder %v469, 2
    %vm471 = vcmp.eq.s32.totalorder %v469, 0
    %v472 = vxor.u32 %v466, 2147483648
    %v473 = vsel %vm471, %v465, %v472
    %vm474 = vcmp.eq.s32.totalorder %v469, 2
    %v475 = vxor.u32 %v465, 2147483648
    %v476 = vsel %vm474, %v475, %v466
    %v477 = vsel %vm470, %v473, %v476
    %v478 = vsel %vm467, nan, %v477
    %v479 = vand.u32 2147483647, %v257
    %vm480 = vcmp.le.f32.partialorder %v479, 0.7853982
    %vm481 = vcmp.lt.s32.totalorder %v257, 0
    %v482 = vand.u32 %v257, 2139095040
    %v483 = vshrl.u32 %v482, 23
    %v484 = vsub.s32 %v483, 127
    %v485 = vand.u32 2147483647, %v257
    %v486 = vand.u32 %v485, 8388607
    %v487 = vor.u32 %v486, 8388608
    %v488 = vsub.s32 0, %v487
    %v489 = vadd.s32 %v484, 1
    %vm490 = vcmp.gt.s32.totalorder %v489, 0
    %v491 = vsel %vm490, %v489, 0
    %v492 = vshrl.u32 %v491, 5
    %v493 = vand.u32 %v491, 31
    %v494 = vsub.s32 32, %v493
    %v495 = vshrl.u32 683565275, %v494
    %v496 = vshll.u32 683565275, %v493
    %v497 = vshrl.u32 2475754826, %v494
    %v498 = vor.u32 %v496, %v497
    %v499 = vshll.u32 2475754826, %v493
    %v500 = vshrl.u32 2131351028, %v494
    %v501 = vor.u32 %v499, %v500
    %v502 = vshll.u32 2131351028, %v493
    %v503 = vshrl.u32 2102212464, %v494
    %v504 = vor.u32 %v502, %v503
    %v505 = vshll.u32 2102212464, %v493
    %v506 = vshrl.u32 920167782, %v494
    %v507 = vor.u32 %v505, %v506
    %v508 = vshll.u32 920167782, %v493
    %v509 = vshrl.u32 1326507024, %v494
    %v510 = vor.u32 %v508, %v509
    %vm511 = vcmp.lt.s32.totalorder %v492, 1
    %vm512 = vcmp.lt.s32.totalorder %v492, 2
    %vm513 = vcmp.lt.s32.totalorder %v492, 3
    %vm514 = vcmp.lt.s32.totalorder %v492, 4
    %v515 = vsel %vm511, %v495, %v498
    %v516 = vsel %vm514, %v504, 2102212464
    %v517 = vsel %vm513, %v501, %v516
    %v518 = vsel %vm512, %v515, %v517
    %v519 = vsel %vm511, %v498, %v501
    %v520 = vsel %vm514, %v507, 920167782
    %v521 = vsel %vm513, %v504, %v520
    %v522 = vsel %vm512, %v519, %v521
    %v523 = vsel %vm511, %v501, %v504
    %v524 = vsel %vm514, %v510, 1326507024
    %v525 = vsel %vm513, %v507, %v524
    %v526 = vsel %vm512, %v523, %v525
    %v527 = vshll.u32 %v487, 8
    %v528 = vmul.u32.u64.compose %v527, %v526
    %v529 = vextract.low.u32 %v528
    %v530 = vextract.high.u32 %v528
    %v531 = vmul.u32.u64.compose %v527, %v522
    %v532 = vextract.low.u32 %v531
    %v533 = vextract.high.u32 %v531
    %v534 = vmul.u32 %v527, %v518
    %v535 = vadd.s32 %v530, %v532
    %vm536 = vc.u32 %v530, %v532
    %v537 = vadd.s32 %v533, 1
    %v538 = vsel %vm536, %v537, %v533
    %v539 = vadd.s32 %v534, %v538
    %v540 = vadd.s32 %v539, 536870912
    %v541 = vshrl.u32 %v540, 30
    %v542 = vshll.u32 %v541, 30
    %v543 = vsub.s32 %v539, %v542
    %vm544 = vcmp.lt.s32.totalorder %v543, 0
    %v545 = vsub.s32 0, %v543
    %v546 = vsel %vm544, %v545, %v543
    %v547 = vclz %v546
    %v548 = vsub.s32 %v547, 2
    %vm549 = vcmp.gt.s32.totalorder 0, %v548
    %v550 = vsel %vm549, 0, %v548
    %v551 = vsub.s32 32, %v550
    %v552 = vshll.u32 %v543, %v550
    %v553 = vshrl.u32 %v535, %v551
    %v554 = vor.u32 %v552, %v553
    %v555 = vsub.s32 4294967266, %v550
    %v556 = vadd.s32 %v555, 127
    %v557 = vshll.u32 %v556, 23
    %v558 = vor.u32 4788187, %v557
    %v559 = vand.u32 2147483647, %v558
    %v561 = vcvt.s32.f32 %v554
    %v562 = vmul.f32 %v561, %v559
    %v563 = vxor.u32 %v562, 2147483648
    %v564 = vsel %vm481, %v563, %v562
    %v565 = vsub.s32 4, %v541
    %v566 = vsel %vm481, %v565, %v541
    %v567 = vsel %vm480, %v257, %v564
    %v568 = vsel %vm480, 0, %v566
    %v569 = vcosq.f32.pop %v567
    %v570 = vsinq.f32.pop %v567
    %vm571 = vweird.f32 %v257
    %v572 = vadd.s32 %v568, 3
    %v573 = vand.u32 %v572, 3
    %vm574 = vcmp.lt.s32.totalorder %v573, 2
    %vm575 = vcmp.eq.s32.totalorder %v573, 0
    %v576 = vxor.u32 %v570, 2147483648
    %v577 = vsel %vm575, %v569, %v576
    %vm578 = vcmp.eq.s32.totalorder %v573, 2
    %v579 = vxor.u32 %v569, 2147483648
    %v580 = vsel %vm578, %v579, %v570
    %v581 = vsel %vm574, %v577, %v580
    %v582 = vsel %vm571, nan, %v581
    %v583 = vand.u32 2147483647, %v258
    %vm584 = vcmp.le.f32.partialorder %v583, 0.7853982
    %vm585 = vcmp.lt.s32.totalorder %v258, 0
    %v586 = vand.u32 %v258, 2139095040
    %v587 = vshrl.u32 %v586, 23
    %v588 = vsub.s32 %v587, 127
    %v589 = vand.u32 2147483647, %v258
    %v590 = vand.u32 %v589, 8388607
    %v591 = vor.u32 %v590, 8388608
    %v592 = vsub.s32 0, %v591
    %v593 = vadd.s32 %v588, 1
    %vm594 = vcmp.gt.s32.totalorder %v593, 0
    %v595 = vsel %vm594, %v593, 0
    %v596 = vshrl.u32 %v595, 5
    %v597 = vand.u32 %v595, 31
    %v598 = vsub.s32 32, %v597
    %v599 = vshrl.u32 683565275, %v598
    %v600 = vshll.u32 683565275, %v597
    %v601 = vshrl.u32 2475754826, %v598
    %v602 = vor.u32 %v600, %v601
    %v603 = vshll.u32 2475754826, %v597
    %v604 = vshrl.u32 2131351028, %v598
    %v605 = vor.u32 %v603, %v604
    %v606 = vshll.u32 2131351028, %v597
    %v607 = vshrl.u32 2102212464, %v598
    %v608 = vor.u32 %v606, %v607
    %v609 = vshll.u32 2102212464, %v597
    %v610 = vshrl.u32 920167782, %v598
    %v611 = vor.u32 %v609, %v610
    %v612 = vshll.u32 920167782, %v597
    %v613 = vshrl.u32 1326507024, %v598
    %v614 = vor.u32 %v612, %v613
    %vm615 = vcmp.lt.s32.totalorder %v596, 1
    %vm616 = vcmp.lt.s32.totalorder %v596, 2
    %vm617 = vcmp.lt.s32.totalorder %v596, 3
    %vm618 = vcmp.lt.s32.totalorder %v596, 4
    %v619 = vsel %vm615, %v599, %v602
    %v620 = vsel %vm618, %v608, 2102212464
    %v621 = vsel %vm617, %v605, %v620
    %v622 = vsel %vm616, %v619, %v621
    %v623 = vsel %vm615, %v602, %v605
    %v624 = vsel %vm618, %v611, 920167782
    %v625 = vsel %vm617, %v608, %v624
    %v626 = vsel %vm616, %v623, %v625
    %v627 = vsel %vm615, %v605, %v608
    %v628 = vsel %vm618, %v614, 1326507024
    %v629 = vsel %vm617, %v611, %v628
    %v630 = vsel %vm616, %v627, %v629
    %v631 = vshll.u32 %v591, 8
    %v632 = vmul.u32.u64.compose %v631, %v630
    %v633 = vextract.low.u32 %v632
    %v634 = vextract.high.u32 %v632
    %v635 = vmul.u32.u64.compose %v631, %v626
    %v636 = vextract.low.u32 %v635
    %v637 = vextract.high.u32 %v635
    %v638 = vmul.u32 %v631, %v622
    %v639 = vadd.s32 %v634, %v636
    %vm640 = vc.u32 %v634, %v636
    %v641 = vadd.s32 %v637, 1
    %v642 = vsel %vm640, %v641, %v637
    %v643 = vadd.s32 %v638, %v642
    %v644 = vadd.s32 %v643, 536870912
    %v645 = vshrl.u32 %v644, 30
    %v646 = vshll.u32 %v645, 30
    %v647 = vsub.s32 %v643, %v646
    %vm648 = vcmp.lt.s32.totalorder %v647, 0
    %v649 = vsub.s32 0, %v647
    %v650 = vsel %vm648, %v649, %v647
    %v651 = vclz %v650
    %v652 = vsub.s32 %v651, 2
    %vm653 = vcmp.gt.s32.totalorder 0, %v652
    %v654 = vsel %vm653, 0, %v652
    %v655 = vsub.s32 32, %v654
    %v656 = vshll.u32 %v647, %v654
    %v657 = vshrl.u32 %v639, %v655
    %v658 = vor.u32 %v656, %v657
    %v659 = vsub.s32 4294967266, %v654
    %v660 = vadd.s32 %v659, 127
    %v661 = vshll.u32 %v660, 23
    %v662 = vor.u32 4788187, %v661
    %v663 = vand.u32 2147483647, %v662
    %v665 = vcvt.s32.f32 %v658
    %v666 = vmul.f32 %v665, %v663
    %v667 = vxor.u32 %v666, 2147483648
    %v668 = vsel %vm585, %v667, %v666
    %v669 = vsub.s32 4, %v645
    %v670 = vsel %vm585, %v669, %v645
    %v671 = vsel %vm584, %v258, %v668
    %v672 = vsel %vm584, 0, %v670
    %v673 = vcosq.f32.pop %v671
    %v674 = vsinq.f32.pop %v671
    %vm675 = vweird.f32 %v258
    %v676 = vadd.s32 %v672, 3
    %v677 = vand.u32 %v676, 3
    %vm678 = vcmp.lt.s32.totalorder %v677, 2
    %vm679 = vcmp.eq.s32.totalorder %v677, 0
    %v680 = vxor.u32 %v674, 2147483648
    %v681 = vsel %vm679, %v673, %v680
    %vm682 = vcmp.eq.s32.totalorder %v677, 2
    %v683 = vxor.u32 %v673, 2147483648
    %v684 = vsel %vm682, %v683, %v674
    %v685 = vsel %vm678, %v681, %v684
    %v686 = vsel %vm675, nan, %v685
    %v687 = vand.u32 2147483647, %v259
    %vm688 = vcmp.le.f32.partialorder %v687, 0.7853982
    %vm689 = vcmp.lt.s32.totalorder %v259, 0
    %v690 = vand.u32 %v259, 2139095040
    %v691 = vshrl.u32 %v690, 23
    %v692 = vsub.s32 %v691, 127
    %v693 = vand.u32 2147483647, %v259
    %v694 = vand.u32 %v693, 8388607
    %v695 = vor.u32 %v694, 8388608
    %v696 = vsub.s32 0, %v695
    %v697 = vadd.s32 %v692, 1
    %vm698 = vcmp.gt.s32.totalorder %v697, 0
    %v699 = vsel %vm698, %v697, 0
    %v700 = vshrl.u32 %v699, 5
    %v701 = vand.u32 %v699, 31
    %v702 = vsub.s32 32, %v701
    %v703 = vshrl.u32 683565275, %v702
    %v704 = vshll.u32 683565275, %v701
    %v705 = vshrl.u32 2475754826, %v702
    %v706 = vor.u32 %v704, %v705
    %v707 = vshll.u32 2475754826, %v701
    %v708 = vshrl.u32 2131351028, %v702
    %v709 = vor.u32 %v707, %v708
    %v710 = vshll.u32 2131351028, %v701
    %v711 = vshrl.u32 2102212464, %v702
    %v712 = vor.u32 %v710, %v711
    %v713 = vshll.u32 2102212464, %v701
    %v714 = vshrl.u32 920167782, %v702
    %v715 = vor.u32 %v713, %v714
    %v716 = vshll.u32 920167782, %v701
    %v717 = vshrl.u32 1326507024, %v702
    %v718 = vor.u32 %v716, %v717
    %vm719 = vcmp.lt.s32.totalorder %v700, 1
    %vm720 = vcmp.lt.s32.totalorder %v700, 2
    %vm721 = vcmp.lt.s32.totalorder %v700, 3
    %vm722 = vcmp.lt.s32.totalorder %v700, 4
    %v723 = vsel %vm719, %v703, %v706
    %v724 = vsel %vm722, %v712, 2102212464
    %v725 = vsel %vm721, %v709, %v724
    %v726 = vsel %vm720, %v723, %v725
    %v727 = vsel %vm719, %v706, %v709
    %v728 = vsel %vm722, %v715, 920167782
    %v729 = vsel %vm721, %v712, %v728
    %v730 = vsel %vm720, %v727, %v729
    %v731 = vsel %vm719, %v709, %v712
    %v732 = vsel %vm722, %v718, 1326507024
    %v733 = vsel %vm721, %v715, %v732
    %v734 = vsel %vm720, %v731, %v733
    %v735 = vshll.u32 %v695, 8
    %v736 = vmul.u32.u64.compose %v735, %v734
    %v737 = vextract.low.u32 %v736
    %v738 = vextract.high.u32 %v736
    %v739 = vmul.u32.u64.compose %v735, %v730
    %v740 = vextract.low.u32 %v739
    %v741 = vextract.high.u32 %v739
    %v742 = vmul.u32 %v735, %v726
    %v743 = vadd.s32 %v738, %v740
    %vm744 = vc.u32 %v738, %v740
    %v745 = vadd.s32 %v741, 1
    %v746 = vsel %vm744, %v745, %v741
    %v747 = vadd.s32 %v742, %v746
    %v748 = vadd.s32 %v747, 536870912
    %v749 = vshrl.u32 %v748, 30
    %v750 = vshll.u32 %v749, 30
    %v751 = vsub.s32 %v747, %v750
    %vm752 = vcmp.lt.s32.totalorder %v751, 0
    %v753 = vsub.s32 0, %v751
    %v754 = vsel %vm752, %v753, %v751
    %v755 = vclz %v754
    %v756 = vsub.s32 %v755, 2
    %vm757 = vcmp.gt.s32.totalorder 0, %v756
    %v758 = vsel %vm757, 0, %v756
    %v759 = vsub.s32 32, %v758
    %v760 = vshll.u32 %v751, %v758
    %v761 = vshrl.u32 %v743, %v759
    %v762 = vor.u32 %v760, %v761
    %v763 = vsub.s32 4294967266, %v758
    %v764 = vadd.s32 %v763, 127
    %v765 = vshll.u32 %v764, 23
    %v766 = vor.u32 4788187, %v765
    %v767 = vand.u32 2147483647, %v766
    %v769 = vcvt.s32.f32 %v762
    %v770 = vmul.f32 %v769, %v767
    %v771 = vxor.u32 %v770, 2147483648
    %v772 = vsel %vm689, %v771, %v770
    %v773 = vsub.s32 4, %v749
    %v774 = vsel %vm689, %v773, %v749
    %v775 = vsel %vm688, %v259, %v772
    %v776 = vsel %vm688, 0, %v774
    %v777 = vcosq.f32.pop %v775
    %v778 = vsinq.f32.pop %v775
    %vm779 = vweird.f32 %v259
    %v780 = vadd.s32 %v776, 3
    %v781 = vand.u32 %v780, 3
    %vm782 = vcmp.lt.s32.totalorder %v781, 2
    %vm783 = vcmp.eq.s32.totalorder %v781, 0
    %v784 = vxor.u32 %v778, 2147483648
    %v785 = vsel %vm783, %v777, %v784
    %vm786 = vcmp.eq.s32.totalorder %v781, 2
    %v787 = vxor.u32 %v777, 2147483648
    %v788 = vsel %vm786, %v787, %v778
    %v789 = vsel %vm782, %v785, %v788
    %v790 = vsel %vm779, nan, %v789
    %v791 = vand.u32 2147483647, %v260
    %vm792 = vcmp.le.f32.partialorder %v791, 0.7853982
    %vm793 = vcmp.lt.s32.totalorder %v260, 0
    %v794 = vand.u32 %v260, 2139095040
    %v795 = vshrl.u32 %v794, 23
    %v796 = vsub.s32 %v795, 127
    %v797 = vand.u32 2147483647, %v260
    %v798 = vand.u32 %v797, 8388607
    %v799 = vor.u32 %v798, 8388608
    %v800 = vsub.s32 0, %v799
    %v801 = vadd.s32 %v796, 1
    %vm802 = vcmp.gt.s32.totalorder %v801, 0
    %v803 = vsel %vm802, %v801, 0
    %v804 = vshrl.u32 %v803, 5
    %v805 = vand.u32 %v803, 31
    %v806 = vsub.s32 32, %v805
    %v807 = vshrl.u32 683565275, %v806
    %v808 = vshll.u32 683565275, %v805
    %v809 = vshrl.u32 2475754826, %v806
    %v810 = vor.u32 %v808, %v809
    %v811 = vshll.u32 2475754826, %v805
    %v812 = vshrl.u32 2131351028, %v806
    %v813 = vor.u32 %v811, %v812
    %v814 = vshll.u32 2131351028, %v805
    %v815 = vshrl.u32 2102212464, %v806
    %v816 = vor.u32 %v814, %v815
    %v817 = vshll.u32 2102212464, %v805
    %v818 = vshrl.u32 920167782, %v806
    %v819 = vor.u32 %v817, %v818
    %v820 = vshll.u32 920167782, %v805
    %v821 = vshrl.u32 1326507024, %v806
    %v822 = vor.u32 %v820, %v821
    %vm823 = vcmp.lt.s32.totalorder %v804, 1
    %vm824 = vcmp.lt.s32.totalorder %v804, 2
    %vm825 = vcmp.lt.s32.totalorder %v804, 3
    %vm826 = vcmp.lt.s32.totalorder %v804, 4
    %v827 = vsel %vm823, %v807, %v810
    %v828 = vsel %vm826, %v816, 2102212464
    %v829 = vsel %vm825, %v813, %v828
    %v830 = vsel %vm824, %v827, %v829
    %v831 = vsel %vm823, %v810, %v813
    %v832 = vsel %vm826, %v819, 920167782
    %v833 = vsel %vm825, %v816, %v832
    %v834 = vsel %vm824, %v831, %v833
    %v835 = vsel %vm823, %v813, %v816
    %v836 = vsel %vm826, %v822, 1326507024
    %v837 = vsel %vm825, %v819, %v836
    %v838 = vsel %vm824, %v835, %v837
    %v839 = vshll.u32 %v799, 8
    %v840 = vmul.u32.u64.compose %v839, %v838
    %v841 = vextract.low.u32 %v840
    %v842 = vextract.high.u32 %v840
    %v843 = vmul.u32.u64.compose %v839, %v834
    %v844 = vextract.low.u32 %v843
    %v845 = vextract.high.u32 %v843
    %v846 = vmul.u32 %v839, %v830
    %v847 = vadd.s32 %v842, %v844
    %vm848 = vc.u32 %v842, %v844
    %v849 = vadd.s32 %v845, 1
    %v850 = vsel %vm848, %v849, %v845
    %v851 = vadd.s32 %v846, %v850
    %v852 = vadd.s32 %v851, 536870912
    %v853 = vshrl.u32 %v852, 30
    %v854 = vshll.u32 %v853, 30
    %v855 = vsub.s32 %v851, %v854
    %vm856 = vcmp.lt.s32.totalorder %v855, 0
    %v857 = vsub.s32 0, %v855
    %v858 = vsel %vm856, %v857, %v855
    %v859 = vclz %v858
    %v860 = vsub.s32 %v859, 2
    %vm861 = vcmp.gt.s32.totalorder 0, %v860
    %v862 = vsel %vm861, 0, %v860
    %v863 = vsub.s32 32, %v862
    %v864 = vshll.u32 %v855, %v862
    %v865 = vshrl.u32 %v847, %v863
    %v866 = vor.u32 %v864, %v865
    %v867 = vsub.s32 4294967266, %v862
    %v868 = vadd.s32 %v867, 127
    %v869 = vshll.u32 %v868, 23
    %v870 = vor.u32 4788187, %v869
    %v871 = vand.u32 2147483647, %v870
    %v873 = vcvt.s32.f32 %v866
    %v874 = vmul.f32 %v873, %v871
    %v875 = vxor.u32 %v874, 2147483648
    %v876 = vsel %vm793, %v875, %v874
    %v877 = vsub.s32 4, %v853
    %v878 = vsel %vm793, %v877, %v853
    %v879 = vsel %vm792, %v260, %v876
    %v880 = vsel %vm792, 0, %v878
    %v881 = vcosq.f32.pop %v879
    %v882 = vsinq.f32.pop %v879
    %vm883 = vweird.f32 %v260
    %v884 = vadd.s32 %v880, 3
    %v885 = vand.u32 %v884, 3
    %vm886 = vcmp.lt.s32.totalorder %v885, 2
    %vm887 = vcmp.eq.s32.totalorder %v885, 0
    %v888 = vxor.u32 %v882, 2147483648
    %v889 = vsel %vm887, %v881, %v888
    %vm890 = vcmp.eq.s32.totalorder %v885, 2
    %v891 = vxor.u32 %v881, 2147483648
    %v892 = vsel %vm890, %v891, %v882
    %v893 = vsel %vm886, %v889, %v892
    %v894 = vsel %vm883, nan, %v893
    %v895 = vand.u32 2147483647, %v261
    %vm896 = vcmp.le.f32.partialorder %v895, 0.7853982
    %vm897 = vcmp.lt.s32.totalorder %v261, 0
    %v898 = vand.u32 %v261, 2139095040
    %v899 = vshrl.u32 %v898, 23
    %v900 = vsub.s32 %v899, 127
    %v901 = vand.u32 2147483647, %v261
    %v902 = vand.u32 %v901, 8388607
    %v903 = vor.u32 %v902, 8388608
    %v904 = vsub.s32 0, %v903
    %v905 = vadd.s32 %v900, 1
    %vm906 = vcmp.gt.s32.totalorder %v905, 0
    %v907 = vsel %vm906, %v905, 0
    %v908 = vshrl.u32 %v907, 5
    %v909 = vand.u32 %v907, 31
    %v910 = vsub.s32 32, %v909
    %v911 = vshrl.u32 683565275, %v910
    %v912 = vshll.u32 683565275, %v909
    %v913 = vshrl.u32 2475754826, %v910
    %v914 = vor.u32 %v912, %v913
    %v915 = vshll.u32 2475754826, %v909
    %v916 = vshrl.u32 2131351028, %v910
    %v917 = vor.u32 %v915, %v916
    %v918 = vshll.u32 2131351028, %v909
    %v919 = vshrl.u32 2102212464, %v910
    %v920 = vor.u32 %v918, %v919
    %v921 = vshll.u32 2102212464, %v909
    %v922 = vshrl.u32 920167782, %v910
    %v923 = vor.u32 %v921, %v922
    %v924 = vshll.u32 920167782, %v909
    %v925 = vshrl.u32 1326507024, %v910
    %v926 = vor.u32 %v924, %v925
    %vm927 = vcmp.lt.s32.totalorder %v908, 1
    %vm928 = vcmp.lt.s32.totalorder %v908, 2
    %vm929 = vcmp.lt.s32.totalorder %v908, 3
    %vm930 = vcmp.lt.s32.totalorder %v908, 4
    %v931 = vsel %vm927, %v911, %v914
    %v932 = vsel %vm930, %v920, 2102212464
    %v933 = vsel %vm929, %v917, %v932
    %v934 = vsel %vm928, %v931, %v933
    %v935 = vsel %vm927, %v914, %v917
    %v936 = vsel %vm930, %v923, 920167782
    %v937 = vsel %vm929, %v920, %v936
    %v938 = vsel %vm928, %v935, %v937
    %v939 = vsel %vm927, %v917, %v920
    %v940 = vsel %vm930, %v926, 1326507024
    %v941 = vsel %vm929, %v923, %v940
    %v942 = vsel %vm928, %v939, %v941
    %v943 = vshll.u32 %v903, 8
    %v944 = vmul.u32.u64.compose %v943, %v942
    %v945 = vextract.low.u32 %v944
    %v946 = vextract.high.u32 %v944
    %v947 = vmul.u32.u64.compose %v943, %v938
    %v948 = vextract.low.u32 %v947
    %v949 = vextract.high.u32 %v947
    %v950 = vmul.u32 %v943, %v934
    %v951 = vadd.s32 %v946, %v948
    %vm952 = vc.u32 %v946, %v948
    %v953 = vadd.s32 %v949, 1
    %v954 = vsel %vm952, %v953, %v949
    %v955 = vadd.s32 %v950, %v954
    %v956 = vadd.s32 %v955, 536870912
    %v957 = vshrl.u32 %v956, 30
    %v958 = vshll.u32 %v957, 30
    %v959 = vsub.s32 %v955, %v958
    %vm960 = vcmp.lt.s32.totalorder %v959, 0
    %v961 = vsub.s32 0, %v959
    %v962 = vsel %vm960, %v961, %v959
    %v963 = vclz %v962
    %v964 = vsub.s32 %v963, 2
    %vm965 = vcmp.gt.s32.totalorder 0, %v964
    %v966 = vsel %vm965, 0, %v964
    %v967 = vsub.s32 32, %v966
    %v968 = vshll.u32 %v959, %v966
    %v969 = vshrl.u32 %v951, %v967
    %v970 = vor.u32 %v968, %v969
    %v971 = vsub.s32 4294967266, %v966
    %v972 = vadd.s32 %v971, 127
    %v973 = vshll.u32 %v972, 23
    %v974 = vor.u32 4788187, %v973
    %v975 = vand.u32 2147483647, %v974
    %v977 = vcvt.s32.f32 %v970
    %v978 = vmul.f32 %v977, %v975
    %v979 = vxor.u32 %v978, 2147483648
    %v980 = vsel %vm897, %v979, %v978
    %v981 = vsub.s32 4, %v957
    %v982 = vsel %vm897, %v981, %v957
    %v983 = vsel %vm896, %v261, %v980
    %v984 = vsel %vm896, 0, %v982
    %v985 = vcosq.f32.pop %v983
    %v986 = vsinq.f32.pop %v983
    %vm987 = vweird.f32 %v261
    %v988 = vadd.s32 %v984, 3
    %v989 = vand.u32 %v988, 3
    %vm990 = vcmp.lt.s32.totalorder %v989, 2
    %vm991 = vcmp.eq.s32.totalorder %v989, 0
    %v992 = vxor.u32 %v986, 2147483648
    %v993 = vsel %vm991, %v985, %v992
    %vm994 = vcmp.eq.s32.totalorder %v989, 2
    %v995 = vxor.u32 %v985, 2147483648
    %v996 = vsel %vm994, %v995, %v986
    %v997 = vsel %vm990, %v993, %v996
    %v998 = vsel %vm987, nan, %v997
    %v999 = vand.u32 2147483647, %v262
    %vm1000 = vcmp.le.f32.partialorder %v999, 0.7853982
    %vm1001 = vcmp.lt.s32.totalorder %v262, 0
    %v1002 = vand.u32 %v262, 2139095040
    %v1003 = vshrl.u32 %v1002, 23
    %v1004 = vsub.s32 %v1003, 127
    %v1005 = vand.u32 2147483647, %v262
    %v1006 = vand.u32 %v1005, 8388607
    %v1007 = vor.u32 %v1006, 8388608
    %v1008 = vsub.s32 0, %v1007
    %v1009 = vadd.s32 %v1004, 1
    %vm1010 = vcmp.gt.s32.totalorder %v1009, 0
    %v1011 = vsel %vm1010, %v1009, 0
    %v1012 = vshrl.u32 %v1011, 5
    %v1013 = vand.u32 %v1011, 31
    %v1014 = vsub.s32 32, %v1013
    %v1015 = vshrl.u32 683565275, %v1014
    %v1016 = vshll.u32 683565275, %v1013
    %v1017 = vshrl.u32 2475754826, %v1014
    %v1018 = vor.u32 %v1016, %v1017
    %v1019 = vshll.u32 2475754826, %v1013
    %v1020 = vshrl.u32 2131351028, %v1014
    %v1021 = vor.u32 %v1019, %v1020
    %v1022 = vshll.u32 2131351028, %v1013
    %v1023 = vshrl.u32 2102212464, %v1014
    %v1024 = vor.u32 %v1022, %v1023
    %v1025 = vshll.u32 2102212464, %v1013
    %v1026 = vshrl.u32 920167782, %v1014
    %v1027 = vor.u32 %v1025, %v1026
    %v1028 = vshll.u32 920167782, %v1013
    %v1029 = vshrl.u32 1326507024, %v1014
    %v1030 = vor.u32 %v1028, %v1029
    %vm1031 = vcmp.lt.s32.totalorder %v1012, 1
    %vm1032 = vcmp.lt.s32.totalorder %v1012, 2
    %vm1033 = vcmp.lt.s32.totalorder %v1012, 3
    %vm1034 = vcmp.lt.s32.totalorder %v1012, 4
    %v1035 = vsel %vm1031, %v1015, %v1018
    %v1036 = vsel %vm1034, %v1024, 2102212464
    %v1037 = vsel %vm1033, %v1021, %v1036
    %v1038 = vsel %vm1032, %v1035, %v1037
    %v1039 = vsel %vm1031, %v1018, %v1021
    %v1040 = vsel %vm1034, %v1027, 920167782
    %v1041 = vsel %vm1033, %v1024, %v1040
    %v1042 = vsel %vm1032, %v1039, %v1041
    %v1043 = vsel %vm1031, %v1021, %v1024
    %v1044 = vsel %vm1034, %v1030, 1326507024
    %v1045 = vsel %vm1033, %v1027, %v1044
    %v1046 = vsel %vm1032, %v1043, %v1045
    %v1047 = vshll.u32 %v1007, 8
    %v1048 = vmul.u32.u64.compose %v1047, %v1046
    %v1049 = vextract.low.u32 %v1048
    %v1050 = vextract.high.u32 %v1048
    %v1051 = vmul.u32.u64.compose %v1047, %v1042
    %v1052 = vextract.low.u32 %v1051
    %v1053 = vextract.high.u32 %v1051
    %v1054 = vmul.u32 %v1047, %v1038
    %v1055 = vadd.s32 %v1050, %v1052
    %vm1056 = vc.u32 %v1050, %v1052
    %v1057 = vadd.s32 %v1053, 1
    %v1058 = vsel %vm1056, %v1057, %v1053
    %v1059 = vadd.s32 %v1054, %v1058
    %v1060 = vadd.s32 %v1059, 536870912
    %v1061 = vshrl.u32 %v1060, 30
    %v1062 = vshll.u32 %v1061, 30
    %v1063 = vsub.s32 %v1059, %v1062
    %vm1064 = vcmp.lt.s32.totalorder %v1063, 0
    %v1065 = vsub.s32 0, %v1063
    %v1066 = vsel %vm1064, %v1065, %v1063
    %v1067 = vclz %v1066
    %v1068 = vsub.s32 %v1067, 2
    %vm1069 = vcmp.gt.s32.totalorder 0, %v1068
    %v1070 = vsel %vm1069, 0, %v1068
    %v1071 = vsub.s32 32, %v1070
    %v1072 = vshll.u32 %v1063, %v1070
    %v1073 = vshrl.u32 %v1055, %v1071
    %v1074 = vor.u32 %v1072, %v1073
    %v1075 = vsub.s32 4294967266, %v1070
    %v1076 = vadd.s32 %v1075, 127
    %v1077 = vshll.u32 %v1076, 23
    %v1078 = vor.u32 4788187, %v1077
    %v1079 = vand.u32 2147483647, %v1078
    %v1081 = vcvt.s32.f32 %v1074
    %v1082 = vmul.f32 %v1081, %v1079
    %v1083 = vxor.u32 %v1082, 2147483648
    %v1084 = vsel %vm1001, %v1083, %v1082
    %v1085 = vsub.s32 4, %v1061
    %v1086 = vsel %vm1001, %v1085, %v1061
    %v1087 = vsel %vm1000, %v262, %v1084
    %v1088 = vsel %vm1000, 0, %v1086
    %v1089 = vcosq.f32.pop %v1087
    %v1090 = vsinq.f32.pop %v1087
    %vm1091 = vweird.f32 %v262
    %v1092 = vadd.s32 %v1088, 3
    %v1093 = vand.u32 %v1092, 3
    %vm1094 = vcmp.lt.s32.totalorder %v1093, 2
    %vm1095 = vcmp.eq.s32.totalorder %v1093, 0
    %v1096 = vxor.u32 %v1090, 2147483648
    %v1097 = vsel %vm1095, %v1089, %v1096
    %vm1098 = vcmp.eq.s32.totalorder %v1093, 2
    %v1099 = vxor.u32 %v1089, 2147483648
    %v1100 = vsel %vm1098, %v1099, %v1090
    %v1101 = vsel %vm1094, %v1097, %v1100
    %v1102 = vsel %vm1091, nan, %v1101
    %v1103 = vand.u32 2147483647, %v263
    %vm1104 = vcmp.le.f32.partialorder %v1103, 0.7853982
    %vm1105 = vcmp.lt.s32.totalorder %v263, 0
    %v1106 = vand.u32 %v263, 2139095040
    %v1107 = vshrl.u32 %v1106, 23
    %v1108 = vsub.s32 %v1107, 127
    %v1109 = vand.u32 2147483647, %v263
    %v1110 = vand.u32 %v1109, 8388607
    %v1111 = vor.u32 %v1110, 8388608
    %v1112 = vsub.s32 0, %v1111
    %v1113 = vadd.s32 %v1108, 1
    %vm1114 = vcmp.gt.s32.totalorder %v1113, 0
    %v1115 = vsel %vm1114, %v1113, 0
    %v1116 = vshrl.u32 %v1115, 5
    %v1117 = vand.u32 %v1115, 31
    %v1118 = vsub.s32 32, %v1117
    %v1119 = vshrl.u32 683565275, %v1118
    %v1120 = vshll.u32 683565275, %v1117
    %v1121 = vshrl.u32 2475754826, %v1118
    %v1122 = vor.u32 %v1120, %v1121
    %v1123 = vshll.u32 2475754826, %v1117
    %v1124 = vshrl.u32 2131351028, %v1118
    %v1125 = vor.u32 %v1123, %v1124
    %v1126 = vshll.u32 2131351028, %v1117
    %v1127 = vshrl.u32 2102212464, %v1118
    %v1128 = vor.u32 %v1126, %v1127
    %v1129 = vshll.u32 2102212464, %v1117
    %v1130 = vshrl.u32 920167782, %v1118
    %v1131 = vor.u32 %v1129, %v1130
    %v1132 = vshll.u32 920167782, %v1117
    %v1133 = vshrl.u32 1326507024, %v1118
    %v1134 = vor.u32 %v1132, %v1133
    %vm1135 = vcmp.lt.s32.totalorder %v1116, 1
    %vm1136 = vcmp.lt.s32.totalorder %v1116, 2
    %vm1137 = vcmp.lt.s32.totalorder %v1116, 3
    %vm1138 = vcmp.lt.s32.totalorder %v1116, 4
    %v1139 = vsel %vm1135, %v1119, %v1122
    %v1140 = vsel %vm1138, %v1128, 2102212464
    %v1141 = vsel %vm1137, %v1125, %v1140
    %v1142 = vsel %vm1136, %v1139, %v1141
    %v1143 = vsel %vm1135, %v1122, %v1125
    %v1144 = vsel %vm1138, %v1131, 920167782
    %v1145 = vsel %vm1137, %v1128, %v1144
    %v1146 = vsel %vm1136, %v1143, %v1145
    %v1147 = vsel %vm1135, %v1125, %v1128
    %v1148 = vsel %vm1138, %v1134, 1326507024
    %v1149 = vsel %vm1137, %v1131, %v1148
    %v1150 = vsel %vm1136, %v1147, %v1149
    %v1151 = vshll.u32 %v1111, 8
    %v1152 = vmul.u32.u64.compose %v1151, %v1150
    %v1153 = vextract.low.u32 %v1152
    %v1154 = vextract.high.u32 %v1152
    %v1155 = vmul.u32.u64.compose %v1151, %v1146
    %v1156 = vextract.low.u32 %v1155
    %v1157 = vextract.high.u32 %v1155
    %v1158 = vmul.u32 %v1151, %v1142
    %v1159 = vadd.s32 %v1154, %v1156
    %vm1160 = vc.u32 %v1154, %v1156
    %v1161 = vadd.s32 %v1157, 1
    %v1162 = vsel %vm1160, %v1161, %v1157
    %v1163 = vadd.s32 %v1158, %v1162
    %v1164 = vadd.s32 %v1163, 536870912
    %v1165 = vshrl.u32 %v1164, 30
    %v1166 = vshll.u32 %v1165, 30
    %v1167 = vsub.s32 %v1163, %v1166
    %vm1168 = vcmp.lt.s32.totalorder %v1167, 0
    %v1169 = vsub.s32 0, %v1167
    %v1170 = vsel %vm1168, %v1169, %v1167
    %v1171 = vclz %v1170
    %v1172 = vsub.s32 %v1171, 2
    %vm1173 = vcmp.gt.s32.totalorder 0, %v1172
    %v1174 = vsel %vm1173, 0, %v1172
    %v1175 = vsub.s32 32, %v1174
    %v1176 = vshll.u32 %v1167, %v1174
    %v1177 = vshrl.u32 %v1159, %v1175
    %v1178 = vor.u32 %v1176, %v1177
    %v1179 = vsub.s32 4294967266, %v1174
    %v1180 = vadd.s32 %v1179, 127
    %v1181 = vshll.u32 %v1180, 23
    %v1182 = vor.u32 4788187, %v1181
    %v1183 = vand.u32 2147483647, %v1182
    %v1185 = vcvt.s32.f32 %v1178
    %v1186 = vmul.f32 %v1185, %v1183
    %v1187 = vxor.u32 %v1186, 2147483648
    %v1188 = vsel %vm1105, %v1187, %v1186
    %v1189 = vsub.s32 4, %v1165
    %v1190 = vsel %vm1105, %v1189, %v1165
    %v1191 = vsel %vm1104, %v263, %v1188
    %v1192 = vsel %vm1104, 0, %v1190
    %v1193 = vcosq.f32.pop %v1191
    %v1194 = vsinq.f32.pop %v1191
    %vm1195 = vweird.f32 %v263
    %v1196 = vadd.s32 %v1192, 3
    %v1197 = vand.u32 %v1196, 3
    %vm1198 = vcmp.lt.s32.totalorder %v1197, 2
    %vm1199 = vcmp.eq.s32.totalorder %v1197, 0
    %v1200 = vxor.u32 %v1194, 2147483648
    %v1201 = vsel %vm1199, %v1193, %v1200
    %vm1202 = vcmp.eq.s32.totalorder %v1197, 2
    %v1203 = vxor.u32 %v1193, 2147483648
    %v1204 = vsel %vm1202, %v1203, %v1194
    %v1205 = vsel %vm1198, %v1201, %v1204
    %v1206 = vsel %vm1195, nan, %v1205
    %v1207 = vand.u32 2147483647, %v264
    %vm1208 = vcmp.le.f32.partialorder %v1207, 0.7853982
    %vm1209 = vcmp.lt.s32.totalorder %v264, 0
    %v1210 = vand.u32 %v264, 2139095040
    %v1211 = vshrl.u32 %v1210, 23
    %v1212 = vsub.s32 %v1211, 127
    %v1213 = vand.u32 2147483647, %v264
    %v1214 = vand.u32 %v1213, 8388607
    %v1215 = vor.u32 %v1214, 8388608
    %v1216 = vsub.s32 0, %v1215
    %v1217 = vadd.s32 %v1212, 1
    %vm1218 = vcmp.gt.s32.totalorder %v1217, 0
    %v1219 = vsel %vm1218, %v1217, 0
    %v1220 = vshrl.u32 %v1219, 5
    %v1221 = vand.u32 %v1219, 31
    %v1222 = vsub.s32 32, %v1221
    %v1223 = vshrl.u32 683565275, %v1222
    %v1224 = vshll.u32 683565275, %v1221
    %v1225 = vshrl.u32 2475754826, %v1222
    %v1226 = vor.u32 %v1224, %v1225
    %v1227 = vshll.u32 2475754826, %v1221
    %v1228 = vshrl.u32 2131351028, %v1222
    %v1229 = vor.u32 %v1227, %v1228
    %v1230 = vshll.u32 2131351028, %v1221
    %v1231 = vshrl.u32 2102212464, %v1222
    %v1232 = vor.u32 %v1230, %v1231
    %v1233 = vshll.u32 2102212464, %v1221
    %v1234 = vshrl.u32 920167782, %v1222
    %v1235 = vor.u32 %v1233, %v1234
    %v1236 = vshll.u32 920167782, %v1221
    %v1237 = vshrl.u32 1326507024, %v1222
    %v1238 = vor.u32 %v1236, %v1237
    %vm1239 = vcmp.lt.s32.totalorder %v1220, 1
    %vm1240 = vcmp.lt.s32.totalorder %v1220, 2
    %vm1241 = vcmp.lt.s32.totalorder %v1220, 3
    %vm1242 = vcmp.lt.s32.totalorder %v1220, 4
    %v1243 = vsel %vm1239, %v1223, %v1226
    %v1244 = vsel %vm1242, %v1232, 2102212464
    %v1245 = vsel %vm1241, %v1229, %v1244
    %v1246 = vsel %vm1240, %v1243, %v1245
    %v1247 = vsel %vm1239, %v1226, %v1229
    %v1248 = vsel %vm1242, %v1235, 920167782
    %v1249 = vsel %vm1241, %v1232, %v1248
    %v1250 = vsel %vm1240, %v1247, %v1249
    %v1251 = vsel %vm1239, %v1229, %v1232
    %v1252 = vsel %vm1242, %v1238, 1326507024
    %v1253 = vsel %vm1241, %v1235, %v1252
    %v1254 = vsel %vm1240, %v1251, %v1253
    %v1255 = vshll.u32 %v1215, 8
    %v1256 = vmul.u32.u64.compose %v1255, %v1254
    %v1257 = vextract.low.u32 %v1256
    %v1258 = vextract.high.u32 %v1256
    %v1259 = vmul.u32.u64.compose %v1255, %v1250
    %v1260 = vextract.low.u32 %v1259
    %v1261 = vextract.high.u32 %v1259
    %v1262 = vmul.u32 %v1255, %v1246
    %v1263 = vadd.s32 %v1258, %v1260
    %vm1264 = vc.u32 %v1258, %v1260
    %v1265 = vadd.s32 %v1261, 1
    %v1266 = vsel %vm1264, %v1265, %v1261
    %v1267 = vadd.s32 %v1262, %v1266
    %v1268 = vadd.s32 %v1267, 536870912
    %v1269 = vshrl.u32 %v1268, 30
    %v1270 = vshll.u32 %v1269, 30
    %v1271 = vsub.s32 %v1267, %v1270
    %vm1272 = vcmp.lt.s32.totalorder %v1271, 0
    %v1273 = vsub.s32 0, %v1271
    %v1274 = vsel %vm1272, %v1273, %v1271
    %v1275 = vclz %v1274
    %v1276 = vsub.s32 %v1275, 2
    %vm1277 = vcmp.gt.s32.totalorder 0, %v1276
    %v1278 = vsel %vm1277, 0, %v1276
    %v1279 = vsub.s32 32, %v1278
    %v1280 = vshll.u32 %v1271, %v1278
    %v1281 = vshrl.u32 %v1263, %v1279
    %v1282 = vor.u32 %v1280, %v1281
    %v1283 = vsub.s32 4294967266, %v1278
    %v1284 = vadd.s32 %v1283, 127
    %v1285 = vshll.u32 %v1284, 23
    %v1286 = vor.u32 4788187, %v1285
    %v1287 = vand.u32 2147483647, %v1286
    %v1289 = vcvt.s32.f32 %v1282
    %v1290 = vmul.f32 %v1289, %v1287
    %v1291 = vxor.u32 %v1290, 2147483648
    %v1292 = vsel %vm1209, %v1291, %v1290
    %v1293 = vsub.s32 4, %v1269
    %v1294 = vsel %vm1209, %v1293, %v1269
    %v1295 = vsel %vm1208, %v264, %v1292
    %v1296 = vsel %vm1208, 0, %v1294
    %v1297 = vcosq.f32.pop %v1295
    %v1298 = vsinq.f32.pop %v1295
    %vm1299 = vweird.f32 %v264
    %v1300 = vadd.s32 %v1296, 3
    %v1301 = vand.u32 %v1300, 3
    %vm1302 = vcmp.lt.s32.totalorder %v1301, 2
    %vm1303 = vcmp.eq.s32.totalorder %v1301, 0
    %v1304 = vxor.u32 %v1298, 2147483648
    %v1305 = vsel %vm1303, %v1297, %v1304
    %vm1306 = vcmp.eq.s32.totalorder %v1301, 2
    %v1307 = vxor.u32 %v1297, 2147483648
    %v1308 = vsel %vm1306, %v1307, %v1298
    %v1309 = vsel %vm1302, %v1305, %v1308
    %v1310 = vsel %vm1299, nan, %v1309
    %v1311 = vand.u32 2147483647, %v265
    %vm1312 = vcmp.le.f32.partialorder %v1311, 0.7853982
    %vm1313 = vcmp.lt.s32.totalorder %v265, 0
    %v1314 = vand.u32 %v265, 2139095040
    %v1315 = vshrl.u32 %v1314, 23
    %v1316 = vsub.s32 %v1315, 127
    %v1317 = vand.u32 2147483647, %v265
    %v1318 = vand.u32 %v1317, 8388607
    %v1319 = vor.u32 %v1318, 8388608
    %v1320 = vsub.s32 0, %v1319
    %v1321 = vadd.s32 %v1316, 1
    %vm1322 = vcmp.gt.s32.totalorder %v1321, 0
    %v1323 = vsel %vm1322, %v1321, 0
    %v1324 = vshrl.u32 %v1323, 5
    %v1325 = vand.u32 %v1323, 31
    %v1326 = vsub.s32 32, %v1325
    %v1327 = vshrl.u32 683565275, %v1326
    %v1328 = vshll.u32 683565275, %v1325
    %v1329 = vshrl.u32 2475754826, %v1326
    %v1330 = vor.u32 %v1328, %v1329
    %v1331 = vshll.u32 2475754826, %v1325
    %v1332 = vshrl.u32 2131351028, %v1326
    %v1333 = vor.u32 %v1331, %v1332
    %v1334 = vshll.u32 2131351028, %v1325
    %v1335 = vshrl.u32 2102212464, %v1326
    %v1336 = vor.u32 %v1334, %v1335
    %v1337 = vshll.u32 2102212464, %v1325
    %v1338 = vshrl.u32 920167782, %v1326
    %v1339 = vor.u32 %v1337, %v1338
    %v1340 = vshll.u32 920167782, %v1325
    %v1341 = vshrl.u32 1326507024, %v1326
    %v1342 = vor.u32 %v1340, %v1341
    %vm1343 = vcmp.lt.s32.totalorder %v1324, 1
    %vm1344 = vcmp.lt.s32.totalorder %v1324, 2
    %vm1345 = vcmp.lt.s32.totalorder %v1324, 3
    %vm1346 = vcmp.lt.s32.totalorder %v1324, 4
    %v1347 = vsel %vm1343, %v1327, %v1330
    %v1348 = vsel %vm1346, %v1336, 2102212464
    %v1349 = vsel %vm1345, %v1333, %v1348
    %v1350 = vsel %vm1344, %v1347, %v1349
    %v1351 = vsel %vm1343, %v1330, %v1333
    %v1352 = vsel %vm1346, %v1339, 920167782
    %v1353 = vsel %vm1345, %v1336, %v1352
    %v1354 = vsel %vm1344, %v1351, %v1353
    %v1355 = vsel %vm1343, %v1333, %v1336
    %v1356 = vsel %vm1346, %v1342, 1326507024
    %v1357 = vsel %vm1345, %v1339, %v1356
    %v1358 = vsel %vm1344, %v1355, %v1357
    %v1359 = vshll.u32 %v1319, 8
    %v1360 = vmul.u32.u64.compose %v1359, %v1358
    %v1361 = vextract.low.u32 %v1360
    %v1362 = vextract.high.u32 %v1360
    %v1363 = vmul.u32.u64.compose %v1359, %v1354
    %v1364 = vextract.low.u32 %v1363
    %v1365 = vextract.high.u32 %v1363
    %v1366 = vmul.u32 %v1359, %v1350
    %v1367 = vadd.s32 %v1362, %v1364
    %vm1368 = vc.u32 %v1362, %v1364
    %v1369 = vadd.s32 %v1365, 1
    %v1370 = vsel %vm1368, %v1369, %v1365
    %v1371 = vadd.s32 %v1366, %v1370
    %v1372 = vadd.s32 %v1371, 536870912
    %v1373 = vshrl.u32 %v1372, 30
    %v1374 = vshll.u32 %v1373, 30
    %v1375 = vsub.s32 %v1371, %v1374
    %vm1376 = vcmp.lt.s32.totalorder %v1375, 0
    %v1377 = vsub.s32 0, %v1375
    %v1378 = vsel %vm1376, %v1377, %v1375
    %v1379 = vclz %v1378
    %v1380 = vsub.s32 %v1379, 2
    %vm1381 = vcmp.gt.s32.totalorder 0, %v1380
    %v1382 = vsel %vm1381, 0, %v1380
    %v1383 = vsub.s32 32, %v1382
    %v1384 = vshll.u32 %v1375, %v1382
    %v1385 = vshrl.u32 %v1367, %v1383
    %v1386 = vor.u32 %v1384, %v1385
    %v1387 = vsub.s32 4294967266, %v1382
    %v1388 = vadd.s32 %v1387, 127
    %v1389 = vshll.u32 %v1388, 23
    %v1390 = vor.u32 4788187, %v1389
    %v1391 = vand.u32 2147483647, %v1390
    %v1393 = vcvt.s32.f32 %v1386
    %v1394 = vmul.f32 %v1393, %v1391
    %v1395 = vxor.u32 %v1394, 2147483648
    %v1396 = vsel %vm1313, %v1395, %v1394
    %v1397 = vsub.s32 4, %v1373
    %v1398 = vsel %vm1313, %v1397, %v1373
    %v1399 = vsel %vm1312, %v265, %v1396
    %v1400 = vsel %vm1312, 0, %v1398
    %v1401 = vcosq.f32.pop %v1399
    %v1402 = vsinq.f32.pop %v1399
    %vm1403 = vweird.f32 %v265
    %v1404 = vadd.s32 %v1400, 3
    %v1405 = vand.u32 %v1404, 3
    %vm1406 = vcmp.lt.s32.totalorder %v1405, 2
    %vm1407 = vcmp.eq.s32.totalorder %v1405, 0
    %v1408 = vxor.u32 %v1402, 2147483648
    %v1409 = vsel %vm1407, %v1401, %v1408
    %vm1410 = vcmp.eq.s32.totalorder %v1405, 2
    %v1411 = vxor.u32 %v1401, 2147483648
    %v1412 = vsel %vm1410, %v1411, %v1402
    %v1413 = vsel %vm1406, %v1409, %v1412
    %v1414 = vsel %vm1403, nan, %v1413
    %v1415 = vand.u32 2147483647, %v266
    %vm1416 = vcmp.le.f32.partialorder %v1415, 0.7853982
    %vm1417 = vcmp.lt.s32.totalorder %v266, 0
    %v1418 = vand.u32 %v266, 2139095040
    %v1419 = vshrl.u32 %v1418, 23
    %v1420 = vsub.s32 %v1419, 127
    %v1421 = vand.u32 2147483647, %v266
    %v1422 = vand.u32 %v1421, 8388607
    %v1423 = vor.u32 %v1422, 8388608
    %v1424 = vsub.s32 0, %v1423
    %v1425 = vadd.s32 %v1420, 1
    %vm1426 = vcmp.gt.s32.totalorder %v1425, 0
    %v1427 = vsel %vm1426, %v1425, 0
    %v1428 = vshrl.u32 %v1427, 5
    %v1429 = vand.u32 %v1427, 31
    %v1430 = vsub.s32 32, %v1429
    %v1431 = vshrl.u32 683565275, %v1430
    %v1432 = vshll.u32 683565275, %v1429
    %v1433 = vshrl.u32 2475754826, %v1430
    %v1434 = vor.u32 %v1432, %v1433
    %v1435 = vshll.u32 2475754826, %v1429
    %v1436 = vshrl.u32 2131351028, %v1430
    %v1437 = vor.u32 %v1435, %v1436
    %v1438 = vshll.u32 2131351028, %v1429
    %v1439 = vshrl.u32 2102212464, %v1430
    %v1440 = vor.u32 %v1438, %v1439
    %v1441 = vshll.u32 2102212464, %v1429
    %v1442 = vshrl.u32 920167782, %v1430
    %v1443 = vor.u32 %v1441, %v1442
    %v1444 = vshll.u32 920167782, %v1429
    %v1445 = vshrl.u32 1326507024, %v1430
    %v1446 = vor.u32 %v1444, %v1445
    %vm1447 = vcmp.lt.s32.totalorder %v1428, 1
    %vm1448 = vcmp.lt.s32.totalorder %v1428, 2
    %vm1449 = vcmp.lt.s32.totalorder %v1428, 3
    %vm1450 = vcmp.lt.s32.totalorder %v1428, 4
    %v1451 = vsel %vm1447, %v1431, %v1434
    %v1452 = vsel %vm1450, %v1440, 2102212464
    %v1453 = vsel %vm1449, %v1437, %v1452
    %v1454 = vsel %vm1448, %v1451, %v1453
    %v1455 = vsel %vm1447, %v1434, %v1437
    %v1456 = vsel %vm1450, %v1443, 920167782
    %v1457 = vsel %vm1449, %v1440, %v1456
    %v1458 = vsel %vm1448, %v1455, %v1457
    %v1459 = vsel %vm1447, %v1437, %v1440
    %v1460 = vsel %vm1450, %v1446, 1326507024
    %v1461 = vsel %vm1449, %v1443, %v1460
    %v1462 = vsel %vm1448, %v1459, %v1461
    %v1463 = vshll.u32 %v1423, 8
    %v1464 = vmul.u32.u64.compose %v1463, %v1462
    %v1465 = vextract.low.u32 %v1464
    %v1466 = vextract.high.u32 %v1464
    %v1467 = vmul.u32.u64.compose %v1463, %v1458
    %v1468 = vextract.low.u32 %v1467
    %v1469 = vextract.high.u32 %v1467
    %v1470 = vmul.u32 %v1463, %v1454
    %v1471 = vadd.s32 %v1466, %v1468
    %vm1472 = vc.u32 %v1466, %v1468
    %v1473 = vadd.s32 %v1469, 1
    %v1474 = vsel %vm1472, %v1473, %v1469
    %v1475 = vadd.s32 %v1470, %v1474
    %v1476 = vadd.s32 %v1475, 536870912
    %v1477 = vshrl.u32 %v1476, 30
    %v1478 = vshll.u32 %v1477, 30
    %v1479 = vsub.s32 %v1475, %v1478
    %vm1480 = vcmp.lt.s32.totalorder %v1479, 0
    %v1481 = vsub.s32 0, %v1479
    %v1482 = vsel %vm1480, %v1481, %v1479
    %v1483 = vclz %v1482
    %v1484 = vsub.s32 %v1483, 2
    %vm1485 = vcmp.gt.s32.totalorder 0, %v1484
    %v1486 = vsel %vm1485, 0, %v1484
    %v1487 = vsub.s32 32, %v1486
    %v1488 = vshll.u32 %v1479, %v1486
    %v1489 = vshrl.u32 %v1471, %v1487
    %v1490 = vor.u32 %v1488, %v1489
    %v1491 = vsub.s32 4294967266, %v1486
    %v1492 = vadd.s32 %v1491, 127
    %v1493 = vshll.u32 %v1492, 23
    %v1494 = vor.u32 4788187, %v1493
    %v1495 = vand.u32 2147483647, %v1494
    %v1497 = vcvt.s32.f32 %v1490
    %v1498 = vmul.f32 %v1497, %v1495
    %v1499 = vxor.u32 %v1498, 2147483648
    %v1500 = vsel %vm1417, %v1499, %v1498
    %v1501 = vsub.s32 4, %v1477
    %v1502 = vsel %vm1417, %v1501, %v1477
    %v1503 = vsel %vm1416, %v266, %v1500
    %v1504 = vsel %vm1416, 0, %v1502
    %v1505 = vcosq.f32.pop %v1503
    %v1506 = vsinq.f32.pop %v1503
    %vm1507 = vweird.f32 %v266
    %v1508 = vadd.s32 %v1504, 3
    %v1509 = vand.u32 %v1508, 3
    %vm1510 = vcmp.lt.s32.totalorder %v1509, 2
    %vm1511 = vcmp.eq.s32.totalorder %v1509, 0
    %v1512 = vxor.u32 %v1506, 2147483648
    %v1513 = vsel %vm1511, %v1505, %v1512
    %vm1514 = vcmp.eq.s32.totalorder %v1509, 2
    %v1515 = vxor.u32 %v1505, 2147483648
    %v1516 = vsel %vm1514, %v1515, %v1506
    %v1517 = vsel %vm1510, %v1513, %v1516
    %v1518 = vsel %vm1507, nan, %v1517
    %v1519 = vand.u32 2147483647, %v267
    %vm1520 = vcmp.le.f32.partialorder %v1519, 0.7853982
    %vm1521 = vcmp.lt.s32.totalorder %v267, 0
    %v1522 = vand.u32 %v267, 2139095040
    %v1523 = vshrl.u32 %v1522, 23
    %v1524 = vsub.s32 %v1523, 127
    %v1525 = vand.u32 2147483647, %v267
    %v1526 = vand.u32 %v1525, 8388607
    %v1527 = vor.u32 %v1526, 8388608
    %v1528 = vsub.s32 0, %v1527
    %v1529 = vadd.s32 %v1524, 1
    %vm1530 = vcmp.gt.s32.totalorder %v1529, 0
    %v1531 = vsel %vm1530, %v1529, 0
    %v1532 = vshrl.u32 %v1531, 5
    %v1533 = vand.u32 %v1531, 31
    %v1534 = vsub.s32 32, %v1533
    %v1535 = vshrl.u32 683565275, %v1534
    %v1536 = vshll.u32 683565275, %v1533
    %v1537 = vshrl.u32 2475754826, %v1534
    %v1538 = vor.u32 %v1536, %v1537
    %v1539 = vshll.u32 2475754826, %v1533
    %v1540 = vshrl.u32 2131351028, %v1534
    %v1541 = vor.u32 %v1539, %v1540
    %v1542 = vshll.u32 2131351028, %v1533
    %v1543 = vshrl.u32 2102212464, %v1534
    %v1544 = vor.u32 %v1542, %v1543
    %v1545 = vshll.u32 2102212464, %v1533
    %v1546 = vshrl.u32 920167782, %v1534
    %v1547 = vor.u32 %v1545, %v1546
    %v1548 = vshll.u32 920167782, %v1533
    %v1549 = vshrl.u32 1326507024, %v1534
    %v1550 = vor.u32 %v1548, %v1549
    %vm1551 = vcmp.lt.s32.totalorder %v1532, 1
    %vm1552 = vcmp.lt.s32.totalorder %v1532, 2
    %vm1553 = vcmp.lt.s32.totalorder %v1532, 3
    %vm1554 = vcmp.lt.s32.totalorder %v1532, 4
    %v1555 = vsel %vm1551, %v1535, %v1538
    %v1556 = vsel %vm1554, %v1544, 2102212464
    %v1557 = vsel %vm1553, %v1541, %v1556
    %v1558 = vsel %vm1552, %v1555, %v1557
    %v1559 = vsel %vm1551, %v1538, %v1541
    %v1560 = vsel %vm1554, %v1547, 920167782
    %v1561 = vsel %vm1553, %v1544, %v1560
    %v1562 = vsel %vm1552, %v1559, %v1561
    %v1563 = vsel %vm1551, %v1541, %v1544
    %v1564 = vsel %vm1554, %v1550, 1326507024
    %v1565 = vsel %vm1553, %v1547, %v1564
    %v1566 = vsel %vm1552, %v1563, %v1565
    %v1567 = vshll.u32 %v1527, 8
    %v1568 = vmul.u32.u64.compose %v1567, %v1566
    %v1569 = vextract.low.u32 %v1568
    %v1570 = vextract.high.u32 %v1568
    %v1571 = vmul.u32.u64.compose %v1567, %v1562
    %v1572 = vextract.low.u32 %v1571
    %v1573 = vextract.high.u32 %v1571
    %v1574 = vmul.u32 %v1567, %v1558
    %v1575 = vadd.s32 %v1570, %v1572
    %vm1576 = vc.u32 %v1570, %v1572
    %v1577 = vadd.s32 %v1573, 1
    %v1578 = vsel %vm1576, %v1577, %v1573
    %v1579 = vadd.s32 %v1574, %v1578
    %v1580 = vadd.s32 %v1579, 536870912
    %v1581 = vshrl.u32 %v1580, 30
    %v1582 = vshll.u32 %v1581, 30
    %v1583 = vsub.s32 %v1579, %v1582
    %vm1584 = vcmp.lt.s32.totalorder %v1583, 0
    %v1585 = vsub.s32 0, %v1583
    %v1586 = vsel %vm1584, %v1585, %v1583
    %v1587 = vclz %v1586
    %v1588 = vsub.s32 %v1587, 2
    %vm1589 = vcmp.gt.s32.totalorder 0, %v1588
    %v1590 = vsel %vm1589, 0, %v1588
    %v1591 = vsub.s32 32, %v1590
    %v1592 = vshll.u32 %v1583, %v1590
    %v1593 = vshrl.u32 %v1575, %v1591
    %v1594 = vor.u32 %v1592, %v1593
    %v1595 = vsub.s32 4294967266, %v1590
    %v1596 = vadd.s32 %v1595, 127
    %v1597 = vshll.u32 %v1596, 23
    %v1598 = vor.u32 4788187, %v1597
    %v1599 = vand.u32 2147483647, %v1598
    %v1601 = vcvt.s32.f32 %v1594
    %v1602 = vmul.f32 %v1601, %v1599
    %v1603 = vxor.u32 %v1602, 2147483648
    %v1604 = vsel %vm1521, %v1603, %v1602
    %v1605 = vsub.s32 4, %v1581
    %v1606 = vsel %vm1521, %v1605, %v1581
    %v1607 = vsel %vm1520, %v267, %v1604
    %v1608 = vsel %vm1520, 0, %v1606
    %v1609 = vcosq.f32.pop %v1607
    %v1610 = vsinq.f32.pop %v1607
    %vm1611 = vweird.f32 %v267
    %v1612 = vadd.s32 %v1608, 3
    %v1613 = vand.u32 %v1612, 3
    %vm1614 = vcmp.lt.s32.totalorder %v1613, 2
    %vm1615 = vcmp.eq.s32.totalorder %v1613, 0
    %v1616 = vxor.u32 %v1610, 2147483648
    %v1617 = vsel %vm1615, %v1609, %v1616
    %vm1618 = vcmp.eq.s32.totalorder %v1613, 2
    %v1619 = vxor.u32 %v1609, 2147483648
    %v1620 = vsel %vm1618, %v1619, %v1610
    %v1621 = vsel %vm1614, %v1617, %v1620
    %v1622 = vsel %vm1611, nan, %v1621
    %v1623 = vand.u32 2147483647, %v268
    %vm1624 = vcmp.le.f32.partialorder %v1623, 0.7853982
    %vm1625 = vcmp.lt.s32.totalorder %v268, 0
    %v1626 = vand.u32 %v268, 2139095040
    %v1627 = vshrl.u32 %v1626, 23
    %v1628 = vsub.s32 %v1627, 127
    %v1629 = vand.u32 2147483647, %v268
    %v1630 = vand.u32 %v1629, 8388607
    %v1631 = vor.u32 %v1630, 8388608
    %v1632 = vsub.s32 0, %v1631
    %v1633 = vadd.s32 %v1628, 1
    %vm1634 = vcmp.gt.s32.totalorder %v1633, 0
    %v1635 = vsel %vm1634, %v1633, 0
    %v1636 = vshrl.u32 %v1635, 5
    %v1637 = vand.u32 %v1635, 31
    %v1638 = vsub.s32 32, %v1637
    %v1639 = vshrl.u32 683565275, %v1638
    %v1640 = vshll.u32 683565275, %v1637
    %v1641 = vshrl.u32 2475754826, %v1638
    %v1642 = vor.u32 %v1640, %v1641
    %v1643 = vshll.u32 2475754826, %v1637
    %v1644 = vshrl.u32 2131351028, %v1638
    %v1645 = vor.u32 %v1643, %v1644
    %v1646 = vshll.u32 2131351028, %v1637
    %v1647 = vshrl.u32 2102212464, %v1638
    %v1648 = vor.u32 %v1646, %v1647
    %v1649 = vshll.u32 2102212464, %v1637
    %v1650 = vshrl.u32 920167782, %v1638
    %v1651 = vor.u32 %v1649, %v1650
    %v1652 = vshll.u32 920167782, %v1637
    %v1653 = vshrl.u32 1326507024, %v1638
    %v1654 = vor.u32 %v1652, %v1653
    %vm1655 = vcmp.lt.s32.totalorder %v1636, 1
    %vm1656 = vcmp.lt.s32.totalorder %v1636, 2
    %vm1657 = vcmp.lt.s32.totalorder %v1636, 3
    %vm1658 = vcmp.lt.s32.totalorder %v1636, 4
    %v1659 = vsel %vm1655, %v1639, %v1642
    %v1660 = vsel %vm1658, %v1648, 2102212464
    %v1661 = vsel %vm1657, %v1645, %v1660
    %v1662 = vsel %vm1656, %v1659, %v1661
    %v1663 = vsel %vm1655, %v1642, %v1645
    %v1664 = vsel %vm1658, %v1651, 920167782
    %v1665 = vsel %vm1657, %v1648, %v1664
    %v1666 = vsel %vm1656, %v1663, %v1665
    %v1667 = vsel %vm1655, %v1645, %v1648
    %v1668 = vsel %vm1658, %v1654, 1326507024
    %v1669 = vsel %vm1657, %v1651, %v1668
    %v1670 = vsel %vm1656, %v1667, %v1669
    %v1671 = vshll.u32 %v1631, 8
    %v1672 = vmul.u32.u64.compose %v1671, %v1670
    %v1673 = vextract.low.u32 %v1672
    %v1674 = vextract.high.u32 %v1672
    %v1675 = vmul.u32.u64.compose %v1671, %v1666
    %v1676 = vextract.low.u32 %v1675
    %v1677 = vextract.high.u32 %v1675
    %v1678 = vmul.u32 %v1671, %v1662
    %v1679 = vadd.s32 %v1674, %v1676
    %vm1680 = vc.u32 %v1674, %v1676
    %v1681 = vadd.s32 %v1677, 1
    %v1682 = vsel %vm1680, %v1681, %v1677
    %v1683 = vadd.s32 %v1678, %v1682
    %v1684 = vadd.s32 %v1683, 536870912
    %v1685 = vshrl.u32 %v1684, 30
    %v1686 = vshll.u32 %v1685, 30
    %v1687 = vsub.s32 %v1683, %v1686
    %vm1688 = vcmp.lt.s32.totalorder %v1687, 0
    %v1689 = vsub.s32 0, %v1687
    %v1690 = vsel %vm1688, %v1689, %v1687
    %v1691 = vclz %v1690
    %v1692 = vsub.s32 %v1691, 2
    %vm1693 = vcmp.gt.s32.totalorder 0, %v1692
    %v1694 = vsel %vm1693, 0, %v1692
    %v1695 = vsub.s32 32, %v1694
    %v1696 = vshll.u32 %v1687, %v1694
    %v1697 = vshrl.u32 %v1679, %v1695
    %v1698 = vor.u32 %v1696, %v1697
    %v1699 = vsub.s32 4294967266, %v1694
    %v1700 = vadd.s32 %v1699, 127
    %v1701 = vshll.u32 %v1700, 23
    %v1702 = vor.u32 4788187, %v1701
    %v1703 = vand.u32 2147483647, %v1702
    %v1705 = vcvt.s32.f32 %v1698
    %v1706 = vmul.f32 %v1705, %v1703
    %v1707 = vxor.u32 %v1706, 2147483648
    %v1708 = vsel %vm1625, %v1707, %v1706
    %v1709 = vsub.s32 4, %v1685
    %v1710 = vsel %vm1625, %v1709, %v1685
    %v1711 = vsel %vm1624, %v268, %v1708
    %v1712 = vsel %vm1624, 0, %v1710
    %v1713 = vcosq.f32.pop %v1711
    %v1714 = vsinq.f32.pop %v1711
    %vm1715 = vweird.f32 %v268
    %v1716 = vadd.s32 %v1712, 3
    %v1717 = vand.u32 %v1716, 3
    %vm1718 = vcmp.lt.s32.totalorder %v1717, 2
    %vm1719 = vcmp.eq.s32.totalorder %v1717, 0
    %v1720 = vxor.u32 %v1714, 2147483648
    %v1721 = vsel %vm1719, %v1713, %v1720
    %vm1722 = vcmp.eq.s32.totalorder %v1717, 2
    %v1723 = vxor.u32 %v1713, 2147483648
    %v1724 = vsel %vm1722, %v1723, %v1714
    %v1725 = vsel %vm1718, %v1721, %v1724
    %v1726 = vsel %vm1715, nan, %v1725
    %v1727 = vand.u32 2147483647, %v269
    %vm1728 = vcmp.le.f32.partialorder %v1727, 0.7853982
    %vm1729 = vcmp.lt.s32.totalorder %v269, 0
    %v1730 = vand.u32 %v269, 2139095040
    %v1731 = vshrl.u32 %v1730, 23
    %v1732 = vsub.s32 %v1731, 127
    %v1733 = vand.u32 2147483647, %v269
    %v1734 = vand.u32 %v1733, 8388607
    %v1735 = vor.u32 %v1734, 8388608
    %v1736 = vsub.s32 0, %v1735
    %v1737 = vadd.s32 %v1732, 1
    %vm1738 = vcmp.gt.s32.totalorder %v1737, 0
    %v1739 = vsel %vm1738, %v1737, 0
    %v1740 = vshrl.u32 %v1739, 5
    %v1741 = vand.u32 %v1739, 31
    %v1742 = vsub.s32 32, %v1741
    %v1743 = vshrl.u32 683565275, %v1742
    %v1744 = vshll.u32 683565275, %v1741
    %v1745 = vshrl.u32 2475754826, %v1742
    %v1746 = vor.u32 %v1744, %v1745
    %v1747 = vshll.u32 2475754826, %v1741
    %v1748 = vshrl.u32 2131351028, %v1742
    %v1749 = vor.u32 %v1747, %v1748
    %v1750 = vshll.u32 2131351028, %v1741
    %v1751 = vshrl.u32 2102212464, %v1742
    %v1752 = vor.u32 %v1750, %v1751
    %v1753 = vshll.u32 2102212464, %v1741
    %v1754 = vshrl.u32 920167782, %v1742
    %v1755 = vor.u32 %v1753, %v1754
    %v1756 = vshll.u32 920167782, %v1741
    %v1757 = vshrl.u32 1326507024, %v1742
    %v1758 = vor.u32 %v1756, %v1757
    %vm1759 = vcmp.lt.s32.totalorder %v1740, 1
    %vm1760 = vcmp.lt.s32.totalorder %v1740, 2
    %vm1761 = vcmp.lt.s32.totalorder %v1740, 3
    %vm1762 = vcmp.lt.s32.totalorder %v1740, 4
    %v1763 = vsel %vm1759, %v1743, %v1746
    %v1764 = vsel %vm1762, %v1752, 2102212464
    %v1765 = vsel %vm1761, %v1749, %v1764
    %v1766 = vsel %vm1760, %v1763, %v1765
    %v1767 = vsel %vm1759, %v1746, %v1749
    %v1768 = vsel %vm1762, %v1755, 920167782
    %v1769 = vsel %vm1761, %v1752, %v1768
    %v1770 = vsel %vm1760, %v1767, %v1769
    %v1771 = vsel %vm1759, %v1749, %v1752
    %v1772 = vsel %vm1762, %v1758, 1326507024
    %v1773 = vsel %vm1761, %v1755, %v1772
    %v1774 = vsel %vm1760, %v1771, %v1773
    %v1775 = vshll.u32 %v1735, 8
    %v1776 = vmul.u32.u64.compose %v1775, %v1774
    %v1777 = vextract.low.u32 %v1776
    %v1778 = vextract.high.u32 %v1776
    %v1779 = vmul.u32.u64.compose %v1775, %v1770
    %v1780 = vextract.low.u32 %v1779
    %v1781 = vextract.high.u32 %v1779
    %v1782 = vmul.u32 %v1775, %v1766
    %v1783 = vadd.s32 %v1778, %v1780
    %vm1784 = vc.u32 %v1778, %v1780
    %v1785 = vadd.s32 %v1781, 1
    %v1786 = vsel %vm1784, %v1785, %v1781
    %v1787 = vadd.s32 %v1782, %v1786
    %v1788 = vadd.s32 %v1787, 536870912
    %v1789 = vshrl.u32 %v1788, 30
    %v1790 = vshll.u32 %v1789, 30
    %v1791 = vsub.s32 %v1787, %v1790
    %vm1792 = vcmp.lt.s32.totalorder %v1791, 0
    %v1793 = vsub.s32 0, %v1791
    %v1794 = vsel %vm1792, %v1793, %v1791
    %v1795 = vclz %v1794
    %v1796 = vsub.s32 %v1795, 2
    %vm1797 = vcmp.gt.s32.totalorder 0, %v1796
    %v1798 = vsel %vm1797, 0, %v1796
    %v1799 = vsub.s32 32, %v1798
    %v1800 = vshll.u32 %v1791, %v1798
    %v1801 = vshrl.u32 %v1783, %v1799
    %v1802 = vor.u32 %v1800, %v1801
    %v1803 = vsub.s32 4294967266, %v1798
    %v1804 = vadd.s32 %v1803, 127
    %v1805 = vshll.u32 %v1804, 23
    %v1806 = vor.u32 4788187, %v1805
    %v1807 = vand.u32 2147483647, %v1806
    %v1809 = vcvt.s32.f32 %v1802
    %v1810 = vmul.f32 %v1809, %v1807
    %v1811 = vxor.u32 %v1810, 2147483648
    %v1812 = vsel %vm1729, %v1811, %v1810
    %v1813 = vsub.s32 4, %v1789
    %v1814 = vsel %vm1729, %v1813, %v1789
    %v1815 = vsel %vm1728, %v269, %v1812
    %v1816 = vsel %vm1728, 0, %v1814
    %v1817 = vcosq.f32.pop %v1815
    %v1818 = vsinq.f32.pop %v1815
    %vm1819 = vweird.f32 %v269
    %v1820 = vadd.s32 %v1816, 3
    %v1821 = vand.u32 %v1820, 3
    %vm1822 = vcmp.lt.s32.totalorder %v1821, 2
    %vm1823 = vcmp.eq.s32.totalorder %v1821, 0
    %v1824 = vxor.u32 %v1818, 2147483648
    %v1825 = vsel %vm1823, %v1817, %v1824
    %vm1826 = vcmp.eq.s32.totalorder %v1821, 2
    %v1827 = vxor.u32 %v1817, 2147483648
    %v1828 = vsel %vm1826, %v1827, %v1818
    %v1829 = vsel %vm1822, %v1825, %v1828
    %v1830 = vsel %vm1819, nan, %v1829
    %v1831 = vand.u32 2147483647, %v270
    %vm1832 = vcmp.le.f32.partialorder %v1831, 0.7853982
    %vm1833 = vcmp.lt.s32.totalorder %v270, 0
    %v1834 = vand.u32 %v270, 2139095040
    %v1835 = vshrl.u32 %v1834, 23
    %v1836 = vsub.s32 %v1835, 127
    %v1837 = vand.u32 2147483647, %v270
    %v1838 = vand.u32 %v1837, 8388607
    %v1839 = vor.u32 %v1838, 8388608
    %v1840 = vsub.s32 0, %v1839
    %v1841 = vadd.s32 %v1836, 1
    %vm1842 = vcmp.gt.s32.totalorder %v1841, 0
    %v1843 = vsel %vm1842, %v1841, 0
    %v1844 = vshrl.u32 %v1843, 5
    %v1845 = vand.u32 %v1843, 31
    %v1846 = vsub.s32 32, %v1845
    %v1847 = vshrl.u32 683565275, %v1846
    %v1848 = vshll.u32 683565275, %v1845
    %v1849 = vshrl.u32 2475754826, %v1846
    %v1850 = vor.u32 %v1848, %v1849
    %v1851 = vshll.u32 2475754826, %v1845
    %v1852 = vshrl.u32 2131351028, %v1846
    %v1853 = vor.u32 %v1851, %v1852
    %v1854 = vshll.u32 2131351028, %v1845
    %v1855 = vshrl.u32 2102212464, %v1846
    %v1856 = vor.u32 %v1854, %v1855
    %v1857 = vshll.u32 2102212464, %v1845
    %v1858 = vshrl.u32 920167782, %v1846
    %v1859 = vor.u32 %v1857, %v1858
    %v1860 = vshll.u32 920167782, %v1845
    %v1861 = vshrl.u32 1326507024, %v1846
    %v1862 = vor.u32 %v1860, %v1861
    %vm1863 = vcmp.lt.s32.totalorder %v1844, 1
    %vm1864 = vcmp.lt.s32.totalorder %v1844, 2
    %vm1865 = vcmp.lt.s32.totalorder %v1844, 3
    %vm1866 = vcmp.lt.s32.totalorder %v1844, 4
    %v1867 = vsel %vm1863, %v1847, %v1850
    %v1868 = vsel %vm1866, %v1856, 2102212464
    %v1869 = vsel %vm1865, %v1853, %v1868
    %v1870 = vsel %vm1864, %v1867, %v1869
    %v1871 = vsel %vm1863, %v1850, %v1853
    %v1872 = vsel %vm1866, %v1859, 920167782
    %v1873 = vsel %vm1865, %v1856, %v1872
    %v1874 = vsel %vm1864, %v1871, %v1873
    %v1875 = vsel %vm1863, %v1853, %v1856
    %v1876 = vsel %vm1866, %v1862, 1326507024
    %v1877 = vsel %vm1865, %v1859, %v1876
    %v1878 = vsel %vm1864, %v1875, %v1877
    %v1879 = vshll.u32 %v1839, 8
    %v1880 = vmul.u32.u64.compose %v1879, %v1878
    %v1881 = vextract.low.u32 %v1880
    %v1882 = vextract.high.u32 %v1880
    %v1883 = vmul.u32.u64.compose %v1879, %v1874
    %v1884 = vextract.low.u32 %v1883
    %v1885 = vextract.high.u32 %v1883
    %v1886 = vmul.u32 %v1879, %v1870
    %v1887 = vadd.s32 %v1882, %v1884
    %vm1888 = vc.u32 %v1882, %v1884
    %v1889 = vadd.s32 %v1885, 1
    %v1890 = vsel %vm1888, %v1889, %v1885
    %v1891 = vadd.s32 %v1886, %v1890
    %v1892 = vadd.s32 %v1891, 536870912
    %v1893 = vshrl.u32 %v1892, 30
    %v1894 = vshll.u32 %v1893, 30
    %v1895 = vsub.s32 %v1891, %v1894
    %vm1896 = vcmp.lt.s32.totalorder %v1895, 0
    %v1897 = vsub.s32 0, %v1895
    %v1898 = vsel %vm1896, %v1897, %v1895
    %v1899 = vclz %v1898
    %v1900 = vsub.s32 %v1899, 2
    %vm1901 = vcmp.gt.s32.totalorder 0, %v1900
    %v1902 = vsel %vm1901, 0, %v1900
    %v1903 = vsub.s32 32, %v1902
    %v1904 = vshll.u32 %v1895, %v1902
    %v1905 = vshrl.u32 %v1887, %v1903
    %v1906 = vor.u32 %v1904, %v1905
    %v1907 = vsub.s32 4294967266, %v1902
    %v1908 = vadd.s32 %v1907, 127
    %v1909 = vshll.u32 %v1908, 23
    %v1910 = vor.u32 4788187, %v1909
    %v1911 = vand.u32 2147483647, %v1910
    %v1913 = vcvt.s32.f32 %v1906
    %v1914 = vmul.f32 %v1913, %v1911
    %v1915 = vxor.u32 %v1914, 2147483648
    %v1916 = vsel %vm1833, %v1915, %v1914
    %v1917 = vsub.s32 4, %v1893
    %v1918 = vsel %vm1833, %v1917, %v1893
    %v1919 = vsel %vm1832, %v270, %v1916
    %v1920 = vsel %vm1832, 0, %v1918
    %v1921 = vcosq.f32.pop %v1919
    %v1922 = vsinq.f32.pop %v1919
    %vm1923 = vweird.f32 %v270
    %v1924 = vadd.s32 %v1920, 3
    %v1925 = vand.u32 %v1924, 3
    %vm1926 = vcmp.lt.s32.totalorder %v1925, 2
    %vm1927 = vcmp.eq.s32.totalorder %v1925, 0
    %v1928 = vxor.u32 %v1922, 2147483648
    %v1929 = vsel %vm1927, %v1921, %v1928
    %vm1930 = vcmp.eq.s32.totalorder %v1925, 2
    %v1931 = vxor.u32 %v1921, 2147483648
    %v1932 = vsel %vm1930, %v1931, %v1922
    %v1933 = vsel %vm1926, %v1929, %v1932
    %v1934 = vsel %vm1923, nan, %v1933
    %1935 = vst [vmem:[#allocation2] sm:$0xff] %v374
    %1936 = vst [vmem:[#allocation2 + $0x8] sm:$0xff] %v478
    %1937 = vst [vmem:[#allocation2 + $0x10] sm:$0xff] %v582
    %1938 = vst [vmem:[#allocation2 + $0x18] sm:$0xff] %v686
    %1939 = vst [vmem:[#allocation2 + $0x20] sm:$0xff] %v790
    %1940 = vst [vmem:[#allocation2 + $0x28] sm:$0xff] %v894
    %1941 = vst [vmem:[#allocation2 + $0x30] sm:$0xff] %v998
    %1942 = vst [vmem:[#allocation2 + $0x38] sm:$0xff] %v1102
    %1943 = vst [vmem:[#allocation2 + $0x40] sm:$0xff] %v1206
    %1944 = vst [vmem:[#allocation2 + $0x48] sm:$0xff] %v1310
    %1945 = vst [vmem:[#allocation2 + $0x50] sm:$0xff] %v1414
    %1946 = vst [vmem:[#allocation2 + $0x58] sm:$0xff] %v1518
    %1947 = vst [vmem:[#allocation2 + $0x60] sm:$0xff] %v1622
    %1948 = vst [vmem:[#allocation2 + $0x68] sm:$0xff] %v1726
    %1949 = vst [vmem:[#allocation2 + $0x70] sm:$0xff] %v1830
    %1950 = vst [vmem:[#allocation2 + $0x78] sm:$0xff] %v1934
    // Predicated region
    $region14: #{tpu_custom_call.1} parent=1 // pred_check
      _
    $region15: #{tpu_custom_call.1} parent=1 // pred_check_branch
      %1952 = sbr.rel (0) target = $region17
    $region16: #{tpu_custom_call.1} parent=1 // pred_region
      %s1954 = ssub.s32 2048, 2048
      %1955 = vsyncadd [#allocation3], %s1954
      %s1956 = sshll.u32 [#allocation2], 4
      %s1957 = int_to_ptr.vmem [resolvable:$true] %s1956
      %1962 = dma.vmem_to_hbm [thread:$0]  %s1957, 2048, %s3, [#allocation3], 128, 128, 8
    $region17: #{tpu_custom_call.1} parent=1 // pred_fallthru
      _
    // Predicated region
    $region18: #{tpu_custom_call.1} parent=1 // pred_check
      _
    $region19: #{tpu_custom_call.1} parent=1 // pred_check_branch
      %1964 = sbr.rel (0) target = $region21
    $region20: #{tpu_custom_call.1} parent=1 // pred_region
      %1965 = dma.done [#allocation3], 2048
    $region21: #{tpu_custom_call.1} parent=1 // pred_fallthru
      _
    %1966 = vsyncpa [#allocation3], 1

</llo_original>
